<compile_context>
chip_gen: v6e
topology: v6e:2x2x1
jax: 0.10.0
libtpu: 0.0.40
codegen_flags: <defaults>
</compile_context>

<pallas_src>
import functools
import math

import jax
import jax.numpy as jnp
from jax.experimental import pallas as pl
from jax.experimental.pallas import tpu as pltpu


# Safe on all generations: raises v5e's 16 MiB default, matches v6e/v7x default.
VMEM_LIMIT = 32 * 1024 * 1024


def _pick_tile(dim, target, quantum):
    """Largest tile t <= target with dim % t == 0 and t % quantum == 0, else dim."""
    t = min(target, dim)
    while t >= quantum:
        if dim % t == 0 and t % quantum == 0:
            return t
        t -= quantum
    return dim


# ----------------------------------------------------------------------------
# Tiled matmul (+ bias, + optional relu / log-softmax epilogue)
# ----------------------------------------------------------------------------
def _matmul_kernel(x_ref, w_ref, b_ref, o_ref, acc_ref, *, activation):
    k = pl.program_id(2)

    @pl.when(k == 0)
    def _init():
        acc_ref[...] = jnp.zeros_like(acc_ref)

    acc_ref[...] += jnp.dot(x_ref[...], w_ref[...],
                            preferred_element_type=jnp.float32)

    @pl.when(k == pl.num_programs(2) - 1)
    def _finalize():
        acc = acc_ref[...] + b_ref[...]                 # (1, tn) broadcasts
        if activation == "relu":
            acc = jnp.maximum(acc, 0.0)
        elif activation == "log_softmax":
            m = jnp.max(acc, axis=-1, keepdims=True)
            z = acc - m
            lse = jnp.log(jnp.sum(jnp.exp(z), axis=-1, keepdims=True))
            acc = z - lse
        o_ref[...] = acc.astype(o_ref.dtype)


def linear(x2d, w, b, *, activation=None, out_dtype=jnp.bfloat16,
           tm=256, tn=256, tk=512):
    """(M,K) @ (K,N) + b, tiled over (M, N, K) with an f32 accumulator."""
    M, K = x2d.shape
    _, N = w.shape
    tm = _pick_tile(M, tm, 8)
    tk = _pick_tile(K, tk, 128)
    if activation == "log_softmax":
        tn = N                      # epilogue reduction needs the full row
    else:
        tn = _pick_tile(N, tn, 128)
    grid = (M // tm, N // tn, K // tk)

    return pl.pallas_call(
        functools.partial(_matmul_kernel, activation=activation),
        out_shape=jax.ShapeDtypeStruct((M, N), out_dtype),
        grid=grid,
        in_specs=[pl.BlockSpec((tm, tk), lambda i, j, k: (i, k)),
                  pl.BlockSpec((tk, tn), lambda i, j, k: (k, j)),
                  pl.BlockSpec((1, tn), lambda i, j, k: (0, j))],
        out_specs=pl.BlockSpec((tm, tn), lambda i, j, k: (i, j)),
        scratch_shapes=[pltpu.VMEM((tm, tn), jnp.float32)],
        compiler_params=pltpu.CompilerParams(
            dimension_semantics=("parallel", "parallel", "arbitrary"),
            vmem_limit_bytes=VMEM_LIMIT),
    )(x2d.astype(jnp.bfloat16), w.astype(jnp.bfloat16),
      b.reshape(1, N).astype(jnp.float32))


# ----------------------------------------------------------------------------
# Fused residual-add + LayerNorm
# ----------------------------------------------------------------------------
def _add_ln_kernel(x_ref, y_ref, g_ref, b_ref, o_ref, *, eps):
    x = x_ref[...].astype(jnp.float32) + y_ref[...].astype(jnp.float32)
    mu = jnp.mean(x, axis=-1, keepdims=True)
    xc = x - mu
    var = jnp.mean(xc * xc, axis=-1, keepdims=True)
    o_ref[...] = (xc * jax.lax.rsqrt(var + eps) * g_ref[...]
                  + b_ref[...]).astype(o_ref.dtype)


def add_layernorm(x3d, y3d, gamma, beta, eps=1e-5):
    """LayerNorm(x + y) over the last dim.  x, y: (B, S, D)."""
    B, S, D = x3d.shape
    M = B * S
    tm = _pick_tile(M, 512, 8)
    out = pl.pallas_call(
        functools.partial(_add_ln_kernel, eps=eps),
        out_shape=jax.ShapeDtypeStruct((M, D), jnp.bfloat16),
        grid=(M // tm,),
        in_specs=[pl.BlockSpec((tm, D), lambda i: (i, 0)),
                  pl.BlockSpec((tm, D), lambda i: (i, 0)),
                  pl.BlockSpec((1, D), lambda i: (0, 0)),
                  pl.BlockSpec((1, D), lambda i: (0, 0))],
        out_specs=pl.BlockSpec((tm, D), lambda i: (i, 0)),
        compiler_params=pltpu.CompilerParams(
            dimension_semantics=("parallel",),
            vmem_limit_bytes=VMEM_LIMIT),
    )(x3d.reshape(M, D), y3d.reshape(M, D),
      gamma.reshape(1, D).astype(jnp.float32),
      beta.reshape(1, D).astype(jnp.float32))
    return out.reshape(B, S, D)


# ----------------------------------------------------------------------------
# Multi-head attention — all heads per grid step, no head transposes in HBM
# ----------------------------------------------------------------------------
def _attn_body(q_slab, kv_slab, mask, o_ref, *, heads, dh, scale):
    """q_slab: (Sq, H*Dh) bf16, kv_slab: (Sk, 2*H*Dh) bf16 (K|V), mask: (Sq, Sk)."""
    d_model = heads * dh
    ctxs = []
    for h in range(heads):                       # static unroll over heads
        qh = q_slab[:, h * dh:(h + 1) * dh]
        kh = kv_slab[:, h * dh:(h + 1) * dh]
        vh = kv_slab[:, d_model + h * dh:d_model + (h + 1) * dh]
        s = jnp.dot(qh, kh.T, preferred_element_type=jnp.float32) * scale
        s = jnp.where(mask > 0, s, -1e30)        # masked_fill(mask == 0, -inf)
        s = s - jnp.max(s, axis=-1, keepdims=True)
        p = jnp.exp(s)
        p = p * pl.reciprocal(jnp.sum(p, axis=-1, keepdims=True), approx=True)
        ctxs.append(jnp.dot(p.astype(vh.dtype), vh,
                            preferred_element_type=jnp.float32))
    # One lane-dense (Sq, D) store instead of per-head partial stores.
    o_ref[0] = jnp.concatenate(ctxs, axis=-1).astype(o_ref.dtype)


def _self_attn_kernel(qkv_ref, mask_ref, o_ref, *, heads, dh, scale):
    d_model = heads * dh
    qkv = qkv_ref[0]                             # (Sq, 3D): [Q | K | V]
    _attn_body(qkv[:, :d_model], qkv[:, d_model:], mask_ref[0], o_ref,
               heads=heads, dh=dh, scale=scale)


def _cross_attn_kernel(q_ref, kv_ref, mask_ref, o_ref, *, heads, dh, scale):
    _attn_body(q_ref[0], kv_ref[0], mask_ref[0], o_ref,
               heads=heads, dh=dh, scale=scale)


def self_attention(qkv, mask, heads):
    """qkv: (B, S, 3D) packed [Q|K|V], mask: (B, S, S) -> (B, S, D)."""
    B, S, D3 = qkv.shape
    D = D3 // 3
    dh = D // heads
    return pl.pallas_call(
        functools.partial(_self_attn_kernel, heads=heads, dh=dh,
                          scale=1.0 / math.sqrt(dh)),
        out_shape=jax.ShapeDtypeStruct((B, S, D), jnp.bfloat16),
        grid=(B,),
        in_specs=[pl.BlockSpec((1, S, D3), lambda b: (b, 0, 0)),
                  pl.BlockSpec((1, S, S), lambda b: (b, 0, 0))],
        out_specs=pl.BlockSpec((1, S, D), lambda b: (b, 0, 0)),
        compiler_params=pltpu.CompilerParams(
            dimension_semantics=("parallel",),
            vmem_limit_bytes=VMEM_LIMIT),
    )(qkv, mask.astype(jnp.bfloat16))


def cross_attention(q, kv, mask, heads):
    """q: (B, Sq, D), kv: (B, Sk, 2D) packed [K|V], mask: (B, Sq, Sk)."""
    B, Sq, D = q.shape
    Sk = kv.shape[1]
    dh = D // heads
    return pl.pallas_call(
        functools.partial(_cross_attn_kernel, heads=heads, dh=dh,
                          scale=1.0 / math.sqrt(dh)),
        out_shape=jax.ShapeDtypeStruct((B, Sq, D), jnp.bfloat16),
        grid=(B,),
        in_specs=[pl.BlockSpec((1, Sq, D), lambda b: (b, 0, 0)),
                  pl.BlockSpec((1, Sk, 2 * D), lambda b: (b, 0, 0)),
                  pl.BlockSpec((1, Sq, Sk), lambda b: (b, 0, 0))],
        out_specs=pl.BlockSpec((1, Sq, D), lambda b: (b, 0, 0)),
        compiler_params=pltpu.CompilerParams(
            dimension_semantics=("parallel",),
            vmem_limit_bytes=VMEM_LIMIT),
    )(q, kv, mask.astype(jnp.bfloat16))


# ----------------------------------------------------------------------------
# Transformer glue
# ----------------------------------------------------------------------------
def mha_self(p, x, mask, heads):
    B, S, D = x.shape
    qkv = linear(x.reshape(B * S, D), p["wqkv"], p["bqkv"])     # fused QKV
    ctx = self_attention(qkv.reshape(B, S, 3 * D), mask, heads)
    return linear(ctx.reshape(B * S, D), p["wo"], p["bo"]).reshape(B, S, D)


def mha_cross(p, x, mem, mask, heads):
    B, Sq, D = x.shape
    Sk = mem.shape[1]
    q = linear(x.reshape(B * Sq, D), p["wq"], p["bq"])
    kv = linear(mem.reshape(B * Sk, D), p["wkv"], p["bkv"])      # fused KV
    ctx = cross_attention(q.reshape(B, Sq, D), kv.reshape(B, Sk, 2 * D),
                          mask, heads)
    return linear(ctx.reshape(B * Sq, D), p["wo"], p["bo"]).reshape(B, Sq, D)


def ffn(p, x):
    B, S, D = x.shape
    h = linear(x.reshape(B * S, D), p["w1"], p["b1"], activation="relu")
    return linear(h, p["w2"], p["b2"]).reshape(B, S, D)


def encoder_layer(p, x, mask, heads):
    x = add_layernorm(x, mha_self(p["self"], x, mask, heads),
                      p["ln1_g"], p["ln1_b"])
    x = add_layernorm(x, ffn(p["ffn"], x), p["ln2_g"], p["ln2_b"])
    return x


def decoder_layer(p, x, enc_out, dec_mask, enc_mask, heads):
    x = add_layernorm(x, mha_self(p["self"], x, dec_mask, heads),
                      p["ln1_g"], p["ln1_b"])
    x = add_layernorm(x, mha_cross(p["cross"], x, enc_out, enc_mask, heads),
                      p["ln2_g"], p["ln2_b"])
    x = add_layernorm(x, ffn(p["ffn"], x), p["ln3_g"], p["ln3_b"])
    return x


def positional_encoding(seq_len, d_model):
    pos = jnp.arange(seq_len, dtype=jnp.float32)[:, None]
    i = jnp.arange(d_model // 2, dtype=jnp.float32)[None, :]
    angle = pos / jnp.power(10000.0, 2.0 * i / d_model)
    pe = jnp.zeros((seq_len, d_model), jnp.float32)
    pe = pe.at[:, 0::2].set(jnp.sin(angle))
    pe = pe.at[:, 1::2].set(jnp.cos(angle))
    return pe


def supertagger_forward(params, encoder_input, decoder_input,
                        encoder_mask, decoder_mask, *, heads):
    """Returns log-probabilities over classes: (B, S_dec, num_classes)."""
    B, S_enc, D = encoder_input.shape
    S_dec = decoder_input.shape[1]
    num_classes = params["embedding"].shape[0]

    x = (encoder_input + positional_encoding(S_enc, D)[None]).astype(jnp.bfloat16)
    y = (decoder_input + positional_encoding(S_dec, D)[None]).astype(jnp.bfloat16)

    # TODO(synk): as in the reference training loop, encoder_mask is reused for
    # encoder self-attention; only valid while S_dec == S_enc.
    enc_self_mask = encoder_mask

    for lp in params["encoder"]:
        x = encoder_layer(lp, x, enc_self_mask, heads)
    for lp in params["decoder"]:
        y = decoder_layer(lp, y, x, decoder_mask, encoder_mask, heads)

    # Tied output projection (reuse_embedding=True) with fused log-softmax epilogue.
    logp = linear(y.reshape(B * S_dec, D), params["embedding_t"],
                  jnp.zeros((num_classes,), jnp.float32),
                  activation="log_softmax", out_dtype=jnp.float32)
    return logp.reshape(B, S_dec, num_classes)


# ----------------------------------------------------------------------------
# Deterministic parameter construction
# ----------------------------------------------------------------------------
def _dense(key, d_in, d_out):
    return (0.02 * jax.random.normal(key, (d_in, d_out), jnp.float32)
            ).astype(jnp.bfloat16)


def init_self_attn(key, d_model):
    k1, k2 = jax.random.split(key)
    return {"wqkv": _dense(k1, d_model, 3 * d_model),
            "bqkv": jnp.zeros((3 * d_model,), jnp.float32),
            "wo": _dense(k2, d_model, d_model),
            "bo": jnp.zeros((d_model,), jnp.float32)}


def init_cross_attn(key, d_model):
    k1, k2, k3 = jax.random.split(key, 3)
    return {"wq": _dense(k1, d_model, d_model),
            "bq": jnp.zeros((d_model,), jnp.float32),
            "wkv": _dense(k2, d_model, 2 * d_model),
            "bkv": jnp.zeros((2 * d_model,), jnp.float32),
            "wo": _dense(k3, d_model, d_model),
            "bo": jnp.zeros((d_model,), jnp.float32)}


def init_ffn(key, d_model, d_ff):
    k1, k2 = jax.random.split(key)
    return {"w1": _dense(k1, d_model, d_ff), "b1": jnp.zeros((d_ff,), jnp.float32),
            "w2": _dense(k2, d_ff, d_model), "b2": jnp.zeros((d_model,), jnp.float32)}


def _ln(d_model, name):
    return {name + "_g": jnp.ones((d_model,), jnp.float32),
            name + "_b": jnp.zeros((d_model,), jnp.float32)}


def init_params(key, num_classes, d_model, d_ff, enc_layers, dec_layers):
    keys = jax.random.split(key, 1 + enc_layers + dec_layers)
    emb = 0.02 * jax.random.normal(keys[0], (num_classes, d_model), jnp.float32)
    params = {"embedding": emb,                              # f32 lookup table
              "embedding_t": emb.T.astype(jnp.bfloat16)}     # tied output proj
    enc = []
    for li in range(enc_layers):
        ka, kf = jax.random.split(keys[1 + li])
        lp = {"self": init_self_attn(ka, d_model),
              "ffn": init_ffn(kf, d_model, d_ff)}
        lp.update(_ln(d_model, "ln1")); lp.update(_ln(d_model, "ln2"))
        enc.append(lp)
    dec = []
    for li in range(dec_layers):
        ka, kc, kf = jax.random.split(keys[1 + enc_layers + li], 3)
        lp = {"self": init_self_attn(ka, d_model),
              "cross": init_cross_attn(kc, d_model),
              "ffn": init_ffn(kf, d_model, d_ff)}
        lp.update(_ln(d_model, "ln1")); lp.update(_ln(d_model, "ln2"))
        lp.update(_ln(d_model, "ln3"))
        dec.append(lp)
    params["encoder"] = enc
    params["decoder"] = dec
    return params


# ----------------------------------------------------------------------------
if __name__ == "__main__":
    # Small, lane/sublane-aligned shapes consistent with the module.
    B, S = 2, 16                # batch, seq (encoder & decoder share length)
    d_model = 128
    d_intermediate = 256
    num_classes = 128
    heads = 4                   # head_dim = 32
    enc_layers = dec_layers = 2

    root = jax.random.PRNGKey(0)
    k_par, k_x, k_y = jax.random.split(root, 3)

    params = init_params(k_par, num_classes, d_model, d_intermediate,
                         enc_layers, dec_layers)

    # encoder_input: pre-embedded word vectors (FloatTensor in the reference).
    encoder_input = jax.random.normal(k_x, (B, S, d_model), jnp.float32)

    # decoder_input: F.embedding(batch_y, embedding_matrix).
    batch_y = jax.random.randint(k_y, (B, S), 0, num_classes)
    decoder_input = params["embedding"][batch_y]

    # encoder_mask: ones with padding positions zeroed (lens = [16, 12]).
    encoder_mask = jnp.ones((B, S, S), jnp.float32)
    encoder_mask = encoder_mask.at[1, :, 12:].set(0.0)

    # decoder_mask: causal (lower-triangular) mask, as Mask((B, S, S)).
    decoder_mask = jnp.tril(jnp.ones((S, S), jnp.float32))[None].repeat(B, axis=0)

    fwd = jax.jit(functools.partial(supertagger_forward, heads=heads))
    out = fwd(params, encoder_input, decoder_input, encoder_mask, decoder_mask)
    out = jax.block_until_ready(out)

    assert out.shape == (B, S, num_classes)
    assert bool(jnp.all(jnp.isfinite(out)))
    # log-softmax rows sum to 1 in probability space
    assert bool(jnp.allclose(jnp.sum(jnp.exp(out), axis=-1), 1.0, atol=1e-3))
    print("KERNEL_OK")
</pallas_src>

<mosaic_0001>
module attributes {stable_mosaic.version = 11 : i64} {
  func.func @_matmul_kernel(%arg0: i32, %arg1: i32, %arg2: i32, %arg3: memref<32x128xbf16, #tpu.memory_space<vmem>>, %arg4: memref<128x128xbf16, #tpu.memory_space<vmem>>, %arg5: memref<1x128xf32, #tpu.memory_space<vmem>>, %arg6: memref<32x128xbf16, #tpu.memory_space<vmem>>, %arg7: memref<32x128xf32, #tpu.memory_space<vmem>>) attributes {dimension_semantics = [#tpu.dimension_semantics<parallel>, #tpu.dimension_semantics<parallel>, #tpu.dimension_semantics<arbitrary>], iteration_bounds = array<i64: 1, 3, 1>, scalar_prefetch = 0 : i64, scratch_operands = 1 : i64, tpu.core_type = #tpu.core_type<tc>, window_params = [{transform_indices = @transform_0, window_bounds = array<i64: 32, 128>}, {transform_indices = @transform_1, window_bounds = array<i64: 128, 128>}, {transform_indices = @transform_2, window_bounds = array<i64: 1, 128>}, {transform_indices = @transform_3, window_bounds = array<i64: 32, 128>}]} {
    %c0_i32 = arith.constant 0 : i32
    %0 = arith.cmpi eq, %arg2, %c0_i32 : i32
    %1 = arith.extui %0 : i1 to i32
    %c0_i32_0 = arith.constant 0 : i32
    %2 = arith.cmpi ne, %1, %c0_i32_0 : i32
    scf.if %2 {
      %cst_10 = arith.constant 0.000000e+00 : f32
      %12 = vector.broadcast %cst_10 : f32 to vector<32x128xf32>
      %c0_11 = arith.constant 0 : index
      %c0_12 = arith.constant 0 : index
      %13 = vector.load %arg7[%c0_11, %c0_12] : memref<32x128xf32, #tpu.memory_space<vmem>>, vector<32x128xf32>
      tpu.vector_store %arg7[%c0_11, %c0_12], %12 {strides = array<i32>} : memref<32x128xf32, #tpu.memory_space<vmem>>, vector<32x128xf32>,
    } else {
    }
    %c0 = arith.constant 0 : index
    %c0_1 = arith.constant 0 : index
    %3 = vector.load %arg7[%c0, %c0_1] : memref<32x128xf32, #tpu.memory_space<vmem>>, vector<32x128xf32>
    %c0_2 = arith.constant 0 : index
    %c0_3 = arith.constant 0 : index
    %4 = vector.load %arg3[%c0_2, %c0_3] : memref<32x128xbf16, #tpu.memory_space<vmem>>, vector<32x128xbf16>
    %c0_4 = arith.constant 0 : index
    %c0_5 = arith.constant 0 : index
    %5 = vector.load %arg4[%c0_4, %c0_5] : memref<128x128xbf16, #tpu.memory_space<vmem>>, vector<128x128xbf16>
    %cst = arith.constant dense<0.000000e+00> : vector<32x128xf32>
    %6 = tpu.matmul %4, %5, %cst {dimension_numbers = #tpu.dot_dimension_numbers<[1], [0], [0], [1], [0, 0, 1, 1], [], []>} : vector<32x128xbf16>, vector<128x128xbf16>, vector<32x128xf32> -> vector<32x128xf32>
    %7 = arith.addf %3, %6 : vector<32x128xf32>
    %c0_6 = arith.constant 0 : index
    %c0_7 = arith.constant 0 : index
    %8 = vector.load %arg7[%c0_6, %c0_7] : memref<32x128xf32, #tpu.memory_space<vmem>>, vector<32x128xf32>
    tpu.vector_store %arg7[%c0_6, %c0_7], %7 {strides = array<i32>} : memref<32x128xf32, #tpu.memory_space<vmem>>, vector<32x128xf32>,
    %c0_i32_8 = arith.constant 0 : i32
    %9 = arith.cmpi eq, %arg2, %c0_i32_8 : i32
    %10 = arith.extui %9 : i1 to i32
    %c0_i32_9 = arith.constant 0 : i32
    %11 = arith.cmpi ne, %10, %c0_i32_9 : i32
    scf.if %11 {
      %c0_10 = arith.constant 0 : index
      %c0_11 = arith.constant 0 : index
      %12 = vector.load %arg7[%c0_10, %c0_11] : memref<32x128xf32, #tpu.memory_space<vmem>>, vector<32x128xf32>
      %c0_12 = arith.constant 0 : index
      %c0_13 = arith.constant 0 : index
      %13 = vector.load %arg5[%c0_12, %c0_13] : memref<1x128xf32, #tpu.memory_space<vmem>>, vector<1x128xf32>
      %14 = vector.broadcast %13 : vector<1x128xf32> to vector<32x128xf32>
      %15 = arith.addf %12, %14 : vector<32x128xf32>
      %16 = arith.truncf %15 : vector<32x128xf32> to vector<32x128xbf16>
      %c0_14 = arith.constant 0 : index
      %c0_15 = arith.constant 0 : index
      %17 = vector.load %arg6[%c0_14, %c0_15] : memref<32x128xbf16, #tpu.memory_space<vmem>>, vector<32x128xbf16>
      tpu.vector_store %arg6[%c0_14, %c0_15], %16 {strides = array<i32>} : memref<32x128xbf16, #tpu.memory_space<vmem>>, vector<32x128xbf16>,
    } else {
    }
    return
  }
  func.func @transform_0(%arg0: i32, %arg1: i32, %arg2: i32) -> (i32, i32) {
    %c0_i32 = arith.constant 0 : i32
    return %arg0, %arg2 : i32, i32
  }
  func.func @transform_1(%arg0: i32, %arg1: i32, %arg2: i32) -> (i32, i32) {
    %c0_i32 = arith.constant 0 : i32
    return %arg2, %arg1 : i32, i32
  }
  func.func @transform_2(%arg0: i32, %arg1: i32, %arg2: i32) -> (i32, i32) {
    %c0_i32 = arith.constant 0 : i32
    %c0_i32_0 = arith.constant 0 : i32
    return %c0_i32, %arg1 : i32, i32
  }
  func.func @transform_3(%arg0: i32, %arg1: i32, %arg2: i32) -> (i32, i32) {
    %c0_i32 = arith.constant 0 : i32
    return %arg0, %arg1 : i32, i32
  }
}

module attributes {stable_mosaic.version = 11 : i64} {
  func.func @_self_attn_kernel(%arg0: i32, %arg1: memref<1x16x384xbf16, #tpu.memory_space<vmem>>, %arg2: memref<1x16x16xbf16, #tpu.memory_space<vmem>>, %arg3: memref<1x16x128xbf16, #tpu.memory_space<vmem>>) attributes {dimension_semantics = [#tpu.dimension_semantics<parallel>], iteration_bounds = array<i64: 2>, scalar_prefetch = 0 : i64, scratch_operands = 0 : i64, tpu.core_type = #tpu.core_type<tc>, window_params = [{transform_indices = @transform_0, window_bounds = array<i64: 1, 16, 384>}, {transform_indices = @transform_1, window_bounds = array<i64: 1, 16, 16>}, {transform_indices = @transform_2, window_bounds = array<i64: 1, 16, 128>}]} {
    %c0 = arith.constant 0 : index
    %c0_0 = arith.constant 0 : index
    %c0_1 = arith.constant 0 : index
    %0 = vector.load %arg1[%c0, %c0_0, %c0_1] : memref<1x16x384xbf16, #tpu.memory_space<vmem>>, vector<1x16x384xbf16>
    %1 = vector.shape_cast %0 : vector<1x16x384xbf16> to vector<16x384xbf16>
    %2 = vector.extract_strided_slice %1 {offsets = [0, 0], sizes = [16, 128], strides = [1, 1]} : vector<16x384xbf16> to vector<16x128xbf16>
    %3 = vector.extract_strided_slice %1 {offsets = [0, 128], sizes = [16, 256], strides = [1, 1]} : vector<16x384xbf16> to vector<16x256xbf16>
    %c0_2 = arith.constant 0 : index
    %c0_3 = arith.constant 0 : index
    %c0_4 = arith.constant 0 : index
    %4 = vector.load %arg2[%c0_2, %c0_3, %c0_4] : memref<1x16x16xbf16, #tpu.memory_space<vmem>>, vector<1x16x16xbf16>
    %5 = vector.shape_cast %4 : vector<1x16x16xbf16> to vector<16x16xbf16>
    %6 = vector.extract_strided_slice %2 {offsets = [0, 0], sizes = [16, 32], strides = [1, 1]} : vector<16x128xbf16> to vector<16x32xbf16>
    %7 = vector.extract_strided_slice %3 {offsets = [0, 0], sizes = [16, 32], strides = [1, 1]} : vector<16x256xbf16> to vector<16x32xbf16>
    %8 = vector.extract_strided_slice %3 {offsets = [0, 128], sizes = [16, 32], strides = [1, 1]} : vector<16x256xbf16> to vector<16x32xbf16>
    %9 = tpu.transpose %7, [1, 0] : vector<16x32xbf16> -> vector<32x16xbf16>
    %cst = arith.constant dense<0.000000e+00> : vector<16x16xf32>
    %10 = tpu.matmul %6, %9, %cst {dimension_numbers = #tpu.dot_dimension_numbers<[1], [0], [0], [1], [0, 0, 1, 1], [], []>} : vector<16x32xbf16>, vector<32x16xbf16>, vector<16x16xf32> -> vector<16x16xf32>
    %cst_5 = arith.constant 0.176776692 : f32
    %11 = vector.broadcast %cst_5 : f32 to vector<16x16xf32>
    %12 = arith.mulf %10, %11 : vector<16x16xf32>
    %cst_6 = arith.constant 0.000000e+00 : bf16
    %13 = vector.broadcast %cst_6 : bf16 to vector<16x16xbf16>
    %14 = arith.cmpf ogt, %5, %13 : vector<16x16xbf16>
    %cst_7 = arith.constant -1.000000e+30 : f32
    %15 = vector.broadcast %cst_7 : f32 to vector<16x16xf32>
    %16 = arith.select %14, %12, %15 : vector<16x16xi1>, vector<16x16xf32>
    %cst_8 = arith.constant dense<0xFF800000> : vector<16xf32>
    %17 = vector.multi_reduction <maximumf>, %16, %cst_8 [1] : vector<16x16xf32> to vector<16xf32>
    %18 = vector.shape_cast %17 : vector<16xf32> to vector<16x1xf32>
    %19 = vector.broadcast %18 : vector<16x1xf32> to vector<16x16xf32>
    %20 = arith.subf %16, %19 : vector<16x16xf32>
    %21 = math.exp %20 : vector<16x16xf32>
    %cst_9 = arith.constant dense<0.000000e+00> : vector<16xf32>
    %22 = vector.multi_reduction <add>, %21, %cst_9 [1] : vector<16x16xf32> to vector<16xf32>
    %23 = vector.shape_cast %22 : vector<16xf32> to vector<16x1xf32>
    %24 = tpu.reciprocal %23 {approx = true} : vector<16x1xf32> -> vector<16x1xf32>
    %25 = vector.broadcast %24 : vector<16x1xf32> to vector<16x16xf32>
    %26 = arith.mulf %21, %25 : vector<16x16xf32>
    %27 = arith.truncf %26 : vector<16x16xf32> to vector<16x16xbf16>
    %cst_10 = arith.constant dense<0.000000e+00> : vector<16x32xf32>
    %28 = tpu.matmul %27, %8, %cst_10 {dimension_numbers = #tpu.dot_dimension_numbers<[1], [0], [0], [1], [0, 0, 1, 1], [], []>} : vector<16x16xbf16>, vector<16x32xbf16>, vector<16x32xf32> -> vector<16x32xf32>
    %29 = vector.extract_strided_slice %2 {offsets = [0, 32], sizes = [16, 32], strides = [1, 1]} : vector<16x128xbf16> to vector<16x32xbf16>
    %30 = vector.extract_strided_slice %3 {offsets = [0, 32], sizes = [16, 32], strides = [1, 1]} : vector<16x256xbf16> to vector<16x32xbf16>
    %31 = vector.extract_strided_slice %3 {offsets = [0, 160], sizes = [16, 32], strides = [1, 1]} : vector<16x256xbf16> to vector<16x32xbf16>
    %32 = tpu.transpose %30, [1, 0] : vector<16x32xbf16> -> vector<32x16xbf16>
    %cst_11 = arith.constant dense<0.000000e+00> : vector<16x16xf32>
    %33 = tpu.matmul %29, %32, %cst_11 {dimension_numbers = #tpu.dot_dimension_numbers<[1], [0], [0], [1], [0, 0, 1, 1], [], []>} : vector<16x32xbf16>, vector<32x16xbf16>, vector<16x16xf32> -> vector<16x16xf32>
    %cst_12 = arith.constant 0.176776692 : f32
    %34 = vector.broadcast %cst_12 : f32 to vector<16x16xf32>
    %35 = arith.mulf %33, %34 : vector<16x16xf32>
    %cst_13 = arith.constant 0.000000e+00 : bf16
    %36 = vector.broadcast %cst_13 : bf16 to vector<16x16xbf16>
    %37 = arith.cmpf ogt, %5, %36 : vector<16x16xbf16>
    %cst_14 = arith.constant -1.000000e+30 : f32
    %38 = vector.broadcast %cst_14 : f32 to vector<16x16xf32>
    %39 = arith.select %37, %35, %38 : vector<16x16xi1>, vector<16x16xf32>
    %cst_15 = arith.constant dense<0xFF800000> : vector<16xf32>
    %40 = vector.multi_reduction <maximumf>, %39, %cst_15 [1] : vector<16x16xf32> to vector<16xf32>
    %41 = vector.shape_cast %40 : vector<16xf32> to vector<16x1xf32>
    %42 = vector.broadcast %41 : vector<16x1xf32> to vector<16x16xf32>
    %43 = arith.subf %39, %42 : vector<16x16xf32>
    %44 = math.exp %43 : vector<16x16xf32>
    %cst_16 = arith.constant dense<0.000000e+00> : vector<16xf32>
    %45 = vector.multi_reduction <add>, %44, %cst_16 [1] : vector<16x16xf32> to vector<16xf32>
    %46 = vector.shape_cast %45 : vector<16xf32> to vector<16x1xf32>
    %47 = tpu.reciprocal %46 {approx = true} : vector<16x1xf32> -> vector<16x1xf32>
    %48 = vector.broadcast %47 : vector<16x1xf32> to vector<16x16xf32>
    %49 = arith.mulf %44, %48 : vector<16x16xf32>
    %50 = arith.truncf %49 : vector<16x16xf32> to vector<16x16xbf16>
    %cst_17 = arith.constant dense<0.000000e+00> : vector<16x32xf32>
    %51 = tpu.matmul %50, %31, %cst_17 {dimension_numbers = #tpu.dot_dimension_numbers<[1], [0], [0], [1], [0, 0, 1, 1], [], []>} : vector<16x16xbf16>, vector<16x32xbf16>, vector<16x32xf32> -> vector<16x32xf32>
    %52 = vector.extract_strided_slice %2 {offsets = [0, 64], sizes = [16, 32], strides = [1, 1]} : vector<16x128xbf16> to vector<16x32xbf16>
    %53 = vector.extract_strided_slice %3 {offsets = [0, 64], sizes = [16, 32], strides = [1, 1]} : vector<16x256xbf16> to vector<16x32xbf16>
    %54 = vector.extract_strided_slice %3 {offsets = [0, 192], sizes = [16, 32], strides = [1, 1]} : vector<16x256xbf16> to vector<16x32xbf16>
    %55 = tpu.transpose %53, [1, 0] : vector<16x32xbf16> -> vector<32x16xbf16>
    %cst_18 = arith.constant dense<0.000000e+00> : vector<16x16xf32>
    %56 = tpu.matmul %52, %55, %cst_18 {dimension_numbers = #tpu.dot_dimension_numbers<[1], [0], [0], [1], [0, 0, 1, 1], [], []>} : vector<16x32xbf16>, vector<32x16xbf16>, vector<16x16xf32> -> vector<16x16xf32>
    %cst_19 = arith.constant 0.176776692 : f32
    %57 = vector.broadcast %cst_19 : f32 to vector<16x16xf32>
    %58 = arith.mulf %56, %57 : vector<16x16xf32>
    %cst_20 = arith.constant 0.000000e+00 : bf16
    %59 = vector.broadcast %cst_20 : bf16 to vector<16x16xbf16>
    %60 = arith.cmpf ogt, %5, %59 : vector<16x16xbf16>
    %cst_21 = arith.constant -1.000000e+30 : f32
    %61 = vector.broadcast %cst_21 : f32 to vector<16x16xf32>
    %62 = arith.select %60, %58, %61 : vector<16x16xi1>, vector<16x16xf32>
    %cst_22 = arith.constant dense<0xFF800000> : vector<16xf32>
    %63 = vector.multi_reduction <maximumf>, %62, %cst_22 [1] : vector<16x16xf32> to vector<16xf32>
    %64 = vector.shape_cast %63 : vector<16xf32> to vector<16x1xf32>
    %65 = vector.broadcast %64 : vector<16x1xf32> to vector<16x16xf32>
    %66 = arith.subf %62, %65 : vector<16x16xf32>
    %67 = math.exp %66 : vector<16x16xf32>
    %cst_23 = arith.constant dense<0.000000e+00> : vector<16xf32>
    %68 = vector.multi_reduction <add>, %67, %cst_23 [1] : vector<16x16xf32> to vector<16xf32>
    %69 = vector.shape_cast %68 : vector<16xf32> to vector<16x1xf32>
    %70 = tpu.reciprocal %69 {approx = true} : vector<16x1xf32> -> vector<16x1xf32>
    %71 = vector.broadcast %70 : vector<16x1xf32> to vector<16x16xf32>
    %72 = arith.mulf %67, %71 : vector<16x16xf32>
    %73 = arith.truncf %72 : vector<16x16xf32> to vector<16x16xbf16>
    %cst_24 = arith.constant dense<0.000000e+00> : vector<16x32xf32>
    %74 = tpu.matmul %73, %54, %cst_24 {dimension_numbers = #tpu.dot_dimension_numbers<[1], [0], [0], [1], [0, 0, 1, 1], [], []>} : vector<16x16xbf16>, vector<16x32xbf16>, vector<16x32xf32> -> vector<16x32xf32>
    %75 = vector.extract_strided_slice %2 {offsets = [0, 96], sizes = [16, 32], strides = [1, 1]} : vector<16x128xbf16> to vector<16x32xbf16>
    %76 = vector.extract_strided_slice %3 {offsets = [0, 96], sizes = [16, 32], strides = [1, 1]} : vector<16x256xbf16> to vector<16x32xbf16>
    %77 = vector.extract_strided_slice %3 {offsets = [0, 224], sizes = [16, 32], strides = [1, 1]} : vector<16x256xbf16> to vector<16x32xbf16>
    %78 = tpu.transpose %76, [1, 0] : vector<16x32xbf16> -> vector<32x16xbf16>
    %cst_25 = arith.constant dense<0.000000e+00> : vector<16x16xf32>
    %79 = tpu.matmul %75, %78, %cst_25 {dimension_numbers = #tpu.dot_dimension_numbers<[1], [0], [0], [1], [0, 0, 1, 1], [], []>} : vector<16x32xbf16>, vector<32x16xbf16>, vector<16x16xf32> -> vector<16x16xf32>
    %cst_26 = arith.constant 0.176776692 : f32
    %80 = vector.broadcast %cst_26 : f32 to vector<16x16xf32>
    %81 = arith.mulf %79, %80 : vector<16x16xf32>
    %cst_27 = arith.constant 0.000000e+00 : bf16
    %82 = vector.broadcast %cst_27 : bf16 to vector<16x16xbf16>
    %83 = arith.cmpf ogt, %5, %82 : vector<16x16xbf16>
    %cst_28 = arith.constant -1.000000e+30 : f32
    %84 = vector.broadcast %cst_28 : f32 to vector<16x16xf32>
    %85 = arith.select %83, %81, %84 : vector<16x16xi1>, vector<16x16xf32>
    %cst_29 = arith.constant dense<0xFF800000> : vector<16xf32>
    %86 = vector.multi_reduction <maximumf>, %85, %cst_29 [1] : vector<16x16xf32> to vector<16xf32>
    %87 = vector.shape_cast %86 : vector<16xf32> to vector<16x1xf32>
    %88 = vector.broadcast %87 : vector<16x1xf32> to vector<16x16xf32>
    %89 = arith.subf %85, %88 : vector<16x16xf32>
    %90 = math.exp %89 : vector<16x16xf32>
    %cst_30 = arith.constant dense<0.000000e+00> : vector<16xf32>
    %91 = vector.multi_reduction <add>, %90, %cst_30 [1] : vector<16x16xf32> to vector<16xf32>
    %92 = vector.shape_cast %91 : vector<16xf32> to vector<16x1xf32>
    %93 = tpu.reciprocal %92 {approx = true} : vector<16x1xf32> -> vector<16x1xf32>
    %94 = vector.broadcast %93 : vector<16x1xf32> to vector<16x16xf32>
    %95 = arith.mulf %90, %94 : vector<16x16xf32>
    %96 = arith.truncf %95 : vector<16x16xf32> to vector<16x16xbf16>
    %cst_31 = arith.constant dense<0.000000e+00> : vector<16x32xf32>
    %97 = tpu.matmul %96, %77, %cst_31 {dimension_numbers = #tpu.dot_dimension_numbers<[1], [0], [0], [1], [0, 0, 1, 1], [], []>} : vector<16x16xbf16>, vector<16x32xbf16>, vector<16x32xf32> -> vector<16x32xf32>
    %98 = tpu.concatenate %28, %51, %74, %97 in 1 : vector<16x32xf32>, vector<16x32xf32>, vector<16x32xf32>, vector<16x32xf32> -> vector<16x128xf32>
    %99 = arith.truncf %98 : vector<16x128xf32> to vector<16x128xbf16>
    %c0_32 = arith.constant 0 : index
    %c0_33 = arith.constant 0 : index
    %c0_34 = arith.constant 0 : index
    %100 = vector.load %arg3[%c0_32, %c0_33, %c0_34] : memref<1x16x128xbf16, #tpu.memory_space<vmem>>, vector<1x16x128xbf16>
    %101 = vector.shape_cast %100 : vector<1x16x128xbf16> to vector<16x128xbf16>
    %102 = vector.shape_cast %99 : vector<16x128xbf16> to vector<1x16x128xbf16>
    tpu.vector_store %arg3[%c0_32, %c0_33, %c0_34], %102 {strides = array<i32>} : memref<1x16x128xbf16, #tpu.memory_space<vmem>>, vector<1x16x128xbf16>,
    return
  }
  func.func @transform_0(%arg0: i32) -> (i32, i32, i32) {
    %c0_i32 = arith.constant 0 : i32
    %c0_i32_0 = arith.constant 0 : i32
    %c0_i32_1 = arith.constant 0 : i32
    return %arg0, %c0_i32, %c0_i32_0 : i32, i32, i32
  }
  func.func @transform_1(%arg0: i32) -> (i32, i32, i32) {
    %c0_i32 = arith.constant 0 : i32
    %c0_i32_0 = arith.constant 0 : i32
    %c0_i32_1 = arith.constant 0 : i32
    return %arg0, %c0_i32, %c0_i32_0 : i32, i32, i32
  }
  func.func @transform_2(%arg0: i32) -> (i32, i32, i32) {
    %c0_i32 = arith.constant 0 : i32
    %c0_i32_0 = arith.constant 0 : i32
    %c0_i32_1 = arith.constant 0 : i32
    return %arg0, %c0_i32, %c0_i32_0 : i32, i32, i32
  }
}

module attributes {stable_mosaic.version = 11 : i64} {
  func.func @_matmul_kernel(%arg0: i32, %arg1: i32, %arg2: i32, %arg3: memref<32x128xbf16, #tpu.memory_space<vmem>>, %arg4: memref<128x128xbf16, #tpu.memory_space<vmem>>, %arg5: memref<1x128xf32, #tpu.memory_space<vmem>>, %arg6: memref<32x128xbf16, #tpu.memory_space<vmem>>, %arg7: memref<32x128xf32, #tpu.memory_space<vmem>>) attributes {dimension_semantics = [#tpu.dimension_semantics<parallel>, #tpu.dimension_semantics<parallel>, #tpu.dimension_semantics<arbitrary>], iteration_bounds = array<i64: 1, 1, 1>, scalar_prefetch = 0 : i64, scratch_operands = 1 : i64, tpu.core_type = #tpu.core_type<tc>, window_params = [{transform_indices = @transform_0, window_bounds = array<i64: 32, 128>}, {transform_indices = @transform_1, window_bounds = array<i64: 128, 128>}, {transform_indices = @transform_2, window_bounds = array<i64: 1, 128>}, {transform_indices = @transform_3, window_bounds = array<i64: 32, 128>}]} {
    %c0_i32 = arith.constant 0 : i32
    %0 = arith.cmpi eq, %arg2, %c0_i32 : i32
    %1 = arith.extui %0 : i1 to i32
    %c0_i32_0 = arith.constant 0 : i32
    %2 = arith.cmpi ne, %1, %c0_i32_0 : i32
    scf.if %2 {
      %cst_10 = arith.constant 0.000000e+00 : f32
      %12 = vector.broadcast %cst_10 : f32 to vector<32x128xf32>
      %c0_11 = arith.constant 0 : index
      %c0_12 = arith.constant 0 : index
      %13 = vector.load %arg7[%c0_11, %c0_12] : memref<32x128xf32, #tpu.memory_space<vmem>>, vector<32x128xf32>
      tpu.vector_store %arg7[%c0_11, %c0_12], %12 {strides = array<i32>} : memref<32x128xf32, #tpu.memory_space<vmem>>, vector<32x128xf32>,
    } else {
    }
    %c0 = arith.constant 0 : index
    %c0_1 = arith.constant 0 : index
    %3 = vector.load %arg7[%c0, %c0_1] : memref<32x128xf32, #tpu.memory_space<vmem>>, vector<32x128xf32>
    %c0_2 = arith.constant 0 : index
    %c0_3 = arith.constant 0 : index
    %4 = vector.load %arg3[%c0_2, %c0_3] : memref<32x128xbf16, #tpu.memory_space<vmem>>, vector<32x128xbf16>
    %c0_4 = arith.constant 0 : index
    %c0_5 = arith.constant 0 : index
    %5 = vector.load %arg4[%c0_4, %c0_5] : memref<128x128xbf16, #tpu.memory_space<vmem>>, vector<128x128xbf16>
    %cst = arith.constant dense<0.000000e+00> : vector<32x128xf32>
    %6 = tpu.matmul %4, %5, %cst {dimension_numbers = #tpu.dot_dimension_numbers<[1], [0], [0], [1], [0, 0, 1, 1], [], []>} : vector<32x128xbf16>, vector<128x128xbf16>, vector<32x128xf32> -> vector<32x128xf32>
    %7 = arith.addf %3, %6 : vector<32x128xf32>
    %c0_6 = arith.constant 0 : index
    %c0_7 = arith.constant 0 : index
    %8 = vector.load %arg7[%c0_6, %c0_7] : memref<32x128xf32, #tpu.memory_space<vmem>>, vector<32x128xf32>
    tpu.vector_store %arg7[%c0_6, %c0_7], %7 {strides = array<i32>} : memref<32x128xf32, #tpu.memory_space<vmem>>, vector<32x128xf32>,
    %c0_i32_8 = arith.constant 0 : i32
    %9 = arith.cmpi eq, %arg2, %c0_i32_8 : i32
    %10 = arith.extui %9 : i1 to i32
    %c0_i32_9 = arith.constant 0 : i32
    %11 = arith.cmpi ne, %10, %c0_i32_9 : i32
    scf.if %11 {
      %c0_10 = arith.constant 0 : index
      %c0_11 = arith.constant 0 : index
      %12 = vector.load %arg7[%c0_10, %c0_11] : memref<32x128xf32, #tpu.memory_space<vmem>>, vector<32x128xf32>
      %c0_12 = arith.constant 0 : index
      %c0_13 = arith.constant 0 : index
      %13 = vector.load %arg5[%c0_12, %c0_13] : memref<1x128xf32, #tpu.memory_space<vmem>>, vector<1x128xf32>
      %14 = vector.broadcast %13 : vector<1x128xf32> to vector<32x128xf32>
      %15 = arith.addf %12, %14 : vector<32x128xf32>
      %16 = arith.truncf %15 : vector<32x128xf32> to vector<32x128xbf16>
      %c0_14 = arith.constant 0 : index
      %c0_15 = arith.constant 0 : index
      %17 = vector.load %arg6[%c0_14, %c0_15] : memref<32x128xbf16, #tpu.memory_space<vmem>>, vector<32x128xbf16>
      tpu.vector_store %arg6[%c0_14, %c0_15], %16 {strides = array<i32>} : memref<32x128xbf16, #tpu.memory_space<vmem>>, vector<32x128xbf16>,
    } else {
    }
    return
  }
  func.func @transform_0(%arg0: i32, %arg1: i32, %arg2: i32) -> (i32, i32) {
    %c0_i32 = arith.constant 0 : i32
    return %arg0, %arg2 : i32, i32
  }
  func.func @transform_1(%arg0: i32, %arg1: i32, %arg2: i32) -> (i32, i32) {
    %c0_i32 = arith.constant 0 : i32
    return %arg2, %arg1 : i32, i32
  }
  func.func @transform_2(%arg0: i32, %arg1: i32, %arg2: i32) -> (i32, i32) {
    %c0_i32 = arith.constant 0 : i32
    %c0_i32_0 = arith.constant 0 : i32
    return %c0_i32, %arg1 : i32, i32
  }
  func.func @transform_3(%arg0: i32, %arg1: i32, %arg2: i32) -> (i32, i32) {
    %c0_i32 = arith.constant 0 : i32
    return %arg0, %arg1 : i32, i32
  }
}

module attributes {stable_mosaic.version = 11 : i64} {
  func.func @_add_ln_kernel(%arg0: i32, %arg1: memref<32x128xbf16, #tpu.memory_space<vmem>>, %arg2: memref<32x128xbf16, #tpu.memory_space<vmem>>, %arg3: memref<1x128xf32, #tpu.memory_space<vmem>>, %arg4: memref<1x128xf32, #tpu.memory_space<vmem>>, %arg5: memref<32x128xbf16, #tpu.memory_space<vmem>>) attributes {dimension_semantics = [#tpu.dimension_semantics<parallel>], iteration_bounds = array<i64: 1>, scalar_prefetch = 0 : i64, scratch_operands = 0 : i64, tpu.core_type = #tpu.core_type<tc>, window_params = [{transform_indices = @transform_0, window_bounds = array<i64: 32, 128>}, {transform_indices = @transform_1, window_bounds = array<i64: 32, 128>}, {pipeline_mode = #tpu.pipeline_mode<synchronous>, transform_indices = @transform_2, window_bounds = array<i64: 1, 128>}, {pipeline_mode = #tpu.pipeline_mode<synchronous>, transform_indices = @transform_3, window_bounds = array<i64: 1, 128>}, {transform_indices = @transform_4, window_bounds = array<i64: 32, 128>}]} {
    %c0 = arith.constant 0 : index
    %c0_0 = arith.constant 0 : index
    %0 = vector.load %arg1[%c0, %c0_0] : memref<32x128xbf16, #tpu.memory_space<vmem>>, vector<32x128xbf16>
    %1 = arith.extf %0 : vector<32x128xbf16> to vector<32x128xf32>
    %c0_1 = arith.constant 0 : index
    %c0_2 = arith.constant 0 : index
    %2 = vector.load %arg2[%c0_1, %c0_2] : memref<32x128xbf16, #tpu.memory_space<vmem>>, vector<32x128xbf16>
    %3 = arith.extf %2 : vector<32x128xbf16> to vector<32x128xf32>
    %4 = arith.addf %1, %3 : vector<32x128xf32>
    %cst = arith.constant dense<0.000000e+00> : vector<32xf32>
    %5 = vector.multi_reduction <add>, %4, %cst [1] : vector<32x128xf32> to vector<32xf32>
    %6 = vector.shape_cast %5 : vector<32xf32> to vector<32x1xf32>
    %cst_3 = arith.constant 1.280000e+02 : f32
    %7 = vector.broadcast %cst_3 : f32 to vector<32x1xf32>
    %8 = arith.divf %6, %7 : vector<32x1xf32>
    %9 = vector.broadcast %8 : vector<32x1xf32> to vector<32x128xf32>
    %10 = arith.subf %4, %9 : vector<32x128xf32>
    %11 = arith.mulf %10, %10 : vector<32x128xf32>
    %cst_4 = arith.constant dense<0.000000e+00> : vector<32xf32>
    %12 = vector.multi_reduction <add>, %11, %cst_4 [1] : vector<32x128xf32> to vector<32xf32>
    %13 = vector.shape_cast %12 : vector<32xf32> to vector<32x1xf32>
    %cst_5 = arith.constant 1.280000e+02 : f32
    %14 = vector.broadcast %cst_5 : f32 to vector<32x1xf32>
    %15 = arith.divf %13, %14 : vector<32x1xf32>
    %cst_6 = arith.constant 9.99999974E-6 : f32
    %16 = vector.broadcast %cst_6 : f32 to vector<32x1xf32>
    %17 = arith.addf %15, %16 : vector<32x1xf32>
    %18 = math.rsqrt %17 : vector<32x1xf32>
    %19 = vector.broadcast %18 : vector<32x1xf32> to vector<32x128xf32>
    %20 = arith.mulf %10, %19 : vector<32x128xf32>
    %c0_7 = arith.constant 0 : index
    %c0_8 = arith.constant 0 : index
    %21 = vector.load %arg3[%c0_7, %c0_8] : memref<1x128xf32, #tpu.memory_space<vmem>>, vector<1x128xf32>
    %22 = vector.broadcast %21 : vector<1x128xf32> to vector<32x128xf32>
    %23 = arith.mulf %20, %22 : vector<32x128xf32>
    %c0_9 = arith.constant 0 : index
    %c0_10 = arith.constant 0 : index
    %24 = vector.load %arg4[%c0_9, %c0_10] : memref<1x128xf32, #tpu.memory_space<vmem>>, vector<1x128xf32>
    %25 = vector.broadcast %24 : vector<1x128xf32> to vector<32x128xf32>
    %26 = arith.addf %23, %25 : vector<32x128xf32>
    %27 = arith.truncf %26 : vector<32x128xf32> to vector<32x128xbf16>
    %c0_11 = arith.constant 0 : index
    %c0_12 = arith.constant 0 : index
    %28 = vector.load %arg5[%c0_11, %c0_12] : memref<32x128xbf16, #tpu.memory_space<vmem>>, vector<32x128xbf16>
    tpu.vector_store %arg5[%c0_11, %c0_12], %27 {strides = array<i32>} : memref<32x128xbf16, #tpu.memory_space<vmem>>, vector<32x128xbf16>,
    return
  }
  func.func @transform_0(%arg0: i32) -> (i32, i32) {
    %c0_i32 = arith.constant 0 : i32
    %c0_i32_0 = arith.constant 0 : i32
    return %arg0, %c0_i32 : i32, i32
  }
  func.func @transform_1(%arg0: i32) -> (i32, i32) {
    %c0_i32 = arith.constant 0 : i32
    %c0_i32_0 = arith.constant 0 : i32
    return %arg0, %c0_i32 : i32, i32
  }
  func.func @transform_2(%arg0: i32) -> (i32, i32) {
    %c0_i32 = arith.constant 0 : i32
    %c0_i32_0 = arith.constant 0 : i32
    %c0_i32_1 = arith.constant 0 : i32
    return %c0_i32, %c0_i32_0 : i32, i32
  }
  func.func @transform_3(%arg0: i32) -> (i32, i32) {
    %c0_i32 = arith.constant 0 : i32
    %c0_i32_0 = arith.constant 0 : i32
    %c0_i32_1 = arith.constant 0 : i32
    return %c0_i32, %c0_i32_0 : i32, i32
  }
  func.func @transform_4(%arg0: i32) -> (i32, i32) {
    %c0_i32 = arith.constant 0 : i32
    %c0_i32_0 = arith.constant 0 : i32
    return %arg0, %c0_i32 : i32, i32
  }
}

module attributes {stable_mosaic.version = 11 : i64} {
  func.func @_matmul_kernel(%arg0: i32, %arg1: i32, %arg2: i32, %arg3: memref<32x128xbf16, #tpu.memory_space<vmem>>, %arg4: memref<128x256xbf16, #tpu.memory_space<vmem>>, %arg5: memref<1x256xf32, #tpu.memory_space<vmem>>, %arg6: memref<32x256xbf16, #tpu.memory_space<vmem>>, %arg7: memref<32x256xf32, #tpu.memory_space<vmem>>) attributes {dimension_semantics = [#tpu.dimension_semantics<parallel>, #tpu.dimension_semantics<parallel>, #tpu.dimension_semantics<arbitrary>], iteration_bounds = array<i64: 1, 1, 1>, scalar_prefetch = 0 : i64, scratch_operands = 1 : i64, tpu.core_type = #tpu.core_type<tc>, window_params = [{transform_indices = @transform_0, window_bounds = array<i64: 32, 128>}, {transform_indices = @transform_1, window_bounds = array<i64: 128, 256>}, {transform_indices = @transform_2, window_bounds = array<i64: 1, 256>}, {transform_indices = @transform_3, window_bounds = array<i64: 32, 256>}]} {
    %c0_i32 = arith.constant 0 : i32
    %0 = arith.cmpi eq, %arg2, %c0_i32 : i32
    %1 = arith.extui %0 : i1 to i32
    %c0_i32_0 = arith.constant 0 : i32
    %2 = arith.cmpi ne, %1, %c0_i32_0 : i32
    scf.if %2 {
      %cst_10 = arith.constant 0.000000e+00 : f32
      %12 = vector.broadcast %cst_10 : f32 to vector<32x256xf32>
      %c0_11 = arith.constant 0 : index
      %c0_12 = arith.constant 0 : index
      %13 = vector.load %arg7[%c0_11, %c0_12] : memref<32x256xf32, #tpu.memory_space<vmem>>, vector<32x256xf32>
      tpu.vector_store %arg7[%c0_11, %c0_12], %12 {strides = array<i32>} : memref<32x256xf32, #tpu.memory_space<vmem>>, vector<32x256xf32>,
    } else {
    }
    %c0 = arith.constant 0 : index
    %c0_1 = arith.constant 0 : index
    %3 = vector.load %arg7[%c0, %c0_1] : memref<32x256xf32, #tpu.memory_space<vmem>>, vector<32x256xf32>
    %c0_2 = arith.constant 0 : index
    %c0_3 = arith.constant 0 : index
    %4 = vector.load %arg3[%c0_2, %c0_3] : memref<32x128xbf16, #tpu.memory_space<vmem>>, vector<32x128xbf16>
    %c0_4 = arith.constant 0 : index
    %c0_5 = arith.constant 0 : index
    %5 = vector.load %arg4[%c0_4, %c0_5] : memref<128x256xbf16, #tpu.memory_space<vmem>>, vector<128x256xbf16>
    %cst = arith.constant dense<0.000000e+00> : vector<32x256xf32>
    %6 = tpu.matmul %4, %5, %cst {dimension_numbers = #tpu.dot_dimension_numbers<[1], [0], [0], [1], [0, 0, 1, 1], [], []>} : vector<32x128xbf16>, vector<128x256xbf16>, vector<32x256xf32> -> vector<32x256xf32>
    %7 = arith.addf %3, %6 : vector<32x256xf32>
    %c0_6 = arith.constant 0 : index
    %c0_7 = arith.constant 0 : index
    %8 = vector.load %arg7[%c0_6, %c0_7] : memref<32x256xf32, #tpu.memory_space<vmem>>, vector<32x256xf32>
    tpu.vector_store %arg7[%c0_6, %c0_7], %7 {strides = array<i32>} : memref<32x256xf32, #tpu.memory_space<vmem>>, vector<32x256xf32>,
    %c0_i32_8 = arith.constant 0 : i32
    %9 = arith.cmpi eq, %arg2, %c0_i32_8 : i32
    %10 = arith.extui %9 : i1 to i32
    %c0_i32_9 = arith.constant 0 : i32
    %11 = arith.cmpi ne, %10, %c0_i32_9 : i32
    scf.if %11 {
      %c0_10 = arith.constant 0 : index
      %c0_11 = arith.constant 0 : index
      %12 = vector.load %arg7[%c0_10, %c0_11] : memref<32x256xf32, #tpu.memory_space<vmem>>, vector<32x256xf32>
      %c0_12 = arith.constant 0 : index
      %c0_13 = arith.constant 0 : index
      %13 = vector.load %arg5[%c0_12, %c0_13] : memref<1x256xf32, #tpu.memory_space<vmem>>, vector<1x256xf32>
      %14 = vector.broadcast %13 : vector<1x256xf32> to vector<32x256xf32>
      %15 = arith.addf %12, %14 : vector<32x256xf32>
      %cst_14 = arith.constant 0.000000e+00 : f32
      %16 = vector.broadcast %cst_14 : f32 to vector<32x256xf32>
      %17 = arith.maximumf %15, %16 : vector<32x256xf32>
      %18 = arith.truncf %17 : vector<32x256xf32> to vector<32x256xbf16>
      %c0_15 = arith.constant 0 : index
      %c0_16 = arith.constant 0 : index
      %19 = vector.load %arg6[%c0_15, %c0_16] : memref<32x256xbf16, #tpu.memory_space<vmem>>, vector<32x256xbf16>
      tpu.vector_store %arg6[%c0_15, %c0_16], %18 {strides = array<i32>} : memref<32x256xbf16, #tpu.memory_space<vmem>>, vector<32x256xbf16>,
    } else {
    }
    return
  }
  func.func @transform_0(%arg0: i32, %arg1: i32, %arg2: i32) -> (i32, i32) {
    %c0_i32 = arith.constant 0 : i32
    return %arg0, %arg2 : i32, i32
  }
  func.func @transform_1(%arg0: i32, %arg1: i32, %arg2: i32) -> (i32, i32) {
    %c0_i32 = arith.constant 0 : i32
    return %arg2, %arg1 : i32, i32
  }
  func.func @transform_2(%arg0: i32, %arg1: i32, %arg2: i32) -> (i32, i32) {
    %c0_i32 = arith.constant 0 : i32
    %c0_i32_0 = arith.constant 0 : i32
    return %c0_i32, %arg1 : i32, i32
  }
  func.func @transform_3(%arg0: i32, %arg1: i32, %arg2: i32) -> (i32, i32) {
    %c0_i32 = arith.constant 0 : i32
    return %arg0, %arg1 : i32, i32
  }
}

module attributes {stable_mosaic.version = 11 : i64} {
  func.func @_matmul_kernel(%arg0: i32, %arg1: i32, %arg2: i32, %arg3: memref<32x256xbf16, #tpu.memory_space<vmem>>, %arg4: memref<256x128xbf16, #tpu.memory_space<vmem>>, %arg5: memref<1x128xf32, #tpu.memory_space<vmem>>, %arg6: memref<32x128xbf16, #tpu.memory_space<vmem>>, %arg7: memref<32x128xf32, #tpu.memory_space<vmem>>) attributes {dimension_semantics = [#tpu.dimension_semantics<parallel>, #tpu.dimension_semantics<parallel>, #tpu.dimension_semantics<arbitrary>], iteration_bounds = array<i64: 1, 1, 1>, scalar_prefetch = 0 : i64, scratch_operands = 1 : i64, tpu.core_type = #tpu.core_type<tc>, window_params = [{transform_indices = @transform_0, window_bounds = array<i64: 32, 256>}, {transform_indices = @transform_1, window_bounds = array<i64: 256, 128>}, {transform_indices = @transform_2, window_bounds = array<i64: 1, 128>}, {transform_indices = @transform_3, window_bounds = array<i64: 32, 128>}]} {
    %c0_i32 = arith.constant 0 : i32
    %0 = arith.cmpi eq, %arg2, %c0_i32 : i32
    %1 = arith.extui %0 : i1 to i32
    %c0_i32_0 = arith.constant 0 : i32
    %2 = arith.cmpi ne, %1, %c0_i32_0 : i32
    scf.if %2 {
      %cst_10 = arith.constant 0.000000e+00 : f32
      %12 = vector.broadcast %cst_10 : f32 to vector<32x128xf32>
      %c0_11 = arith.constant 0 : index
      %c0_12 = arith.constant 0 : index
      %13 = vector.load %arg7[%c0_11, %c0_12] : memref<32x128xf32, #tpu.memory_space<vmem>>, vector<32x128xf32>
      tpu.vector_store %arg7[%c0_11, %c0_12], %12 {strides = array<i32>} : memref<32x128xf32, #tpu.memory_space<vmem>>, vector<32x128xf32>,
    } else {
    }
    %c0 = arith.constant 0 : index
    %c0_1 = arith.constant 0 : index
    %3 = vector.load %arg7[%c0, %c0_1] : memref<32x128xf32, #tpu.memory_space<vmem>>, vector<32x128xf32>
    %c0_2 = arith.constant 0 : index
    %c0_3 = arith.constant 0 : index
    %4 = vector.load %arg3[%c0_2, %c0_3] : memref<32x256xbf16, #tpu.memory_space<vmem>>, vector<32x256xbf16>
    %c0_4 = arith.constant 0 : index
    %c0_5 = arith.constant 0 : index
    %5 = vector.load %arg4[%c0_4, %c0_5] : memref<256x128xbf16, #tpu.memory_space<vmem>>, vector<256x128xbf16>
    %cst = arith.constant dense<0.000000e+00> : vector<32x128xf32>
    %6 = tpu.matmul %4, %5, %cst {dimension_numbers = #tpu.dot_dimension_numbers<[1], [0], [0], [1], [0, 0, 1, 1], [], []>} : vector<32x256xbf16>, vector<256x128xbf16>, vector<32x128xf32> -> vector<32x128xf32>
    %7 = arith.addf %3, %6 : vector<32x128xf32>
    %c0_6 = arith.constant 0 : index
    %c0_7 = arith.constant 0 : index
    %8 = vector.load %arg7[%c0_6, %c0_7] : memref<32x128xf32, #tpu.memory_space<vmem>>, vector<32x128xf32>
    tpu.vector_store %arg7[%c0_6, %c0_7], %7 {strides = array<i32>} : memref<32x128xf32, #tpu.memory_space<vmem>>, vector<32x128xf32>,
    %c0_i32_8 = arith.constant 0 : i32
    %9 = arith.cmpi eq, %arg2, %c0_i32_8 : i32
    %10 = arith.extui %9 : i1 to i32
    %c0_i32_9 = arith.constant 0 : i32
    %11 = arith.cmpi ne, %10, %c0_i32_9 : i32
    scf.if %11 {
      %c0_10 = arith.constant 0 : index
      %c0_11 = arith.constant 0 : index
      %12 = vector.load %arg7[%c0_10, %c0_11] : memref<32x128xf32, #tpu.memory_space<vmem>>, vector<32x128xf32>
      %c0_12 = arith.constant 0 : index
      %c0_13 = arith.constant 0 : index
      %13 = vector.load %arg5[%c0_12, %c0_13] : memref<1x128xf32, #tpu.memory_space<vmem>>, vector<1x128xf32>
      %14 = vector.broadcast %13 : vector<1x128xf32> to vector<32x128xf32>
      %15 = arith.addf %12, %14 : vector<32x128xf32>
      %16 = arith.truncf %15 : vector<32x128xf32> to vector<32x128xbf16>
      %c0_14 = arith.constant 0 : index
      %c0_15 = arith.constant 0 : index
      %17 = vector.load %arg6[%c0_14, %c0_15] : memref<32x128xbf16, #tpu.memory_space<vmem>>, vector<32x128xbf16>
      tpu.vector_store %arg6[%c0_14, %c0_15], %16 {strides = array<i32>} : memref<32x128xbf16, #tpu.memory_space<vmem>>, vector<32x128xbf16>,
    } else {
    }
    return
  }
  func.func @transform_0(%arg0: i32, %arg1: i32, %arg2: i32) -> (i32, i32) {
    %c0_i32 = arith.constant 0 : i32
    return %arg0, %arg2 : i32, i32
  }
  func.func @transform_1(%arg0: i32, %arg1: i32, %arg2: i32) -> (i32, i32) {
    %c0_i32 = arith.constant 0 : i32
    return %arg2, %arg1 : i32, i32
  }
  func.func @transform_2(%arg0: i32, %arg1: i32, %arg2: i32) -> (i32, i32) {
    %c0_i32 = arith.constant 0 : i32
    %c0_i32_0 = arith.constant 0 : i32
    return %c0_i32, %arg1 : i32, i32
  }
  func.func @transform_3(%arg0: i32, %arg1: i32, %arg2: i32) -> (i32, i32) {
    %c0_i32 = arith.constant 0 : i32
    return %arg0, %arg1 : i32, i32
  }
}

module attributes {stable_mosaic.version = 11 : i64} {
  func.func @_matmul_kernel(%arg0: i32, %arg1: i32, %arg2: i32, %arg3: memref<32x128xbf16, #tpu.memory_space<vmem>>, %arg4: memref<128x256xbf16, #tpu.memory_space<vmem>>, %arg5: memref<1x256xf32, #tpu.memory_space<vmem>>, %arg6: memref<32x256xbf16, #tpu.memory_space<vmem>>, %arg7: memref<32x256xf32, #tpu.memory_space<vmem>>) attributes {dimension_semantics = [#tpu.dimension_semantics<parallel>, #tpu.dimension_semantics<parallel>, #tpu.dimension_semantics<arbitrary>], iteration_bounds = array<i64: 1, 1, 1>, scalar_prefetch = 0 : i64, scratch_operands = 1 : i64, tpu.core_type = #tpu.core_type<tc>, window_params = [{transform_indices = @transform_0, window_bounds = array<i64: 32, 128>}, {transform_indices = @transform_1, window_bounds = array<i64: 128, 256>}, {transform_indices = @transform_2, window_bounds = array<i64: 1, 256>}, {transform_indices = @transform_3, window_bounds = array<i64: 32, 256>}]} {
    %c0_i32 = arith.constant 0 : i32
    %0 = arith.cmpi eq, %arg2, %c0_i32 : i32
    %1 = arith.extui %0 : i1 to i32
    %c0_i32_0 = arith.constant 0 : i32
    %2 = arith.cmpi ne, %1, %c0_i32_0 : i32
    scf.if %2 {
      %cst_10 = arith.constant 0.000000e+00 : f32
      %12 = vector.broadcast %cst_10 : f32 to vector<32x256xf32>
      %c0_11 = arith.constant 0 : index
      %c0_12 = arith.constant 0 : index
      %13 = vector.load %arg7[%c0_11, %c0_12] : memref<32x256xf32, #tpu.memory_space<vmem>>, vector<32x256xf32>
      tpu.vector_store %arg7[%c0_11, %c0_12], %12 {strides = array<i32>} : memref<32x256xf32, #tpu.memory_space<vmem>>, vector<32x256xf32>,
    } else {
    }
    %c0 = arith.constant 0 : index
    %c0_1 = arith.constant 0 : index
    %3 = vector.load %arg7[%c0, %c0_1] : memref<32x256xf32, #tpu.memory_space<vmem>>, vector<32x256xf32>
    %c0_2 = arith.constant 0 : index
    %c0_3 = arith.constant 0 : index
    %4 = vector.load %arg3[%c0_2, %c0_3] : memref<32x128xbf16, #tpu.memory_space<vmem>>, vector<32x128xbf16>
    %c0_4 = arith.constant 0 : index
    %c0_5 = arith.constant 0 : index
    %5 = vector.load %arg4[%c0_4, %c0_5] : memref<128x256xbf16, #tpu.memory_space<vmem>>, vector<128x256xbf16>
    %cst = arith.constant dense<0.000000e+00> : vector<32x256xf32>
    %6 = tpu.matmul %4, %5, %cst {dimension_numbers = #tpu.dot_dimension_numbers<[1], [0], [0], [1], [0, 0, 1, 1], [], []>} : vector<32x128xbf16>, vector<128x256xbf16>, vector<32x256xf32> -> vector<32x256xf32>
    %7 = arith.addf %3, %6 : vector<32x256xf32>
    %c0_6 = arith.constant 0 : index
    %c0_7 = arith.constant 0 : index
    %8 = vector.load %arg7[%c0_6, %c0_7] : memref<32x256xf32, #tpu.memory_space<vmem>>, vector<32x256xf32>
    tpu.vector_store %arg7[%c0_6, %c0_7], %7 {strides = array<i32>} : memref<32x256xf32, #tpu.memory_space<vmem>>, vector<32x256xf32>,
    %c0_i32_8 = arith.constant 0 : i32
    %9 = arith.cmpi eq, %arg2, %c0_i32_8 : i32
    %10 = arith.extui %9 : i1 to i32
    %c0_i32_9 = arith.constant 0 : i32
    %11 = arith.cmpi ne, %10, %c0_i32_9 : i32
    scf.if %11 {
      %c0_10 = arith.constant 0 : index
      %c0_11 = arith.constant 0 : index
      %12 = vector.load %arg7[%c0_10, %c0_11] : memref<32x256xf32, #tpu.memory_space<vmem>>, vector<32x256xf32>
      %c0_12 = arith.constant 0 : index
      %c0_13 = arith.constant 0 : index
      %13 = vector.load %arg5[%c0_12, %c0_13] : memref<1x256xf32, #tpu.memory_space<vmem>>, vector<1x256xf32>
      %14 = vector.broadcast %13 : vector<1x256xf32> to vector<32x256xf32>
      %15 = arith.addf %12, %14 : vector<32x256xf32>
      %16 = arith.truncf %15 : vector<32x256xf32> to vector<32x256xbf16>
      %c0_14 = arith.constant 0 : index
      %c0_15 = arith.constant 0 : index
      %17 = vector.load %arg6[%c0_14, %c0_15] : memref<32x256xbf16, #tpu.memory_space<vmem>>, vector<32x256xbf16>
      tpu.vector_store %arg6[%c0_14, %c0_15], %16 {strides = array<i32>} : memref<32x256xbf16, #tpu.memory_space<vmem>>, vector<32x256xbf16>,
    } else {
    }
    return
  }
  func.func @transform_0(%arg0: i32, %arg1: i32, %arg2: i32) -> (i32, i32) {
    %c0_i32 = arith.constant 0 : i32
    return %arg0, %arg2 : i32, i32
  }
  func.func @transform_1(%arg0: i32, %arg1: i32, %arg2: i32) -> (i32, i32) {
    %c0_i32 = arith.constant 0 : i32
    return %arg2, %arg1 : i32, i32
  }
  func.func @transform_2(%arg0: i32, %arg1: i32, %arg2: i32) -> (i32, i32) {
    %c0_i32 = arith.constant 0 : i32
    %c0_i32_0 = arith.constant 0 : i32
    return %c0_i32, %arg1 : i32, i32
  }
  func.func @transform_3(%arg0: i32, %arg1: i32, %arg2: i32) -> (i32, i32) {
    %c0_i32 = arith.constant 0 : i32
    return %arg0, %arg1 : i32, i32
  }
}

module attributes {stable_mosaic.version = 11 : i64} {
  func.func @_cross_attn_kernel(%arg0: i32, %arg1: memref<1x16x128xbf16, #tpu.memory_space<vmem>>, %arg2: memref<1x16x256xbf16, #tpu.memory_space<vmem>>, %arg3: memref<1x16x16xbf16, #tpu.memory_space<vmem>>, %arg4: memref<1x16x128xbf16, #tpu.memory_space<vmem>>) attributes {dimension_semantics = [#tpu.dimension_semantics<parallel>], iteration_bounds = array<i64: 2>, scalar_prefetch = 0 : i64, scratch_operands = 0 : i64, tpu.core_type = #tpu.core_type<tc>, window_params = [{transform_indices = @transform_0, window_bounds = array<i64: 1, 16, 128>}, {transform_indices = @transform_1, window_bounds = array<i64: 1, 16, 256>}, {transform_indices = @transform_2, window_bounds = array<i64: 1, 16, 16>}, {transform_indices = @transform_3, window_bounds = array<i64: 1, 16, 128>}]} {
    %c0 = arith.constant 0 : index
    %c0_0 = arith.constant 0 : index
    %c0_1 = arith.constant 0 : index
    %0 = vector.load %arg1[%c0, %c0_0, %c0_1] : memref<1x16x128xbf16, #tpu.memory_space<vmem>>, vector<1x16x128xbf16>
    %1 = vector.shape_cast %0 : vector<1x16x128xbf16> to vector<16x128xbf16>
    %c0_2 = arith.constant 0 : index
    %c0_3 = arith.constant 0 : index
    %c0_4 = arith.constant 0 : index
    %2 = vector.load %arg2[%c0_2, %c0_3, %c0_4] : memref<1x16x256xbf16, #tpu.memory_space<vmem>>, vector<1x16x256xbf16>
    %3 = vector.shape_cast %2 : vector<1x16x256xbf16> to vector<16x256xbf16>
    %c0_5 = arith.constant 0 : index
    %c0_6 = arith.constant 0 : index
    %c0_7 = arith.constant 0 : index
    %4 = vector.load %arg3[%c0_5, %c0_6, %c0_7] : memref<1x16x16xbf16, #tpu.memory_space<vmem>>, vector<1x16x16xbf16>
    %5 = vector.shape_cast %4 : vector<1x16x16xbf16> to vector<16x16xbf16>
    %6 = vector.extract_strided_slice %1 {offsets = [0, 0], sizes = [16, 32], strides = [1, 1]} : vector<16x128xbf16> to vector<16x32xbf16>
    %7 = vector.extract_strided_slice %3 {offsets = [0, 0], sizes = [16, 32], strides = [1, 1]} : vector<16x256xbf16> to vector<16x32xbf16>
    %8 = vector.extract_strided_slice %3 {offsets = [0, 128], sizes = [16, 32], strides = [1, 1]} : vector<16x256xbf16> to vector<16x32xbf16>
    %9 = tpu.transpose %7, [1, 0] : vector<16x32xbf16> -> vector<32x16xbf16>
    %cst = arith.constant dense<0.000000e+00> : vector<16x16xf32>
    %10 = tpu.matmul %6, %9, %cst {dimension_numbers = #tpu.dot_dimension_numbers<[1], [0], [0], [1], [0, 0, 1, 1], [], []>} : vector<16x32xbf16>, vector<32x16xbf16>, vector<16x16xf32> -> vector<16x16xf32>
    %cst_8 = arith.constant 0.176776692 : f32
    %11 = vector.broadcast %cst_8 : f32 to vector<16x16xf32>
    %12 = arith.mulf %10, %11 : vector<16x16xf32>
    %cst_9 = arith.constant 0.000000e+00 : bf16
    %13 = vector.broadcast %cst_9 : bf16 to vector<16x16xbf16>
    %14 = arith.cmpf ogt, %5, %13 : vector<16x16xbf16>
    %cst_10 = arith.constant -1.000000e+30 : f32
    %15 = vector.broadcast %cst_10 : f32 to vector<16x16xf32>
    %16 = arith.select %14, %12, %15 : vector<16x16xi1>, vector<16x16xf32>
    %cst_11 = arith.constant dense<0xFF800000> : vector<16xf32>
    %17 = vector.multi_reduction <maximumf>, %16, %cst_11 [1] : vector<16x16xf32> to vector<16xf32>
    %18 = vector.shape_cast %17 : vector<16xf32> to vector<16x1xf32>
    %19 = vector.broadcast %18 : vector<16x1xf32> to vector<16x16xf32>
    %20 = arith.subf %16, %19 : vector<16x16xf32>
    %21 = math.exp %20 : vector<16x16xf32>
    %cst_12 = arith.constant dense<0.000000e+00> : vector<16xf32>
    %22 = vector.multi_reduction <add>, %21, %cst_12 [1] : vector<16x16xf32> to vector<16xf32>
    %23 = vector.shape_cast %22 : vector<16xf32> to vector<16x1xf32>
    %24 = tpu.reciprocal %23 {approx = true} : vector<16x1xf32> -> vector<16x1xf32>
    %25 = vector.broadcast %24 : vector<16x1xf32> to vector<16x16xf32>
    %26 = arith.mulf %21, %25 : vector<16x16xf32>
    %27 = arith.truncf %26 : vector<16x16xf32> to vector<16x16xbf16>
    %cst_13 = arith.constant dense<0.000000e+00> : vector<16x32xf32>
    %28 = tpu.matmul %27, %8, %cst_13 {dimension_numbers = #tpu.dot_dimension_numbers<[1], [0], [0], [1], [0, 0, 1, 1], [], []>} : vector<16x16xbf16>, vector<16x32xbf16>, vector<16x32xf32> -> vector<16x32xf32>
    %29 = vector.extract_strided_slice %1 {offsets = [0, 32], sizes = [16, 32], strides = [1, 1]} : vector<16x128xbf16> to vector<16x32xbf16>
    %30 = vector.extract_strided_slice %3 {offsets = [0, 32], sizes = [16, 32], strides = [1, 1]} : vector<16x256xbf16> to vector<16x32xbf16>
    %31 = vector.extract_strided_slice %3 {offsets = [0, 160], sizes = [16, 32], strides = [1, 1]} : vector<16x256xbf16> to vector<16x32xbf16>
    %32 = tpu.transpose %30, [1, 0] : vector<16x32xbf16> -> vector<32x16xbf16>
    %cst_14 = arith.constant dense<0.000000e+00> : vector<16x16xf32>
    %33 = tpu.matmul %29, %32, %cst_14 {dimension_numbers = #tpu.dot_dimension_numbers<[1], [0], [0], [1], [0, 0, 1, 1], [], []>} : vector<16x32xbf16>, vector<32x16xbf16>, vector<16x16xf32> -> vector<16x16xf32>
    %cst_15 = arith.constant 0.176776692 : f32
    %34 = vector.broadcast %cst_15 : f32 to vector<16x16xf32>
    %35 = arith.mulf %33, %34 : vector<16x16xf32>
    %cst_16 = arith.constant 0.000000e+00 : bf16
    %36 = vector.broadcast %cst_16 : bf16 to vector<16x16xbf16>
    %37 = arith.cmpf ogt, %5, %36 : vector<16x16xbf16>
    %cst_17 = arith.constant -1.000000e+30 : f32
    %38 = vector.broadcast %cst_17 : f32 to vector<16x16xf32>
    %39 = arith.select %37, %35, %38 : vector<16x16xi1>, vector<16x16xf32>
    %cst_18 = arith.constant dense<0xFF800000> : vector<16xf32>
    %40 = vector.multi_reduction <maximumf>, %39, %cst_18 [1] : vector<16x16xf32> to vector<16xf32>
    %41 = vector.shape_cast %40 : vector<16xf32> to vector<16x1xf32>
    %42 = vector.broadcast %41 : vector<16x1xf32> to vector<16x16xf32>
    %43 = arith.subf %39, %42 : vector<16x16xf32>
    %44 = math.exp %43 : vector<16x16xf32>
    %cst_19 = arith.constant dense<0.000000e+00> : vector<16xf32>
    %45 = vector.multi_reduction <add>, %44, %cst_19 [1] : vector<16x16xf32> to vector<16xf32>
    %46 = vector.shape_cast %45 : vector<16xf32> to vector<16x1xf32>
    %47 = tpu.reciprocal %46 {approx = true} : vector<16x1xf32> -> vector<16x1xf32>
    %48 = vector.broadcast %47 : vector<16x1xf32> to vector<16x16xf32>
    %49 = arith.mulf %44, %48 : vector<16x16xf32>
    %50 = arith.truncf %49 : vector<16x16xf32> to vector<16x16xbf16>
    %cst_20 = arith.constant dense<0.000000e+00> : vector<16x32xf32>
    %51 = tpu.matmul %50, %31, %cst_20 {dimension_numbers = #tpu.dot_dimension_numbers<[1], [0], [0], [1], [0, 0, 1, 1], [], []>} : vector<16x16xbf16>, vector<16x32xbf16>, vector<16x32xf32> -> vector<16x32xf32>
    %52 = vector.extract_strided_slice %1 {offsets = [0, 64], sizes = [16, 32], strides = [1, 1]} : vector<16x128xbf16> to vector<16x32xbf16>
    %53 = vector.extract_strided_slice %3 {offsets = [0, 64], sizes = [16, 32], strides = [1, 1]} : vector<16x256xbf16> to vector<16x32xbf16>
    %54 = vector.extract_strided_slice %3 {offsets = [0, 192], sizes = [16, 32], strides = [1, 1]} : vector<16x256xbf16> to vector<16x32xbf16>
    %55 = tpu.transpose %53, [1, 0] : vector<16x32xbf16> -> vector<32x16xbf16>
    %cst_21 = arith.constant dense<0.000000e+00> : vector<16x16xf32>
    %56 = tpu.matmul %52, %55, %cst_21 {dimension_numbers = #tpu.dot_dimension_numbers<[1], [0], [0], [1], [0, 0, 1, 1], [], []>} : vector<16x32xbf16>, vector<32x16xbf16>, vector<16x16xf32> -> vector<16x16xf32>
    %cst_22 = arith.constant 0.176776692 : f32
    %57 = vector.broadcast %cst_22 : f32 to vector<16x16xf32>
    %58 = arith.mulf %56, %57 : vector<16x16xf32>
    %cst_23 = arith.constant 0.000000e+00 : bf16
    %59 = vector.broadcast %cst_23 : bf16 to vector<16x16xbf16>
    %60 = arith.cmpf ogt, %5, %59 : vector<16x16xbf16>
    %cst_24 = arith.constant -1.000000e+30 : f32
    %61 = vector.broadcast %cst_24 : f32 to vector<16x16xf32>
    %62 = arith.select %60, %58, %61 : vector<16x16xi1>, vector<16x16xf32>
    %cst_25 = arith.constant dense<0xFF800000> : vector<16xf32>
    %63 = vector.multi_reduction <maximumf>, %62, %cst_25 [1] : vector<16x16xf32> to vector<16xf32>
    %64 = vector.shape_cast %63 : vector<16xf32> to vector<16x1xf32>
    %65 = vector.broadcast %64 : vector<16x1xf32> to vector<16x16xf32>
    %66 = arith.subf %62, %65 : vector<16x16xf32>
    %67 = math.exp %66 : vector<16x16xf32>
    %cst_26 = arith.constant dense<0.000000e+00> : vector<16xf32>
    %68 = vector.multi_reduction <add>, %67, %cst_26 [1] : vector<16x16xf32> to vector<16xf32>
    %69 = vector.shape_cast %68 : vector<16xf32> to vector<16x1xf32>
    %70 = tpu.reciprocal %69 {approx = true} : vector<16x1xf32> -> vector<16x1xf32>
    %71 = vector.broadcast %70 : vector<16x1xf32> to vector<16x16xf32>
    %72 = arith.mulf %67, %71 : vector<16x16xf32>
    %73 = arith.truncf %72 : vector<16x16xf32> to vector<16x16xbf16>
    %cst_27 = arith.constant dense<0.000000e+00> : vector<16x32xf32>
    %74 = tpu.matmul %73, %54, %cst_27 {dimension_numbers = #tpu.dot_dimension_numbers<[1], [0], [0], [1], [0, 0, 1, 1], [], []>} : vector<16x16xbf16>, vector<16x32xbf16>, vector<16x32xf32> -> vector<16x32xf32>
    %75 = vector.extract_strided_slice %1 {offsets = [0, 96], sizes = [16, 32], strides = [1, 1]} : vector<16x128xbf16> to vector<16x32xbf16>
    %76 = vector.extract_strided_slice %3 {offsets = [0, 96], sizes = [16, 32], strides = [1, 1]} : vector<16x256xbf16> to vector<16x32xbf16>
    %77 = vector.extract_strided_slice %3 {offsets = [0, 224], sizes = [16, 32], strides = [1, 1]} : vector<16x256xbf16> to vector<16x32xbf16>
    %78 = tpu.transpose %76, [1, 0] : vector<16x32xbf16> -> vector<32x16xbf16>
    %cst_28 = arith.constant dense<0.000000e+00> : vector<16x16xf32>
    %79 = tpu.matmul %75, %78, %cst_28 {dimension_numbers = #tpu.dot_dimension_numbers<[1], [0], [0], [1], [0, 0, 1, 1], [], []>} : vector<16x32xbf16>, vector<32x16xbf16>, vector<16x16xf32> -> vector<16x16xf32>
    %cst_29 = arith.constant 0.176776692 : f32
    %80 = vector.broadcast %cst_29 : f32 to vector<16x16xf32>
    %81 = arith.mulf %79, %80 : vector<16x16xf32>
    %cst_30 = arith.constant 0.000000e+00 : bf16
    %82 = vector.broadcast %cst_30 : bf16 to vector<16x16xbf16>
    %83 = arith.cmpf ogt, %5, %82 : vector<16x16xbf16>
    %cst_31 = arith.constant -1.000000e+30 : f32
    %84 = vector.broadcast %cst_31 : f32 to vector<16x16xf32>
    %85 = arith.select %83, %81, %84 : vector<16x16xi1>, vector<16x16xf32>
    %cst_32 = arith.constant dense<0xFF800000> : vector<16xf32>
    %86 = vector.multi_reduction <maximumf>, %85, %cst_32 [1] : vector<16x16xf32> to vector<16xf32>
    %87 = vector.shape_cast %86 : vector<16xf32> to vector<16x1xf32>
    %88 = vector.broadcast %87 : vector<16x1xf32> to vector<16x16xf32>
    %89 = arith.subf %85, %88 : vector<16x16xf32>
    %90 = math.exp %89 : vector<16x16xf32>
    %cst_33 = arith.constant dense<0.000000e+00> : vector<16xf32>
    %91 = vector.multi_reduction <add>, %90, %cst_33 [1] : vector<16x16xf32> to vector<16xf32>
    %92 = vector.shape_cast %91 : vector<16xf32> to vector<16x1xf32>
    %93 = tpu.reciprocal %92 {approx = true} : vector<16x1xf32> -> vector<16x1xf32>
    %94 = vector.broadcast %93 : vector<16x1xf32> to vector<16x16xf32>
    %95 = arith.mulf %90, %94 : vector<16x16xf32>
    %96 = arith.truncf %95 : vector<16x16xf32> to vector<16x16xbf16>
    %cst_34 = arith.constant dense<0.000000e+00> : vector<16x32xf32>
    %97 = tpu.matmul %96, %77, %cst_34 {dimension_numbers = #tpu.dot_dimension_numbers<[1], [0], [0], [1], [0, 0, 1, 1], [], []>} : vector<16x16xbf16>, vector<16x32xbf16>, vector<16x32xf32> -> vector<16x32xf32>
    %98 = tpu.concatenate %28, %51, %74, %97 in 1 : vector<16x32xf32>, vector<16x32xf32>, vector<16x32xf32>, vector<16x32xf32> -> vector<16x128xf32>
    %99 = arith.truncf %98 : vector<16x128xf32> to vector<16x128xbf16>
    %c0_35 = arith.constant 0 : index
    %c0_36 = arith.constant 0 : index
    %c0_37 = arith.constant 0 : index
    %100 = vector.load %arg4[%c0_35, %c0_36, %c0_37] : memref<1x16x128xbf16, #tpu.memory_space<vmem>>, vector<1x16x128xbf16>
    %101 = vector.shape_cast %100 : vector<1x16x128xbf16> to vector<16x128xbf16>
    %102 = vector.shape_cast %99 : vector<16x128xbf16> to vector<1x16x128xbf16>
    tpu.vector_store %arg4[%c0_35, %c0_36, %c0_37], %102 {strides = array<i32>} : memref<1x16x128xbf16, #tpu.memory_space<vmem>>, vector<1x16x128xbf16>,
    return
  }
  func.func @transform_0(%arg0: i32) -> (i32, i32, i32) {
    %c0_i32 = arith.constant 0 : i32
    %c0_i32_0 = arith.constant 0 : i32
    %c0_i32_1 = arith.constant 0 : i32
    return %arg0, %c0_i32, %c0_i32_0 : i32, i32, i32
  }
  func.func @transform_1(%arg0: i32) -> (i32, i32, i32) {
    %c0_i32 = arith.constant 0 : i32
    %c0_i32_0 = arith.constant 0 : i32
    %c0_i32_1 = arith.constant 0 : i32
    return %arg0, %c0_i32, %c0_i32_0 : i32, i32, i32
  }
  func.func @transform_2(%arg0: i32) -> (i32, i32, i32) {
    %c0_i32 = arith.constant 0 : i32
    %c0_i32_0 = arith.constant 0 : i32
    %c0_i32_1 = arith.constant 0 : i32
    return %arg0, %c0_i32, %c0_i32_0 : i32, i32, i32
  }
  func.func @transform_3(%arg0: i32) -> (i32, i32, i32) {
    %c0_i32 = arith.constant 0 : i32
    %c0_i32_0 = arith.constant 0 : i32
    %c0_i32_1 = arith.constant 0 : i32
    return %arg0, %c0_i32, %c0_i32_0 : i32, i32, i32
  }
}

module attributes {stable_mosaic.version = 11 : i64} {
  func.func @_matmul_kernel(%arg0: i32, %arg1: i32, %arg2: i32, %arg3: memref<32x128xbf16, #tpu.memory_space<vmem>>, %arg4: memref<128x128xbf16, #tpu.memory_space<vmem>>, %arg5: memref<1x128xf32, #tpu.memory_space<vmem>>, %arg6: memref<32x128xf32, #tpu.memory_space<vmem>>, %arg7: memref<32x128xf32, #tpu.memory_space<vmem>>) attributes {dimension_semantics = [#tpu.dimension_semantics<parallel>, #tpu.dimension_semantics<parallel>, #tpu.dimension_semantics<arbitrary>], iteration_bounds = array<i64: 1, 1, 1>, scalar_prefetch = 0 : i64, scratch_operands = 1 : i64, tpu.core_type = #tpu.core_type<tc>, window_params = [{transform_indices = @transform_0, window_bounds = array<i64: 32, 128>}, {transform_indices = @transform_1, window_bounds = array<i64: 128, 128>}, {transform_indices = @transform_2, window_bounds = array<i64: 1, 128>}, {transform_indices = @transform_3, window_bounds = array<i64: 32, 128>}]} {
    %c0_i32 = arith.constant 0 : i32
    %0 = arith.cmpi eq, %arg2, %c0_i32 : i32
    %1 = arith.extui %0 : i1 to i32
    %c0_i32_0 = arith.constant 0 : i32
    %2 = arith.cmpi ne, %1, %c0_i32_0 : i32
    scf.if %2 {
      %cst_10 = arith.constant 0.000000e+00 : f32
      %12 = vector.broadcast %cst_10 : f32 to vector<32x128xf32>
      %c0_11 = arith.constant 0 : index
      %c0_12 = arith.constant 0 : index
      %13 = vector.load %arg7[%c0_11, %c0_12] : memref<32x128xf32, #tpu.memory_space<vmem>>, vector<32x128xf32>
      tpu.vector_store %arg7[%c0_11, %c0_12], %12 {strides = array<i32>} : memref<32x128xf32, #tpu.memory_space<vmem>>, vector<32x128xf32>,
    } else {
    }
    %c0 = arith.constant 0 : index
    %c0_1 = arith.constant 0 : index
    %3 = vector.load %arg7[%c0, %c0_1] : memref<32x128xf32, #tpu.memory_space<vmem>>, vector<32x128xf32>
    %c0_2 = arith.constant 0 : index
    %c0_3 = arith.constant 0 : index
    %4 = vector.load %arg3[%c0_2, %c0_3] : memref<32x128xbf16, #tpu.memory_space<vmem>>, vector<32x128xbf16>
    %c0_4 = arith.constant 0 : index
    %c0_5 = arith.constant 0 : index
    %5 = vector.load %arg4[%c0_4, %c0_5] : memref<128x128xbf16, #tpu.memory_space<vmem>>, vector<128x128xbf16>
    %cst = arith.constant dense<0.000000e+00> : vector<32x128xf32>
    %6 = tpu.matmul %4, %5, %cst {dimension_numbers = #tpu.dot_dimension_numbers<[1], [0], [0], [1], [0, 0, 1, 1], [], []>} : vector<32x128xbf16>, vector<128x128xbf16>, vector<32x128xf32> -> vector<32x128xf32>
    %7 = arith.addf %3, %6 : vector<32x128xf32>
    %c0_6 = arith.constant 0 : index
    %c0_7 = arith.constant 0 : index
    %8 = vector.load %arg7[%c0_6, %c0_7] : memref<32x128xf32, #tpu.memory_space<vmem>>, vector<32x128xf32>
    tpu.vector_store %arg7[%c0_6, %c0_7], %7 {strides = array<i32>} : memref<32x128xf32, #tpu.memory_space<vmem>>, vector<32x128xf32>,
    %c0_i32_8 = arith.constant 0 : i32
    %9 = arith.cmpi eq, %arg2, %c0_i32_8 : i32
    %10 = arith.extui %9 : i1 to i32
    %c0_i32_9 = arith.constant 0 : i32
    %11 = arith.cmpi ne, %10, %c0_i32_9 : i32
    scf.if %11 {
      %c0_10 = arith.constant 0 : index
      %c0_11 = arith.constant 0 : index
      %12 = vector.load %arg7[%c0_10, %c0_11] : memref<32x128xf32, #tpu.memory_space<vmem>>, vector<32x128xf32>
      %c0_12 = arith.constant 0 : index
      %c0_13 = arith.constant 0 : index
      %13 = vector.load %arg5[%c0_12, %c0_13] : memref<1x128xf32, #tpu.memory_space<vmem>>, vector<1x128xf32>
      %14 = vector.broadcast %13 : vector<1x128xf32> to vector<32x128xf32>
      %15 = arith.addf %12, %14 : vector<32x128xf32>
      %cst_14 = arith.constant dense<0xFF800000> : vector<32xf32>
      %16 = vector.multi_reduction <maximumf>, %15, %cst_14 [1] : vector<32x128xf32> to vector<32xf32>
      %17 = vector.shape_cast %16 : vector<32xf32> to vector<32x1xf32>
      %18 = vector.broadcast %17 : vector<32x1xf32> to vector<32x128xf32>
      %19 = arith.subf %15, %18 : vector<32x128xf32>
      %20 = math.exp %19 : vector<32x128xf32>
      %cst_15 = arith.constant dense<0.000000e+00> : vector<32xf32>
      %21 = vector.multi_reduction <add>, %20, %cst_15 [1] : vector<32x128xf32> to vector<32xf32>
      %22 = vector.shape_cast %21 : vector<32xf32> to vector<32x1xf32>
      %23 = math.log %22 : vector<32x1xf32>
      %24 = vector.broadcast %23 : vector<32x1xf32> to vector<32x128xf32>
      %25 = arith.subf %19, %24 : vector<32x128xf32>
      %c0_16 = arith.constant 0 : index
      %c0_17 = arith.constant 0 : index
      %26 = vector.load %arg6[%c0_16, %c0_17] : memref<32x128xf32, #tpu.memory_space<vmem>>, vector<32x128xf32>
      tpu.vector_store %arg6[%c0_16, %c0_17], %25 {strides = array<i32>} : memref<32x128xf32, #tpu.memory_space<vmem>>, vector<32x128xf32>,
    } else {
    }
    return
  }
  func.func @transform_0(%arg0: i32, %arg1: i32, %arg2: i32) -> (i32, i32) {
    %c0_i32 = arith.constant 0 : i32
    return %arg0, %arg2 : i32, i32
  }
  func.func @transform_1(%arg0: i32, %arg1: i32, %arg2: i32) -> (i32, i32) {
    %c0_i32 = arith.constant 0 : i32
    return %arg2, %arg1 : i32, i32
  }
  func.func @transform_2(%arg0: i32, %arg1: i32, %arg2: i32) -> (i32, i32) {
    %c0_i32 = arith.constant 0 : i32
    %c0_i32_0 = arith.constant 0 : i32
    return %c0_i32, %arg1 : i32, i32
  }
  func.func @transform_3(%arg0: i32, %arg1: i32, %arg2: i32) -> (i32, i32) {
    %c0_i32 = arith.constant 0 : i32
    return %arg0, %arg1 : i32, i32
  }
}

</mosaic_0001>

<llo_original>
// kernel: supertagger_forward.39
$region0: #{supertagger_forward.39}
  #allocation0 [shape = 'u32[]', space=smem, size = 0x4, offset = 0x4, fixed_abs, tag = 'smem constant byte address 0x4 - core index']
  #allocation1 [shape = 'u32[144,128]{1,0:T(1,128)}', space=vmem, size = 0x12000, scoped, tag = 'internal scratch']
  #allocation2 [shape = 'f32[32,128]{1,0:T(8,128)}', space=vmem, size = 0x4000, scoped, tag = 'scratch operand']
  %s0 = inlined_call_operand.vmem [shape: bf16[32,128], index: 0, kind: input, shape index: {}]
  %s1 = inlined_call_operand.vmem [shape: bf16[128,384], index: 1, kind: input, shape index: {}]
  %s2 = inlined_call_operand.vmem [shape: f32[1,384], index: 2, kind: input, shape index: {}]
  %s3 = inlined_call_operand.vmem [shape: bf16[32,384], index: 3, kind: output, shape index: {}]
  %s4 = sld [smem:[#allocation0]]
  $region131: #{supertagger_forward.39} parent=0
    _
  %s6 = ssub.s32 1, %s4
  %s7 = scalar_select 0, %s6, %s4
  $region1: #{supertagger_forward.39} parent=0
    #allocation3 [shape = 'u8[65536]{0}', space=vmem, size = 0x10000, scoped, tag = 'input window, operand 1']
    #allocation4 [shape = 'u8[16384]{0}', space=vmem, size = 0x4000, scoped, tag = 'output window, operand 0']
    loop: start=0, step=1, limit=5
    $region2: #{supertagger_forward.39} parent=1 // loop_pre_header
      _
    $region3: #{supertagger_forward.39} parent=1 // loop_header
      %s9 = sphi 0, %s13
      %p10 = scmp.ge.s32.totalorder %s9, 5
      %s16 = sphi 0, %s35
      %s17 = sphi 0, %s31
      %s18 = sphi 0, %s27
      %s19 = sphi 0, %s16
      %s20 = sphi 0, %s17
      %s21 = sphi 0, %s18
      %s22 = sphi 0, %s19
      %s23 = sphi 0, %s20
      %s24 = sphi 0, %s21
      %s40 = sphi 0, %s42
      %s43 = sphi 0, %s40
      %s44 = sphi 0, %s43
      %s60 = sphi 0, %s44
      %s68 = sphi 0, %s70
      %s71 = sphi 0, %s68
      %s72 = sphi 0, %s71
      %s88 = sphi 0, %s72
      %s94 = sphi 0, %s96
      %s97 = sphi 0, %s94
      %s98 = sphi 0, %s97
      %s114 = sphi 0, %s98
      %s122 = sphi 0, %s124
      %s125 = sphi 0, %s122
      %s126 = sphi 0, %s125
      %s142 = sphi 0, %s126
    $region4: #{supertagger_forward.39} parent=1 // loop_header_branch
      %12 = sbr.rel (%p10) target = $region8
    $region5: #{supertagger_forward.39} parent=1 // loop_body
      %s14 = ssub.s32 %s9, 1
      %s15 = ssub.s32 %s9, 2
      %s25 = sadd.s32 1, %s18
      %p26 = scmp.ge.s32.totalorder %s25, 1
      %s27 = scalar_select %p26, 0, %s25
      %s28 = sadd.s32 1, %s17
      %s29 = scalar_select %p26, %s28, %s17
      %p30 = scmp.ge.s32.totalorder %s29, 3
      %s31 = scalar_select %p30, 0, %s29
      %s32 = sadd.s32 1, %s16
      %s33 = scalar_select %p30, %s32, %s16
      %p34 = scmp.ge.s32.totalorder %s33, 1
      %s35 = scalar_select %p34, 0, %s33
      %s36 = ssub.s32 %s16, %s35
      %s37 = ssub.s32 %s18, %s27
      %s38 = sor.u32 %s36, %s37
      %p39 = scmp.eq.s32.totalorder %s38, 0
      %s41 = sadd.s32 %s40, 1
      %s42 = scalar_select %p39, %s40, %s41
      %p45 = pneg %p39
      %p46 = scmp.eq.s32.totalorder %s9, 2
      %p47 = por %p45, %p46
      %p48 = scmp.ne.s32.totalorder %s40, %s43
      %p49 = scmp.eq.s32.totalorder %s9, 0
      %p50 = por %p48, %p49
      %p51 = scmp.ne.s32.totalorder %s40, %s43
      %p52 = scmp.eq.s32.totalorder %s14, 2
      %p53 = por %p51, %p52
      %p54 = scmp.ne.s32.totalorder %s43, %s44
      %p55 = scmp.eq.s32.totalorder %s14, 0
      %p56 = por %p54, %p55
      %p57 = scmp.ne.s32.totalorder %s43, %s44
      %p58 = scmp.eq.s32.totalorder %s15, 2
      %p59 = por %p57, %p58
      %p61 = scmp.ne.s32.totalorder %s44, %s60
      %p62 = scmp.eq.s32.totalorder %s15, 0
      %p63 = por %p61, %p62
      %s64 = ssub.s32 %s18, %s27
      %s65 = ssub.s32 %s17, %s31
      %s66 = sor.u32 %s64, %s65
      %p67 = scmp.eq.s32.totalorder %s66, 0
      %s69 = sadd.s32 %s68, 1
      %s70 = scalar_select %p67, %s68, %s69
      %p73 = pneg %p67
      %p74 = scmp.eq.s32.totalorder %s9, 2
      %p75 = por %p73, %p74
      %p76 = scmp.ne.s32.totalorder %s68, %s71
      %p77 = scmp.eq.s32.totalorder %s9, 0
      %p78 = por %p76, %p77
      %p79 = scmp.ne.s32.totalorder %s68, %s71
      %p80 = scmp.eq.s32.totalorder %s14, 2
      %p81 = por %p79, %p80
      %p82 = scmp.ne.s32.totalorder %s71, %s72
      %p83 = scmp.eq.s32.totalorder %s14, 0
      %p84 = por %p82, %p83
      %p85 = scmp.ne.s32.totalorder %s71, %s72
      %p86 = scmp.eq.s32.totalorder %s15, 2
      %p87 = por %p85, %p86
      %p89 = scmp.ne.s32.totalorder %s72, %s88
      %p90 = scmp.eq.s32.totalorder %s15, 0
      %p91 = por %p89, %p90
      %s92 = ssub.s32 %s17, %s31
      %p93 = scmp.eq.s32.totalorder %s92, 0
      %s95 = sadd.s32 %s94, 1
      %s96 = scalar_select %p93, %s94, %s95
      %p99 = pneg %p93
      %p100 = scmp.eq.s32.totalorder %s9, 2
      %p101 = por %p99, %p100
      %p102 = scmp.ne.s32.totalorder %s94, %s97
      %p103 = scmp.eq.s32.totalorder %s9, 0
      %p104 = por %p102, %p103
      %p105 = scmp.ne.s32.totalorder %s94, %s97
      %p106 = scmp.eq.s32.totalorder %s14, 2
      %p107 = por %p105, %p106
      %p108 = scmp.ne.s32.totalorder %s97, %s98
      %p109 = scmp.eq.s32.totalorder %s14, 0
      %p110 = por %p108, %p109
      %p111 = scmp.ne.s32.totalorder %s97, %s98
      %p112 = scmp.eq.s32.totalorder %s15, 2
      %p113 = por %p111, %p112
      %p115 = scmp.ne.s32.totalorder %s98, %s114
      %p116 = scmp.eq.s32.totalorder %s15, 0
      %p117 = por %p115, %p116
      %s118 = ssub.s32 %s16, %s35
      %s119 = ssub.s32 %s17, %s31
      %s120 = sor.u32 %s118, %s119
      %p121 = scmp.eq.s32.totalorder %s120, 0
      %s123 = sadd.s32 %s122, 1
      %s124 = scalar_select %p121, %s122, %s123
      %p127 = pneg %p121
      %p128 = scmp.eq.s32.totalorder %s9, 2
      %p129 = por %p127, %p128
      %p130 = scmp.ne.s32.totalorder %s122, %s125
      %p131 = scmp.eq.s32.totalorder %s9, 0
      %p132 = por %p130, %p131
      %p133 = scmp.ne.s32.totalorder %s122, %s125
      %p134 = scmp.eq.s32.totalorder %s14, 2
      %p135 = por %p133, %p134
      %p136 = scmp.ne.s32.totalorder %s125, %s126
      %p137 = scmp.eq.s32.totalorder %s14, 0
      %p138 = por %p136, %p137
      %p139 = scmp.ne.s32.totalorder %s125, %s126
      %p140 = scmp.eq.s32.totalorder %s15, 2
      %p141 = por %p139, %p140
      %p143 = scmp.ne.s32.totalorder %s126, %s142
      %p144 = scmp.eq.s32.totalorder %s15, 0
      %p145 = por %p143, %p144
      %p146 = scmp.le.s32.totalorder 1, %s9
      %p147 = scmp.lt.s32.totalorder %s9, 4
      %p148 = pnand %p146, %p147
      %p149 = pneg %p148
      // Predicated region
      $region9: #{supertagger_forward.39} parent=5 // pred_check
        _
      $region10: #{supertagger_forward.39} parent=5 // pred_check_branch
        %151 = sbr.rel (%p148) target = $region12
      $region11: #{supertagger_forward.39} parent=5 // pred_region
        %s152 = ssub.s32 %s9, 1
        // Predicated region
        $region13: #{supertagger_forward.39} parent=11 // pred_check
          %p153 = pneg %p56
        $region14: #{supertagger_forward.39} parent=11 // pred_check_branch
          %155 = sbr.rel (%p153) target = $region16
        $region15: #{supertagger_forward.39} parent=11 // pred_region
          %s156 = smul.u32 4, %s19
          %p157 = scmp.lt.s32.totalorder %s156, 3
          %s158 = scalar_select %p157, %s156, 3
          %p159 = scmp.lt.s32.totalorder %s21, 0
          %s160 = scalar_select %p159, %s21, 0
          %s161 = sadd.s32 %s160, %s158
          %s162 = smul.addr %s161, 4
          %s163 = scalar_lea.vmem %s0, %s162
          %s164 = smul.u32 4, %s19
        $region16: #{supertagger_forward.39} parent=11 // pred_fallthru
          _
      $region12: #{supertagger_forward.39} parent=5 // pred_fallthru
        _
      %p165 = scmp.lt.s32.totalorder %s9, 3
      // Predicated region
      $region17: #{supertagger_forward.39} parent=5 // pred_check
        %p166 = pneg %p165
      $region18: #{supertagger_forward.39} parent=5 // pred_check_branch
        %168 = sbr.rel (%p166) target = $region20
      $region19: #{supertagger_forward.39} parent=5 // pred_region
        // Predicated region
        $region21: #{supertagger_forward.39} parent=19 // pred_check
          %p169 = pneg %p78
        $region22: #{supertagger_forward.39} parent=19 // pred_check_branch
          %171 = sbr.rel (%p169) target = $region24
        $region23: #{supertagger_forward.39} parent=19 // pred_region
          %s172 = sand.u32 %s68, 1
          %s173 = sand.u32 %s68, 1
          %s174 = smul.addr %s173, 64
          %s175 = scalar_lea.vmem [#allocation3], %s174
          %s176 = smul.u32 16, %s18
          %s177 = smul.addr %s176, 3
          %s178 = sadd.s32 %s17, %s177
          %s179 = smul.addr %s178, 4
          %s180 = scalar_lea.vmem %s1, %s179
          // Predicated region
          $region25: #{supertagger_forward.39} parent=23 // pred_check
            _
          $region26: #{supertagger_forward.39} parent=23 // pred_check_branch
            %182 = sbr.rel (0) target = $region28
          $region27: #{supertagger_forward.39} parent=23 // pred_region
            // Predicated region
            $region29: #{supertagger_forward.39} parent=27 // pred_check
              _
            $region30: #{supertagger_forward.39} parent=27 // pred_check_branch
              %184 = sbr.rel target = $region32
            $region31: #{supertagger_forward.39} parent=27 // pred_region
              // Predicated region
              $region44: #{supertagger_forward.39} parent=31 // pred_check
                _
              $region45: #{supertagger_forward.39} parent=31 // pred_check_branch
                %230 = sbr.rel (0) target = $region47
              $region46: #{supertagger_forward.39} parent=31 // pred_region
                loop: start=0, step=1, limit=1
                $region48: #{supertagger_forward.39} parent=46 // loop_pre_header
                  _
                $region49: #{supertagger_forward.39} parent=46 // loop_header
                  %s232 = sphi 0, %s236
                  %p233 = scmp.ge.s32.totalorder %s232, 1
                  %s237 = sphi %s180, %s180
                  %s238 = sphi %s175, %s175
                $region50: #{supertagger_forward.39} parent=46 // loop_header_branch
                  %235 = sbr.rel (%p233) target = $region54
                $region51: #{supertagger_forward.39} parent=46 // loop_body
                  _
                $region52: #{supertagger_forward.39} parent=46 // loop_footer
                  %s236 = sadd.s32 1, %s232
                $region53: #{supertagger_forward.39} parent=46 // loop_footer_branch
                  %231 = sbr.rel target = $region49
                $region54: #{supertagger_forward.39} parent=46 // loop_exit
                  _
                %s240 = ssub.s32 16, 1
                loop: start=0, step=1, limit=1
                $region55: #{supertagger_forward.39} parent=46 // loop_pre_header
                  _
                $region56: #{supertagger_forward.39} parent=46 // loop_header
                  %s242 = sphi 0, %s246
                  %p243 = scmp.ge.s32.totalorder %s242, 1
                  %s247 = sphi %s180, %s180
                  %s248 = sphi %s175, %s175
                $region57: #{supertagger_forward.39} parent=46 // loop_header_branch
                  %245 = sbr.rel (%p243) target = $region61
                $region58: #{supertagger_forward.39} parent=46 // loop_body
                  %v249 = vld [vmem:[%s247] sm:%s240]
                  %250 = vst [vmem:[%s248] sm:%s240] %v249
                  %v251 = vld [vmem:[%s247 + $0xc] sm:%s240]
                  %252 = vst [vmem:[%s248 + $0x4] sm:%s240] %v251
                  %v253 = vld [vmem:[%s247 + $0x18] sm:%s240]
                  %254 = vst [vmem:[%s248 + $0x8] sm:%s240] %v253
                  %v255 = vld [vmem:[%s247 + $0x24] sm:%s240]
                  %256 = vst [vmem:[%s248 + $0xc] sm:%s240] %v255
                  %v257 = vld [vmem:[%s247 + $0x30] sm:%s240]
                  %258 = vst [vmem:[%s248 + $0x10] sm:%s240] %v257
                  %v259 = vld [vmem:[%s247 + $0x3c] sm:%s240]
                  %260 = vst [vmem:[%s248 + $0x14] sm:%s240] %v259
                  %v261 = vld [vmem:[%s247 + $0x48] sm:%s240]
                  %262 = vst [vmem:[%s248 + $0x18] sm:%s240] %v261
                  %v263 = vld [vmem:[%s247 + $0x54] sm:%s240]
                  %264 = vst [vmem:[%s248 + $0x1c] sm:%s240] %v263
                  %v265 = vld [vmem:[%s247 + $0x60] sm:%s240]
                  %266 = vst [vmem:[%s248 + $0x20] sm:%s240] %v265
                  %v267 = vld [vmem:[%s247 + $0x6c] sm:%s240]
                  %268 = vst [vmem:[%s248 + $0x24] sm:%s240] %v267
                  %v269 = vld [vmem:[%s247 + $0x78] sm:%s240]
                  %270 = vst [vmem:[%s248 + $0x28] sm:%s240] %v269
                  %v271 = vld [vmem:[%s247 + $0x84] sm:%s240]
                  %272 = vst [vmem:[%s248 + $0x2c] sm:%s240] %v271
                  %v273 = vld [vmem:[%s247 + $0x90] sm:%s240]
                  %274 = vst [vmem:[%s248 + $0x30] sm:%s240] %v273
                  %v275 = vld [vmem:[%s247 + $0x9c] sm:%s240]
                  %276 = vst [vmem:[%s248 + $0x34] sm:%s240] %v275
                  %v277 = vld [vmem:[%s247 + $0xa8] sm:%s240]
                  %278 = vst [vmem:[%s248 + $0x38] sm:%s240] %v277
                  %v279 = vld [vmem:[%s247 + $0xb4] sm:%s240]
                  %280 = vst [vmem:[%s248 + $0x3c] sm:%s240] %v279
                $region59: #{supertagger_forward.39} parent=46 // loop_footer
                  %s246 = sadd.s32 1, %s242
                $region60: #{supertagger_forward.39} parent=46 // loop_footer_branch
                  %241 = sbr.rel target = $region56
                $region61: #{supertagger_forward.39} parent=46 // loop_exit
                  _
              $region47: #{supertagger_forward.39} parent=31 // pred_fallthru
                _
            $region32: #{supertagger_forward.39} parent=27 // pred_fallthru
              _
            // Predicated region
            $region33: #{supertagger_forward.39} parent=27 // pred_check
              _
            $region34: #{supertagger_forward.39} parent=27 // pred_check_branch
              %186 = sbr.rel (0) target = $region36
            $region35: #{supertagger_forward.39} parent=27 // pred_region
              %s188 = ssub.s32 16, 1
              loop: start=0, step=1, limit=1
              $region37: #{supertagger_forward.39} parent=35 // loop_pre_header
                _
              $region38: #{supertagger_forward.39} parent=35 // loop_header
                %s190 = sphi 0, %s194
                %p191 = scmp.ge.s32.totalorder %s190, 1
                %s195 = sphi %s180, %s180
                %s196 = sphi %s175, %s175
              $region39: #{supertagger_forward.39} parent=35 // loop_header_branch
                %193 = sbr.rel (%p191) target = $region43
              $region40: #{supertagger_forward.39} parent=35 // loop_body
                %v197 = vld [vmem:[%s195] sm:%s188]
                %198 = vst [vmem:[%s196] sm:%s188] %v197
                %v199 = vld [vmem:[%s195 + $0xc] sm:%s188]
                %200 = vst [vmem:[%s196 + $0x4] sm:%s188] %v199
                %v201 = vld [vmem:[%s195 + $0x18] sm:%s188]
                %202 = vst [vmem:[%s196 + $0x8] sm:%s188] %v201
                %v203 = vld [vmem:[%s195 + $0x24] sm:%s188]
                %204 = vst [vmem:[%s196 + $0xc] sm:%s188] %v203
                %v205 = vld [vmem:[%s195 + $0x30] sm:%s188]
                %206 = vst [vmem:[%s196 + $0x10] sm:%s188] %v205
                %v207 = vld [vmem:[%s195 + $0x3c] sm:%s188]
                %208 = vst [vmem:[%s196 + $0x14] sm:%s188] %v207
                %v209 = vld [vmem:[%s195 + $0x48] sm:%s188]
                %210 = vst [vmem:[%s196 + $0x18] sm:%s188] %v209
                %v211 = vld [vmem:[%s195 + $0x54] sm:%s188]
                %212 = vst [vmem:[%s196 + $0x1c] sm:%s188] %v211
                %v213 = vld [vmem:[%s195 + $0x60] sm:%s188]
                %214 = vst [vmem:[%s196 + $0x20] sm:%s188] %v213
                %v215 = vld [vmem:[%s195 + $0x6c] sm:%s188]
                %216 = vst [vmem:[%s196 + $0x24] sm:%s188] %v215
                %v217 = vld [vmem:[%s195 + $0x78] sm:%s188]
                %218 = vst [vmem:[%s196 + $0x28] sm:%s188] %v217
                %v219 = vld [vmem:[%s195 + $0x84] sm:%s188]
                %220 = vst [vmem:[%s196 + $0x2c] sm:%s188] %v219
                %v221 = vld [vmem:[%s195 + $0x90] sm:%s188]
                %222 = vst [vmem:[%s196 + $0x30] sm:%s188] %v221
                %v223 = vld [vmem:[%s195 + $0x9c] sm:%s188]
                %224 = vst [vmem:[%s196 + $0x34] sm:%s188] %v223
                %v225 = vld [vmem:[%s195 + $0xa8] sm:%s188]
                %226 = vst [vmem:[%s196 + $0x38] sm:%s188] %v225
                %v227 = vld [vmem:[%s195 + $0xb4] sm:%s188]
                %228 = vst [vmem:[%s196 + $0x3c] sm:%s188] %v227
              $region41: #{supertagger_forward.39} parent=35 // loop_footer
                %s194 = sadd.s32 1, %s190
              $region42: #{supertagger_forward.39} parent=35 // loop_footer_branch
                %189 = sbr.rel target = $region38
              $region43: #{supertagger_forward.39} parent=35 // loop_exit
                _
            $region36: #{supertagger_forward.39} parent=27 // pred_fallthru
              _
          $region28: #{supertagger_forward.39} parent=23 // pred_fallthru
            _
          %281 = vnop
        $region24: #{supertagger_forward.39} parent=19 // pred_fallthru
          _
        // Predicated region
        $region62: #{supertagger_forward.39} parent=19 // pred_check
          %p282 = pneg %p104
        $region63: #{supertagger_forward.39} parent=19 // pred_check_branch
          %284 = sbr.rel (%p282) target = $region65
        $region64: #{supertagger_forward.39} parent=19 // pred_region
          %p285 = scmp.lt.s32.totalorder %s17, 2
          %s286 = scalar_select %p285, %s17, 2
          %s287 = scalar_lea.vmem %s2, %s286
        $region65: #{supertagger_forward.39} parent=19 // pred_fallthru
          _
      $region20: #{supertagger_forward.39} parent=5 // pred_fallthru
        _
      %p288 = scmp.le.s32.totalorder 1, %s9
      %p289 = scmp.lt.s32.totalorder %s9, 4
      %p290 = pnand %p288, %p289
      %p291 = pneg %p290
      // Predicated region
      $region66: #{supertagger_forward.39} parent=5 // pred_check
        _
      $region67: #{supertagger_forward.39} parent=5 // pred_check_branch
        %293 = sbr.rel (%p290) target = $region69
      $region68: #{supertagger_forward.39} parent=5 // pred_region
        %s294 = ssub.s32 %s9, 1
        %s295 = sand.u32 %s71, 1
        %s296 = sand.u32 %s71, 1
        %s297 = smul.addr %s296, 64
        %s298 = scalar_lea.vmem [#allocation3], %s297
        // Predicated region
        $region70: #{supertagger_forward.39} parent=68 // pred_check
          %p299 = pneg %p84
        $region71: #{supertagger_forward.39} parent=68 // pred_check_branch
          %301 = sbr.rel (%p299) target = $region73
        $region72: #{supertagger_forward.39} parent=68 // pred_region
          _
        $region73: #{supertagger_forward.39} parent=68 // pred_fallthru
          _
        %s302 = smul.u32 4, %s19
        %p303 = scmp.lt.s32.totalorder %s302, 3
        %s304 = scalar_select %p303, %s302, 3
        %p305 = scmp.lt.s32.totalorder %s21, 0
        %s306 = scalar_select %p305, %s21, 0
        %s307 = sadd.s32 %s306, %s304
        %s308 = smul.addr %s307, 4
        %s309 = scalar_lea.vmem %s0, %s308
        %p310 = pneg %p56
        %p311 = pneg %p53
        %s312 = sand.u32 %s71, 1
        %s313 = sand.u32 %s71, 1
        %s314 = smul.addr %s313, 64
        %s315 = scalar_lea.vmem [#allocation3], %s314
        %p316 = pneg %p84
        %p317 = pneg %p81
        %p318 = scmp.lt.s32.totalorder %s20, 2
        %s319 = scalar_select %p318, %s20, 2
        %s320 = scalar_lea.vmem %s2, %s319
        %p321 = pneg %p110
        %p322 = pneg %p107
        %p323 = pneg %p138
        %p324 = pneg %p135
        %s325 = sand.u32 %s125, 1
        %s326 = sand.u32 %s125, 1
        %s327 = smul.addr %s326, 16
        %s328 = scalar_lea.vmem [#allocation4], %s327
        %s329 = smul.u32 4, %s19
        %p330 = scmp.lt.s32.totalorder %s329, 3
        %s331 = scalar_select %p330, %s329, 3
        %p332 = scmp.lt.s32.totalorder %s21, 0
        %s333 = scalar_select %p332, %s21, 0
        %s334 = sadd.s32 %s333, %s331
        %s335 = smul.addr %s334, 4
        %s336 = scalar_lea.vmem %s0, %s335
        %s337 = smul.u32 4, %s19
        %s338 = smul.u32 16, %s21
        %p339 = scmp.lt.s32.totalorder %s20, 2
        %s340 = scalar_select %p339, %s20, 2
        %s341 = scalar_lea.vmem %s2, %s340
        %s342 = smul.u32 4, %s19
        %p344 = scmp.eq.s32.totalorder %s21, 0
        // Predicated region
        $region74: #{supertagger_forward.39} parent=68 // pred_check
          %p345 = pneg %p344
        $region75: #{supertagger_forward.39} parent=68 // pred_check_branch
          %347 = sbr.rel (%p345) target = $region77
        $region76: #{supertagger_forward.39} parent=68 // pred_region
          %348 = vst [vmem:[#allocation2] sm:$0xff] 0.0
          %349 = vst [vmem:[#allocation2 + $0x8] sm:$0xff] 0.0
          %350 = vst [vmem:[#allocation2 + $0x10] sm:$0xff] 0.0
          %351 = vst [vmem:[#allocation2 + $0x18] sm:$0xff] 0.0
        $region77: #{supertagger_forward.39} parent=68 // pred_fallthru
          _
        %v352 = vld [vmem:[#allocation2] sm:$0xff]
        %v353 = vld [vmem:[#allocation2 + $0x8] sm:$0xff]
        %v354 = vld [vmem:[#allocation2 + $0x10] sm:$0xff]
        %v355 = vld [vmem:[#allocation2 + $0x18] sm:$0xff]
        %v356 = vld [vmem:[%s336] sm:$0xf]
        %v357 = vld [vmem:[%s336 + $0x4] sm:$0xf]
        %v358 = vld [vmem:[%s336 + $0x8] sm:$0xf]
        %v359 = vld [vmem:[%s336 + $0xc] sm:$0xf]
        %v360 = vld [vmem:[%s298] sm:$0xf]
        %v361 = vld [vmem:[%s298 + $0x4] sm:$0xf]
        %v362 = vld [vmem:[%s298 + $0x8] sm:$0xf]
        %v363 = vld [vmem:[%s298 + $0xc] sm:$0xf]
        %v364 = vld [vmem:[%s298 + $0x10] sm:$0xf]
        %v365 = vld [vmem:[%s298 + $0x14] sm:$0xf]
        %v366 = vld [vmem:[%s298 + $0x18] sm:$0xf]
        %v367 = vld [vmem:[%s298 + $0x1c] sm:$0xf]
        %v368 = vld [vmem:[%s298 + $0x20] sm:$0xf]
        %v369 = vld [vmem:[%s298 + $0x24] sm:$0xf]
        %v370 = vld [vmem:[%s298 + $0x28] sm:$0xf]
        %v371 = vld [vmem:[%s298 + $0x2c] sm:$0xf]
        %v372 = vld [vmem:[%s298 + $0x30] sm:$0xf]
        %v373 = vld [vmem:[%s298 + $0x34] sm:$0xf]
        %v374 = vld [vmem:[%s298 + $0x38] sm:$0xf]
        %v375 = vld [vmem:[%s298 + $0x3c] sm:$0xf]
        %v380 = vunpack.c.l.b16 %v356
        %v381 = vunpack.c.l.b16 %v357
        %v382 = vunpack.c.l.b16 %v358
        %v383 = vunpack.c.l.b16 %v359
        %v384 = vpack.c.b16 %v381, %v380
        %v385 = vpack.c.b16 %v383, %v382
        %v404 = vunpack.c.l.b16 %v360
        %v405 = vunpack.c.l.b16 %v361
        %v406 = vunpack.c.l.b16 %v362
        %v407 = vunpack.c.l.b16 %v363
        %v408 = vunpack.c.l.b16 %v364
        %v409 = vunpack.c.l.b16 %v365
        %v410 = vunpack.c.l.b16 %v366
        %v411 = vunpack.c.l.b16 %v367
        %v412 = vunpack.c.l.b16 %v368
        %v413 = vunpack.c.l.b16 %v369
        %v414 = vunpack.c.l.b16 %v370
        %v415 = vunpack.c.l.b16 %v371
        %v416 = vunpack.c.l.b16 %v372
        %v417 = vunpack.c.l.b16 %v373
        %v418 = vunpack.c.l.b16 %v374
        %v419 = vunpack.c.l.b16 %v375
        %v420 = vpack.c.b16 %v405, %v404
        %v421 = vpack.c.b16 %v407, %v406
        %v422 = vpack.c.b16 %v409, %v408
        %v423 = vpack.c.b16 %v411, %v410
        %v424 = vpack.c.b16 %v413, %v412
        %v425 = vpack.c.b16 %v415, %v414
        %v426 = vpack.c.b16 %v417, %v416
        %v427 = vpack.c.b16 %v419, %v418
        %436 = vmatprep.subr.bf16.mxu0 0
        %437 = vmatpush1.bf16.msra.mxu0 %v427
        %438 = vmatprep.subr.bf16.mxu0 0
        %439 = vmatpush1.bf16.msra.mxu0 %v426
        %440 = vmatprep.subr.bf16.mxu0 0
        %441 = vmatpush1.bf16.msra.mxu0 %v425
        %442 = vmatprep.subr.bf16.mxu0 0
        %443 = vmatpush1.bf16.msra.mxu0 %v424
        %444 = vmatprep.subr.bf16.mxu0 0
        %445 = vmatpush1.bf16.msra.mxu0 %v423
        %446 = vmatprep.subr.bf16.mxu0 0
        %447 = vmatpush1.bf16.msra.mxu0 %v422
        %448 = vmatprep.subr.bf16.mxu0 0
        %449 = vmatpush1.bf16.msra.mxu0 %v421
        %450 = vmatprep.subr.bf16.mxu0 0
        %451 = vmatpush1.bf16.msra.mxu0 %v420
        %452 = vmatprep.subr.bf16.mxu0 0
        %453 = vmatpush2.bf16.msra.mxu0 0
        %454 = vmatprep.subr.bf16.mxu0 0
        %455 = vmatpush2.bf16.msra.mxu0 0
        %456 = vmatprep.subr.bf16.mxu0 0
        %457 = vmatpush2.bf16.msra.mxu0 0
        %458 = vmatprep.subr.bf16.mxu0 0
        %459 = vmatpush2.bf16.msra.mxu0 0
        %460 = vmatprep.subr.bf16.mxu0 0
        %461 = vmatpush2.bf16.msra.mxu0 0
        %462 = vmatprep.subr.bf16.mxu0 0
        %463 = vmatpush2.bf16.msra.mxu0 0
        %464 = vmatprep.subr.bf16.mxu0 0
        %465 = vmatpush2.bf16.msra.mxu0 0
        %466 = vmatprep.subr.bf16.mxu0 0
        %467 = vmatpush2.bf16.msra.mxu0 0
        %468 = vmatprep.mubr.bf16.mxu0 0
        %469 = vmatmul.mubr.bf16.gmra.mxu0 %v384
        %v470 = vpop.f32.mrf.mxu0
        %v471 = vadd.f32 0.0, %v470
        %v472 = vpop.f32.mrf.mxu0
        %v473 = vpop.f32.mrf.mxu0
        %v474 = vadd.f32 0.0, %v473
        %v475 = vpop.f32.mrf.mxu0
        %476 = vmatprep.mubr.bf16.mxu0 0
        %477 = vmatmul.mubr.bf16.gmra.mxu0 %v385
        %v478 = vpop.f32.mrf.mxu0
        %v479 = vadd.f32 0.0, %v478
        %v480 = vpop.f32.mrf.mxu0
        %v481 = vpop.f32.mrf.mxu0
        %v482 = vadd.f32 0.0, %v481
        %v483 = vpop.f32.mrf.mxu0
        %484 = vdwg.mxu0
        %v485 = vadd.f32 %v352, %v471
        %v486 = vadd.f32 %v353, %v474
        %v487 = vadd.f32 %v354, %v479
        %v488 = vadd.f32 %v355, %v482
        %489 = vst [vmem:[#allocation2] sm:$0xff] %v485
        %490 = vst [vmem:[#allocation2 + $0x8] sm:$0xff] %v486
        %491 = vst [vmem:[#allocation2 + $0x10] sm:$0xff] %v487
        %492 = vst [vmem:[#allocation2 + $0x18] sm:$0xff] %v488
        // Predicated region
        $region78: #{supertagger_forward.39} parent=68 // pred_check
          %p493 = pneg %p344
        $region79: #{supertagger_forward.39} parent=68 // pred_check_branch
          %495 = sbr.rel (%p493) target = $region81
        $region80: #{supertagger_forward.39} parent=68 // pred_region
          %v496 = vld [vmem:[#allocation2] sm:$0xff]
          %v497 = vld [vmem:[#allocation2 + $0x8] sm:$0xff]
          %v498 = vld [vmem:[#allocation2 + $0x10] sm:$0xff]
          %v499 = vld [vmem:[#allocation2 + $0x18] sm:$0xff]
          %v500 = vld [vmem:[%s341] sm:$0x1]
          %v502 = vlaneseq
          %v503 = vshrl.u32 %v502, 7
          %v504 = vsub.s32 0, %v503
          %v505 = vrot.slane %v500, %v504
          %v507 = vadd.f32 %v496, %v505
          %v508 = vadd.f32 %v497, %v505
          %v509 = vadd.f32 %v498, %v505
          %v510 = vadd.f32 %v499, %v505
          %v511 = vpack.c.bf16 %v508, %v507
          %v512 = vpack.c.bf16 %v510, %v509
          %v515 = vunpack.c.l.b16 %v511
          %v516 = vunpack.c.h.b16 %v511
          %v517 = vunpack.c.l.b16 %v512
          %v518 = vunpack.c.h.b16 %v512
          %v519 = vpack.c.b16 %v515, %v515
          %v520 = vpack.c.b16 %v516, %v516
          %v521 = vpack.c.b16 %v517, %v517
          %v522 = vpack.c.b16 %v518, %v518
          %527 = vst [vmem:[%s328] sm:$0xf] %v519
          %528 = vst [vmem:[%s328 + $0x4] sm:$0xf] %v520
          %529 = vst [vmem:[%s328 + $0x8] sm:$0xf] %v521
          %530 = vst [vmem:[%s328 + $0xc] sm:$0xf] %v522
        $region81: #{supertagger_forward.39} parent=68 // pred_fallthru
          _
        %s531 = sand.u32 %s125, 1
        %s532 = sand.u32 %s125, 1
        %s533 = smul.addr %s532, 16
        %s534 = scalar_lea.vmem [#allocation4], %s533
        // Predicated region
        $region82: #{supertagger_forward.39} parent=68 // pred_check
          %p535 = pneg %p135
        $region83: #{supertagger_forward.39} parent=68 // pred_check_branch
          %537 = sbr.rel (%p535) target = $region85
        $region84: #{supertagger_forward.39} parent=68 // pred_region
          %s538 = smul.u32 4, %s19
          %s539 = smul.addr %s538, 3
          %s540 = sadd.s32 %s20, %s539
          %s541 = smul.addr %s540, 4
          %s542 = scalar_lea.vmem %s3, %s541
          // Predicated region
          $region86: #{supertagger_forward.39} parent=84 // pred_check
            _
          $region87: #{supertagger_forward.39} parent=84 // pred_check_branch
            %544 = sbr.rel (0) target = $region89
          $region88: #{supertagger_forward.39} parent=84 // pred_region
            // Predicated region
            $region90: #{supertagger_forward.39} parent=88 // pred_check
              _
            $region91: #{supertagger_forward.39} parent=88 // pred_check_branch
              %546 = sbr.rel target = $region93
            $region92: #{supertagger_forward.39} parent=88 // pred_region
              // Predicated region
              $region105: #{supertagger_forward.39} parent=92 // pred_check
                _
              $region106: #{supertagger_forward.39} parent=92 // pred_check_branch
                %568 = sbr.rel (0) target = $region108
              $region107: #{supertagger_forward.39} parent=92 // pred_region
                loop: start=0, step=1, limit=1
                $region109: #{supertagger_forward.39} parent=107 // loop_pre_header
                  _
                $region110: #{supertagger_forward.39} parent=107 // loop_header
                  %s570 = sphi 0, %s574
                  %p571 = scmp.ge.s32.totalorder %s570, 1
                  %s575 = sphi %s534, %s534
                  %s576 = sphi %s542, %s542
                $region111: #{supertagger_forward.39} parent=107 // loop_header_branch
                  %573 = sbr.rel (%p571) target = $region115
                $region112: #{supertagger_forward.39} parent=107 // loop_body
                  _
                $region113: #{supertagger_forward.39} parent=107 // loop_footer
                  %s574 = sadd.s32 1, %s570
                $region114: #{supertagger_forward.39} parent=107 // loop_footer_branch
                  %569 = sbr.rel target = $region110
                $region115: #{supertagger_forward.39} parent=107 // loop_exit
                  _
                %s578 = ssub.s32 16, 1
                loop: start=0, step=1, limit=1
                $region116: #{supertagger_forward.39} parent=107 // loop_pre_header
                  _
                $region117: #{supertagger_forward.39} parent=107 // loop_header
                  %s580 = sphi 0, %s584
                  %p581 = scmp.ge.s32.totalorder %s580, 1
                  %s585 = sphi %s534, %s534
                  %s586 = sphi %s542, %s542
                $region118: #{supertagger_forward.39} parent=107 // loop_header_branch
                  %583 = sbr.rel (%p581) target = $region122
                $region119: #{supertagger_forward.39} parent=107 // loop_body
                  %v587 = vld [vmem:[%s585] sm:%s578]
                  %588 = vst [vmem:[%s586] sm:%s578] %v587
                  %v589 = vld [vmem:[%s585 + $0x4] sm:%s578]
                  %590 = vst [vmem:[%s586 + $0xc] sm:%s578] %v589
                  %v591 = vld [vmem:[%s585 + $0x8] sm:%s578]
                  %592 = vst [vmem:[%s586 + $0x18] sm:%s578] %v591
                  %v593 = vld [vmem:[%s585 + $0xc] sm:%s578]
                  %594 = vst [vmem:[%s586 + $0x24] sm:%s578] %v593
                $region120: #{supertagger_forward.39} parent=107 // loop_footer
                  %s584 = sadd.s32 1, %s580
                $region121: #{supertagger_forward.39} parent=107 // loop_footer_branch
                  %579 = sbr.rel target = $region117
                $region122: #{supertagger_forward.39} parent=107 // loop_exit
                  _
              $region108: #{supertagger_forward.39} parent=92 // pred_fallthru
                _
            $region93: #{supertagger_forward.39} parent=88 // pred_fallthru
              _
            // Predicated region
            $region94: #{supertagger_forward.39} parent=88 // pred_check
              _
            $region95: #{supertagger_forward.39} parent=88 // pred_check_branch
              %548 = sbr.rel (0) target = $region97
            $region96: #{supertagger_forward.39} parent=88 // pred_region
              %s550 = ssub.s32 16, 1
              loop: start=0, step=1, limit=1
              $region98: #{supertagger_forward.39} parent=96 // loop_pre_header
                _
              $region99: #{supertagger_forward.39} parent=96 // loop_header
                %s552 = sphi 0, %s556
                %p553 = scmp.ge.s32.totalorder %s552, 1
                %s557 = sphi %s534, %s534
                %s558 = sphi %s542, %s542
              $region100: #{supertagger_forward.39} parent=96 // loop_header_branch
                %555 = sbr.rel (%p553) target = $region104
              $region101: #{supertagger_forward.39} parent=96 // loop_body
                %v559 = vld [vmem:[%s557] sm:%s550]
                %560 = vst [vmem:[%s558] sm:%s550] %v559
                %v561 = vld [vmem:[%s557 + $0x4] sm:%s550]
                %562 = vst [vmem:[%s558 + $0xc] sm:%s550] %v561
                %v563 = vld [vmem:[%s557 + $0x8] sm:%s550]
                %564 = vst [vmem:[%s558 + $0x18] sm:%s550] %v563
                %v565 = vld [vmem:[%s557 + $0xc] sm:%s550]
                %566 = vst [vmem:[%s558 + $0x24] sm:%s550] %v565
              $region102: #{supertagger_forward.39} parent=96 // loop_footer
                %s556 = sadd.s32 1, %s552
              $region103: #{supertagger_forward.39} parent=96 // loop_footer_branch
                %551 = sbr.rel target = $region99
              $region104: #{supertagger_forward.39} parent=96 // loop_exit
                _
            $region97: #{supertagger_forward.39} parent=88 // pred_fallthru
              _
          $region89: #{supertagger_forward.39} parent=84 // pred_fallthru
            _
          %595 = vnop
        $region85: #{supertagger_forward.39} parent=68 // pred_fallthru
          _
      $region69: #{supertagger_forward.39} parent=5 // pred_fallthru
        _
      %p596 = scmp.le.s32.totalorder 2, %s9
      // Predicated region
      $region123: #{supertagger_forward.39} parent=5 // pred_check
        %p597 = pneg %p596
      $region124: #{supertagger_forward.39} parent=5 // pred_check_branch
        %599 = sbr.rel (%p597) target = $region126
      $region125: #{supertagger_forward.39} parent=5 // pred_region
        %s600 = ssub.s32 %s9, 2
        // Predicated region
        $region127: #{supertagger_forward.39} parent=125 // pred_check
          %p601 = pneg %p141
        $region128: #{supertagger_forward.39} parent=125 // pred_check_branch
          %603 = sbr.rel (%p601) target = $region130
        $region129: #{supertagger_forward.39} parent=125 // pred_region
          %s604 = sand.u32 %s126, 1
          %s605 = sand.u32 %s126, 1
          %s606 = smul.addr %s605, 16
          %s607 = scalar_lea.vmem [#allocation4], %s606
        $region130: #{supertagger_forward.39} parent=125 // pred_fallthru
          _
      $region126: #{supertagger_forward.39} parent=5 // pred_fallthru
        _
    $region6: #{supertagger_forward.39} parent=1 // loop_footer
      %s13 = sadd.s32 1, %s9
    $region7: #{supertagger_forward.39} parent=1 // loop_footer_branch
      %8 = sbr.rel target = $region3
    $region8: #{supertagger_forward.39} parent=1 // loop_exit
      _

// kernel: supertagger_forward.40
$region0: #{supertagger_forward.40}
  #allocation0 [shape = 'u32[]', space=smem, size = 0x4, offset = 0x4, fixed_abs, tag = 'smem constant byte address 0x4 - core index']
  #allocation1 [shape = 'u32[144,128]{1,0:T(1,128)}', space=vmem, size = 0x12000, scoped, tag = 'internal scratch']
  %s0 = inlined_call_operand.vmem [shape: bf16[2,16,384], index: 0, kind: input, shape index: {}]
  %s1 = inlined_call_operand.vmem [shape: bf16[2,16,16], index: 1, kind: input, shape index: {}]
  %s2 = inlined_call_operand.vmem [shape: bf16[2,16,128], index: 2, kind: output, shape index: {}]
  %s3 = sld [smem:[#allocation0]]
  $region41: #{supertagger_forward.40} parent=0
    _
  %s5 = ssub.s32 1, %s3
  %s6 = scalar_select 0, %s5, %s3
  loop: start=0, step=1, limit=4
  $region2: #{supertagger_forward.40} parent=0 // loop_pre_header
    _
  $region3: #{supertagger_forward.40} parent=0 // loop_header
    %s8 = sphi 0, %s12
    %p9 = scmp.ge.s32.totalorder %s8, 4
    %s18 = sphi 0, %s20
    %s21 = sphi 0, %s18
    %s22 = sphi 0, %s21
    %s38 = sphi 0, %s22
    %s44 = sphi 0, %s46
    %s47 = sphi 0, %s44
    %s48 = sphi 0, %s47
    %s64 = sphi 0, %s48
    %s70 = sphi 0, %s72
    %s73 = sphi 0, %s70
    %s74 = sphi 0, %s73
    %s90 = sphi 0, %s74
  $region4: #{supertagger_forward.40} parent=0 // loop_header_branch
    %11 = sbr.rel (%p9) target = $region8
  $region5: #{supertagger_forward.40} parent=0 // loop_body
    %s13 = ssub.s32 %s8, 1
    %s14 = ssub.s32 %s8, 2
    %s15 = sadd.s32 %s8, 1
    %s16 = ssub.s32 %s8, %s15
    %p17 = scmp.eq.s32.totalorder %s16, 0
    %s19 = sadd.s32 %s18, 1
    %s20 = scalar_select %p17, %s18, %s19
    %p23 = pneg %p17
    %p24 = scmp.eq.s32.totalorder %s8, 1
    %p25 = por %p23, %p24
    %p26 = scmp.ne.s32.totalorder %s18, %s21
    %p27 = scmp.eq.s32.totalorder %s8, 0
    %p28 = por %p26, %p27
    %p29 = scmp.ne.s32.totalorder %s18, %s21
    %p30 = scmp.eq.s32.totalorder %s13, 1
    %p31 = por %p29, %p30
    %p32 = scmp.ne.s32.totalorder %s21, %s22
    %p33 = scmp.eq.s32.totalorder %s13, 0
    %p34 = por %p32, %p33
    %p35 = scmp.ne.s32.totalorder %s21, %s22
    %p36 = scmp.eq.s32.totalorder %s14, 1
    %p37 = por %p35, %p36
    %p39 = scmp.ne.s32.totalorder %s22, %s38
    %p40 = scmp.eq.s32.totalorder %s14, 0
    %p41 = por %p39, %p40
    %s42 = ssub.s32 %s8, %s15
    %p43 = scmp.eq.s32.totalorder %s42, 0
    %s45 = sadd.s32 %s44, 1
    %s46 = scalar_select %p43, %s44, %s45
    %p49 = pneg %p43
    %p50 = scmp.eq.s32.totalorder %s8, 1
    %p51 = por %p49, %p50
    %p52 = scmp.ne.s32.totalorder %s44, %s47
    %p53 = scmp.eq.s32.totalorder %s8, 0
    %p54 = por %p52, %p53
    %p55 = scmp.ne.s32.totalorder %s44, %s47
    %p56 = scmp.eq.s32.totalorder %s13, 1
    %p57 = por %p55, %p56
    %p58 = scmp.ne.s32.totalorder %s47, %s48
    %p59 = scmp.eq.s32.totalorder %s13, 0
    %p60 = por %p58, %p59
    %p61 = scmp.ne.s32.totalorder %s47, %s48
    %p62 = scmp.eq.s32.totalorder %s14, 1
    %p63 = por %p61, %p62
    %p65 = scmp.ne.s32.totalorder %s48, %s64
    %p66 = scmp.eq.s32.totalorder %s14, 0
    %p67 = por %p65, %p66
    %s68 = ssub.s32 %s8, %s15
    %p69 = scmp.eq.s32.totalorder %s68, 0
    %s71 = sadd.s32 %s70, 1
    %s72 = scalar_select %p69, %s70, %s71
    %p75 = pneg %p69
    %p76 = scmp.eq.s32.totalorder %s8, 1
    %p77 = por %p75, %p76
    %p78 = scmp.ne.s32.totalorder %s70, %s73
    %p79 = scmp.eq.s32.totalorder %s8, 0
    %p80 = por %p78, %p79
    %p81 = scmp.ne.s32.totalorder %s70, %s73
    %p82 = scmp.eq.s32.totalorder %s13, 1
    %p83 = por %p81, %p82
    %p84 = scmp.ne.s32.totalorder %s73, %s74
    %p85 = scmp.eq.s32.totalorder %s13, 0
    %p86 = por %p84, %p85
    %p87 = scmp.ne.s32.totalorder %s73, %s74
    %p88 = scmp.eq.s32.totalorder %s14, 1
    %p89 = por %p87, %p88
    %p91 = scmp.ne.s32.totalorder %s74, %s90
    %p92 = scmp.eq.s32.totalorder %s14, 0
    %p93 = por %p91, %p92
    %p94 = scmp.le.s32.totalorder 1, %s8
    %p95 = scmp.lt.s32.totalorder %s8, 3
    %p96 = pnand %p94, %p95
    %p97 = pneg %p96
    // Predicated region
    $region9: #{supertagger_forward.40} parent=5 // pred_check
      _
    $region10: #{supertagger_forward.40} parent=5 // pred_check_branch
      %99 = sbr.rel (%p96) target = $region12
    $region11: #{supertagger_forward.40} parent=5 // pred_region
      %s100 = ssub.s32 %s8, 1
    $region12: #{supertagger_forward.40} parent=5 // pred_fallthru
      _
    %p101 = scmp.lt.s32.totalorder %s8, 2
    // Predicated region
    $region13: #{supertagger_forward.40} parent=5 // pred_check
      %p102 = pneg %p101
    $region14: #{supertagger_forward.40} parent=5 // pred_check_branch
      %104 = sbr.rel (%p102) target = $region16
    $region15: #{supertagger_forward.40} parent=5 // pred_region
      // Predicated region
      $region17: #{supertagger_forward.40} parent=15 // pred_check
        %p105 = pneg %p28
      $region18: #{supertagger_forward.40} parent=15 // pred_check_branch
        %107 = sbr.rel (%p105) target = $region20
      $region19: #{supertagger_forward.40} parent=15 // pred_region
        %p108 = scmp.lt.s32.totalorder %s8, 1
        %s109 = scalar_select %p108, %s8, 1
        %s110 = smul.addr %s109, 6
        %s111 = smul.addr %s110, 4
        %s112 = scalar_lea.vmem %s0, %s111
      $region20: #{supertagger_forward.40} parent=15 // pred_fallthru
        _
      // Predicated region
      $region21: #{supertagger_forward.40} parent=15 // pred_check
        %p113 = pneg %p54
      $region22: #{supertagger_forward.40} parent=15 // pred_check_branch
        %115 = sbr.rel (%p113) target = $region24
      $region23: #{supertagger_forward.40} parent=15 // pred_region
        %p116 = scmp.lt.s32.totalorder %s8, 1
        %s117 = scalar_select %p116, %s8, 1
        %s118 = smul.addr %s117, 2
        %s119 = smul.addr %s118, 4
        %s120 = scalar_lea.vmem %s1, %s119
      $region24: #{supertagger_forward.40} parent=15 // pred_fallthru
        _
    $region16: #{supertagger_forward.40} parent=5 // pred_fallthru
      _
    %p121 = scmp.le.s32.totalorder 1, %s8
    %p122 = scmp.lt.s32.totalorder %s8, 3
    %p123 = pnand %p121, %p122
    %p124 = pneg %p123
    // Predicated region
    $region25: #{supertagger_forward.40} parent=5 // pred_check
      _
    $region26: #{supertagger_forward.40} parent=5 // pred_check_branch
      %126 = sbr.rel (%p123) target = $region28
    $region27: #{supertagger_forward.40} parent=5 // pred_region
      %s127 = ssub.s32 %s8, 1
      %p128 = scmp.lt.s32.totalorder %s13, 1
      %s129 = scalar_select %p128, %s13, 1
      %s130 = smul.addr %s129, 6
      %s131 = smul.addr %s130, 4
      %s132 = scalar_lea.vmem %s0, %s131
      %p133 = pneg %p34
      %p134 = pneg %p31
      %p135 = scmp.lt.s32.totalorder %s13, 1
      %s136 = scalar_select %p135, %s13, 1
      %s137 = smul.addr %s136, 2
      %s138 = smul.addr %s137, 4
      %s139 = scalar_lea.vmem %s1, %s138
      %p140 = pneg %p60
      %p141 = pneg %p57
      %p142 = pneg %p86
      %p143 = pneg %p83
      %p144 = scmp.lt.s32.totalorder %s13, 1
      %s145 = scalar_select %p144, %s13, 1
      %s146 = smul.addr %s145, 2
      %s147 = smul.addr %s146, 4
      %s148 = scalar_lea.vmem %s2, %s147
      %p149 = scmp.lt.s32.totalorder %s13, 1
      %s150 = scalar_select %p149, %s13, 1
      %s151 = smul.addr %s150, 6
      %s152 = smul.addr %s151, 4
      %s153 = scalar_lea.vmem %s0, %s152
      %p154 = scmp.lt.s32.totalorder %s13, 1
      %s155 = scalar_select %p154, %s13, 1
      %s156 = smul.addr %s155, 2
      %s157 = smul.addr %s156, 4
      %s158 = scalar_lea.vmem %s1, %s157
      %p159 = scmp.lt.s32.totalorder %s13, 1
      %s160 = scalar_select %p159, %s13, 1
      %s161 = smul.addr %s160, 2
      %s162 = smul.addr %s161, 4
      %s163 = scalar_lea.vmem %s2, %s162
      %v167 = vld [vmem:[%s153] sm:$0xff]
      %v168 = vld [vmem:[%s153 + $0x8] sm:$0xf]
      %v169 = vld [vmem:[%s153 + $0xc] sm:$0xff]
      %v170 = vld [vmem:[%s153 + $0x14] sm:$0xf]
      %v171 = vld [vmem:[%s158] sm:$0xf]
      %v172 = vld [vmem:[%s158 + $0x4] sm:$0xf]
      %v175 = vunpack.c.l.b16 %v167
      %v176 = vunpack.c.l.b16 %v169
      %v177 = vpack.c.b16 %v176, %v175
      %v178 = vunpack.c.h.b16 %v167
      %v179 = vunpack.c.h.b16 %v169
      %v180 = vpack.c.b16 %v179, %v178
      %vm181 = vcmask 261120
      %v183 = vsel %vm181, %v177, 0
      %v186 = vsel %vm181, %v180, 0
      %188 = vmatprep.subr.bf16.mxu0 0
      %189 = vmatpush1.bf16.xpose.msra.mxu0 0
      %190 = vmatprep.subr.bf16.mxu0 0
      %191 = vmatpush1.bf16.xpose.msra.mxu0 0
      %192 = vmatprep.subr.bf16.mxu0 0
      %193 = vmatpush1.bf16.xpose.msra.mxu0 0
      %194 = vmatprep.subr.bf16.mxu0 0
      %195 = vmatpush1.bf16.xpose.msra.mxu0 0
      %196 = vmatprep.subr.bf16.mxu0 0
      %197 = vmatpush1.bf16.xpose.msra.mxu0 0
      %198 = vmatprep.subr.bf16.mxu0 0
      %199 = vmatpush1.bf16.xpose.msra.mxu0 0
      %200 = vmatprep.subr.bf16.mxu0 0
      %201 = vmatpush1.bf16.xpose.msra.mxu0 0
      %202 = vmatprep.subr.bf16.mxu0 0
      %203 = vmatpush1.bf16.xpose.msra.mxu0 %v186
      %204 = vmatprep.subr.bf16.mxu0 0
      %205 = vmatpush2.bf16.xpose.msra.mxu0 0
      %206 = vmatprep.subr.bf16.mxu0 0
      %207 = vmatpush2.bf16.xpose.msra.mxu0 0
      %208 = vmatprep.subr.bf16.mxu0 0
      %209 = vmatpush2.bf16.xpose.msra.mxu0 0
      %210 = vmatprep.subr.bf16.mxu0 0
      %211 = vmatpush2.bf16.xpose.msra.mxu0 0
      %212 = vmatprep.subr.bf16.mxu0 0
      %213 = vmatpush2.bf16.xpose.msra.mxu0 0
      %214 = vmatprep.subr.bf16.mxu0 0
      %215 = vmatpush2.bf16.xpose.msra.mxu0 0
      %216 = vmatprep.subr.bf16.mxu0 0
      %217 = vmatpush2.bf16.xpose.msra.mxu0 0
      %218 = vmatprep.subr.bf16.mxu0 0
      %219 = vmatpush2.bf16.xpose.msra.mxu0 0
      %220 = vmatprep.mubr.bf16.mxu0 0
      %221 = vmatmul.mubr.bf16.gmra.mxu0 %v183
      %v222 = vpop.f32.mrf.mxu0
      %v223 = vadd.f32 0.0, %v222
      %v224 = vpop.f32.mrf.mxu0
      %v225 = vpop.f32.mrf.mxu0
      %v226 = vadd.f32 0.0, %v225
      %v227 = vpop.f32.mrf.mxu0
      %228 = vdwg.mxu0
      %v229 = vmul.f32 %v223, 0.17677669
      %v230 = vmul.f32 %v226, 0.17677669
      %vm231 = vcmp.gt.bf16.partialorder %v171, 0
      %vm232 = vcmp.gt.bf16.partialorder %v172, 0
      %v233 = vsel %vm231, 65537, 0
      %v234 = vsel %vm232, 65537, 0
      %v235 = vunpack.c.l.b16 %v233
      %v236 = vunpack.c.l.b16 %v234
      %vm237 = vcmp.ne.s32.totalorder %v235, 0
      %vm238 = vcmp.ne.s32.totalorder %v236, 0
      %v239 = vsel %vm237, %v229, -1e+30
      %v240 = vsel %vm238, %v230, -1e+30
      %vm241 = vcmask 130048
      %v242 = vsel %vm241, %v239, -inf
      %243 = vmax.xlane.f32.xlu0 %v242
      %v244 = vpop.xlane.xlu0 %243
      %v245 = vsel %vm241, %v240, -inf
      %246 = vmax.xlane.f32.xlu0 %v245
      %v247 = vpop.xlane.xlu0 %246
      %v248 = vsub.f32 %v239, %v244
      %v249 = vsub.f32 %v240, %v247
      %v250 = vmul.f32 %v248, 1.442695
      %v251 = vpow.pop %v250
      %v252 = vmul.f32 %v249, 1.442695
      %v253 = vpow.pop %v252
      %v254 = vsel %vm241, %v251, 0.0
      %255 = vadd.xlane.f32.xlu0 %v254
      %v256 = vpop.xlane.xlu0 %255
      %v257 = vsel %vm241, %v253, 0.0
      %258 = vadd.xlane.f32.xlu0 %v257
      %v259 = vpop.xlane.xlu0 %258
      %v260 = vrcp.pop %v256
      %v261 = vrcp.pop %v259
      %v262 = vmul.f32 %v251, %v260
      %v263 = vmul.f32 %v253, %v261
      %v264 = vpack.c.bf16 %v263, %v262
      %v267 = vunpack.c.l.b16 %v168
      %v268 = vunpack.c.l.b16 %v170
      %v269 = vpack.c.b16 %v268, %v267
      %v272 = vsel %vm241, %v264, 0
      %274 = vmatprep.subr.bf16.mxu0 0
      %275 = vmatpush1.bf16.msra.mxu0 0
      %276 = vmatprep.subr.bf16.mxu0 0
      %277 = vmatpush1.bf16.msra.mxu0 0
      %278 = vmatprep.subr.bf16.mxu0 0
      %279 = vmatpush1.bf16.msra.mxu0 0
      %280 = vmatprep.subr.bf16.mxu0 0
      %281 = vmatpush1.bf16.msra.mxu0 0
      %282 = vmatprep.subr.bf16.mxu0 0
      %283 = vmatpush1.bf16.msra.mxu0 0
      %284 = vmatprep.subr.bf16.mxu0 0
      %285 = vmatpush1.bf16.msra.mxu0 0
      %286 = vmatprep.subr.bf16.mxu0 0
      %287 = vmatpush1.bf16.msra.mxu0 0
      %288 = vmatprep.subr.bf16.mxu0 0
      %289 = vmatpush1.bf16.msra.mxu0 %v269
      %290 = vmatprep.subr.bf16.mxu0 0
      %291 = vmatpush2.bf16.msra.mxu0 0
      %292 = vmatprep.subr.bf16.mxu0 0
      %293 = vmatpush2.bf16.msra.mxu0 0
      %294 = vmatprep.subr.bf16.mxu0 0
      %295 = vmatpush2.bf16.msra.mxu0 0
      %296 = vmatprep.subr.bf16.mxu0 0
      %297 = vmatpush2.bf16.msra.mxu0 0
      %298 = vmatprep.subr.bf16.mxu0 0
      %299 = vmatpush2.bf16.msra.mxu0 0
      %300 = vmatprep.subr.bf16.mxu0 0
      %301 = vmatpush2.bf16.msra.mxu0 0
      %302 = vmatprep.subr.bf16.mxu0 0
      %303 = vmatpush2.bf16.msra.mxu0 0
      %304 = vmatprep.subr.bf16.mxu0 0
      %305 = vmatpush2.bf16.msra.mxu0 0
      %306 = vmatprep.mubr.bf16.mxu0 0
      %307 = vmatmul.mubr.bf16.gmra.mxu0 %v272
      %v308 = vpop.f32.mrf.mxu0
      %v309 = vadd.f32 0.0, %v308
      %v310 = vpop.f32.mrf.mxu0
      %v311 = vpop.f32.mrf.mxu0
      %v312 = vadd.f32 0.0, %v311
      %v313 = vpop.f32.mrf.mxu0
      %314 = vdwg.mxu0
      %315 = vrot.lane.b32.xlu0 %v177, 96
      %v316 = vpop.permute.xlu0 %315
      %317 = vrot.lane.b32.xlu0 %v180, 96
      %v318 = vpop.permute.xlu0 %317
      %v320 = vsel %vm181, %v316, 0
      %v323 = vsel %vm181, %v318, 0
      %325 = vmatprep.subr.bf16.mxu0 0
      %326 = vmatpush1.bf16.xpose.msra.mxu0 0
      %327 = vmatprep.subr.bf16.mxu0 0
      %328 = vmatpush1.bf16.xpose.msra.mxu0 0
      %329 = vmatprep.subr.bf16.mxu0 0
      %330 = vmatpush1.bf16.xpose.msra.mxu0 0
      %331 = vmatprep.subr.bf16.mxu0 0
      %332 = vmatpush1.bf16.xpose.msra.mxu0 0
      %333 = vmatprep.subr.bf16.mxu0 0
      %334 = vmatpush1.bf16.xpose.msra.mxu0 0
      %335 = vmatprep.subr.bf16.mxu0 0
      %336 = vmatpush1.bf16.xpose.msra.mxu0 0
      %337 = vmatprep.subr.bf16.mxu0 0
      %338 = vmatpush1.bf16.xpose.msra.mxu0 0
      %339 = vmatprep.subr.bf16.mxu0 0
      %340 = vmatpush1.bf16.xpose.msra.mxu0 %v323
      %341 = vmatprep.subr.bf16.mxu0 0
      %342 = vmatpush2.bf16.xpose.msra.mxu0 0
      %343 = vmatprep.subr.bf16.mxu0 0
      %344 = vmatpush2.bf16.xpose.msra.mxu0 0
      %345 = vmatprep.subr.bf16.mxu0 0
      %346 = vmatpush2.bf16.xpose.msra.mxu0 0
      %347 = vmatprep.subr.bf16.mxu0 0
      %348 = vmatpush2.bf16.xpose.msra.mxu0 0
      %349 = vmatprep.subr.bf16.mxu0 0
      %350 = vmatpush2.bf16.xpose.msra.mxu0 0
      %351 = vmatprep.subr.bf16.mxu0 0
      %352 = vmatpush2.bf16.xpose.msra.mxu0 0
      %353 = vmatprep.subr.bf16.mxu0 0
      %354 = vmatpush2.bf16.xpose.msra.mxu0 0
      %355 = vmatprep.subr.bf16.mxu0 0
      %356 = vmatpush2.bf16.xpose.msra.mxu0 0
      %357 = vmatprep.mubr.bf16.mxu0 0
      %358 = vmatmul.mubr.bf16.gmra.mxu0 %v320
      %v359 = vpop.f32.mrf.mxu0
      %v360 = vadd.f32 0.0, %v359
      %v361 = vpop.f32.mrf.mxu0
      %v362 = vpop.f32.mrf.mxu0
      %v363 = vadd.f32 0.0, %v362
      %v364 = vpop.f32.mrf.mxu0
      %365 = vdwg.mxu0
      %v366 = vmul.f32 %v360, 0.17677669
      %v367 = vmul.f32 %v363, 0.17677669
      %v368 = vsel %vm237, %v366, -1e+30
      %v369 = vsel %vm238, %v367, -1e+30
      %v370 = vsel %vm241, %v368, -inf
      %371 = vmax.xlane.f32.xlu0 %v370
      %v372 = vpop.xlane.xlu0 %371
      %v373 = vsel %vm241, %v369, -inf
      %374 = vmax.xlane.f32.xlu0 %v373
      %v375 = vpop.xlane.xlu0 %374
      %v376 = vsub.f32 %v368, %v372
      %v377 = vsub.f32 %v369, %v375
      %v378 = vmul.f32 %v376, 1.442695
      %v379 = vpow.pop %v378
      %v380 = vmul.f32 %v377, 1.442695
      %v381 = vpow.pop %v380
      %v382 = vsel %vm241, %v379, 0.0
      %383 = vadd.xlane.f32.xlu0 %v382
      %v384 = vpop.xlane.xlu0 %383
      %v385 = vsel %vm241, %v381, 0.0
      %386 = vadd.xlane.f32.xlu0 %v385
      %v387 = vpop.xlane.xlu0 %386
      %v388 = vrcp.pop %v384
      %v389 = vrcp.pop %v387
      %v390 = vmul.f32 %v379, %v388
      %v391 = vmul.f32 %v381, %v389
      %v392 = vpack.c.bf16 %v391, %v390
      %393 = vrot.lane.b32.xlu0 %v269, 96
      %v394 = vpop.permute.xlu0 %393
      %v397 = vsel %vm241, %v392, 0
      %399 = vmatprep.subr.bf16.mxu0 0
      %400 = vmatpush1.bf16.msra.mxu0 0
      %401 = vmatprep.subr.bf16.mxu0 0
      %402 = vmatpush1.bf16.msra.mxu0 0
      %403 = vmatprep.subr.bf16.mxu0 0
      %404 = vmatpush1.bf16.msra.mxu0 0
      %405 = vmatprep.subr.bf16.mxu0 0
      %406 = vmatpush1.bf16.msra.mxu0 0
      %407 = vmatprep.subr.bf16.mxu0 0
      %408 = vmatpush1.bf16.msra.mxu0 0
      %409 = vmatprep.subr.bf16.mxu0 0
      %410 = vmatpush1.bf16.msra.mxu0 0
      %411 = vmatprep.subr.bf16.mxu0 0
      %412 = vmatpush1.bf16.msra.mxu0 0
      %413 = vmatprep.subr.bf16.mxu0 0
      %414 = vmatpush1.bf16.msra.mxu0 %v394
      %415 = vmatprep.subr.bf16.mxu0 0
      %416 = vmatpush2.bf16.msra.mxu0 0
      %417 = vmatprep.subr.bf16.mxu0 0
      %418 = vmatpush2.bf16.msra.mxu0 0
      %419 = vmatprep.subr.bf16.mxu0 0
      %420 = vmatpush2.bf16.msra.mxu0 0
      %421 = vmatprep.subr.bf16.mxu0 0
      %422 = vmatpush2.bf16.msra.mxu0 0
      %423 = vmatprep.subr.bf16.mxu0 0
      %424 = vmatpush2.bf16.msra.mxu0 0
      %425 = vmatprep.subr.bf16.mxu0 0
      %426 = vmatpush2.bf16.msra.mxu0 0
      %427 = vmatprep.subr.bf16.mxu0 0
      %428 = vmatpush2.bf16.msra.mxu0 0
      %429 = vmatprep.subr.bf16.mxu0 0
      %430 = vmatpush2.bf16.msra.mxu0 0
      %431 = vmatprep.mubr.bf16.mxu0 0
      %432 = vmatmul.mubr.bf16.gmra.mxu0 %v397
      %v433 = vpop.f32.mrf.mxu0
      %v434 = vadd.f32 0.0, %v433
      %v435 = vpop.f32.mrf.mxu0
      %v436 = vpop.f32.mrf.mxu0
      %v437 = vadd.f32 0.0, %v436
      %v438 = vpop.f32.mrf.mxu0
      %439 = vdwg.mxu0
      %440 = vrot.lane.b32.xlu0 %v177, 64
      %v441 = vpop.permute.xlu0 %440
      %442 = vrot.lane.b32.xlu0 %v180, 64
      %v443 = vpop.permute.xlu0 %442
      %v445 = vsel %vm181, %v441, 0
      %v448 = vsel %vm181, %v443, 0
      %450 = vmatprep.subr.bf16.mxu0 0
      %451 = vmatpush1.bf16.xpose.msra.mxu0 0
      %452 = vmatprep.subr.bf16.mxu0 0
      %453 = vmatpush1.bf16.xpose.msra.mxu0 0
      %454 = vmatprep.subr.bf16.mxu0 0
      %455 = vmatpush1.bf16.xpose.msra.mxu0 0
      %456 = vmatprep.subr.bf16.mxu0 0
      %457 = vmatpush1.bf16.xpose.msra.mxu0 0
      %458 = vmatprep.subr.bf16.mxu0 0
      %459 = vmatpush1.bf16.xpose.msra.mxu0 0
      %460 = vmatprep.subr.bf16.mxu0 0
      %461 = vmatpush1.bf16.xpose.msra.mxu0 0
      %462 = vmatprep.subr.bf16.mxu0 0
      %463 = vmatpush1.bf16.xpose.msra.mxu0 0
      %464 = vmatprep.subr.bf16.mxu0 0
      %465 = vmatpush1.bf16.xpose.msra.mxu0 %v448
      %466 = vmatprep.subr.bf16.mxu0 0
      %467 = vmatpush2.bf16.xpose.msra.mxu0 0
      %468 = vmatprep.subr.bf16.mxu0 0
      %469 = vmatpush2.bf16.xpose.msra.mxu0 0
      %470 = vmatprep.subr.bf16.mxu0 0
      %471 = vmatpush2.bf16.xpose.msra.mxu0 0
      %472 = vmatprep.subr.bf16.mxu0 0
      %473 = vmatpush2.bf16.xpose.msra.mxu0 0
      %474 = vmatprep.subr.bf16.mxu0 0
      %475 = vmatpush2.bf16.xpose.msra.mxu0 0
      %476 = vmatprep.subr.bf16.mxu0 0
      %477 = vmatpush2.bf16.xpose.msra.mxu0 0
      %478 = vmatprep.subr.bf16.mxu0 0
      %479 = vmatpush2.bf16.xpose.msra.mxu0 0
      %480 = vmatprep.subr.bf16.mxu0 0
      %481 = vmatpush2.bf16.xpose.msra.mxu0 0
      %482 = vmatprep.mubr.bf16.mxu0 0
      %483 = vmatmul.mubr.bf16.gmra.mxu0 %v445
      %v484 = vpop.f32.mrf.mxu0
      %v485 = vadd.f32 0.0, %v484
      %v486 = vpop.f32.mrf.mxu0
      %v487 = vpop.f32.mrf.mxu0
      %v488 = vadd.f32 0.0, %v487
      %v489 = vpop.f32.mrf.mxu0
      %490 = vdwg.mxu0
      %v491 = vmul.f32 %v485, 0.17677669
      %v492 = vmul.f32 %v488, 0.17677669
      %v493 = vsel %vm237, %v491, -1e+30
      %v494 = vsel %vm238, %v492, -1e+30
      %v495 = vsel %vm241, %v493, -inf
      %496 = vmax.xlane.f32.xlu0 %v495
      %v497 = vpop.xlane.xlu0 %496
      %v498 = vsel %vm241, %v494, -inf
      %499 = vmax.xlane.f32.xlu0 %v498
      %v500 = vpop.xlane.xlu0 %499
      %v501 = vsub.f32 %v493, %v497
      %v502 = vsub.f32 %v494, %v500
      %v503 = vmul.f32 %v501, 1.442695
      %v504 = vpow.pop %v503
      %v505 = vmul.f32 %v502, 1.442695
      %v506 = vpow.pop %v505
      %v507 = vsel %vm241, %v504, 0.0
      %508 = vadd.xlane.f32.xlu0 %v507
      %v509 = vpop.xlane.xlu0 %508
      %v510 = vsel %vm241, %v506, 0.0
      %511 = vadd.xlane.f32.xlu0 %v510
      %v512 = vpop.xlane.xlu0 %511
      %v513 = vrcp.pop %v509
      %v514 = vrcp.pop %v512
      %v515 = vmul.f32 %v504, %v513
      %v516 = vmul.f32 %v506, %v514
      %v517 = vpack.c.bf16 %v516, %v515
      %518 = vrot.lane.b32.xlu0 %v269, 64
      %v519 = vpop.permute.xlu0 %518
      %v522 = vsel %vm241, %v517, 0
      %524 = vmatprep.subr.bf16.mxu0 0
      %525 = vmatpush1.bf16.msra.mxu0 0
      %526 = vmatprep.subr.bf16.mxu0 0
      %527 = vmatpush1.bf16.msra.mxu0 0
      %528 = vmatprep.subr.bf16.mxu0 0
      %529 = vmatpush1.bf16.msra.mxu0 0
      %530 = vmatprep.subr.bf16.mxu0 0
      %531 = vmatpush1.bf16.msra.mxu0 0
      %532 = vmatprep.subr.bf16.mxu0 0
      %533 = vmatpush1.bf16.msra.mxu0 0
      %534 = vmatprep.subr.bf16.mxu0 0
      %535 = vmatpush1.bf16.msra.mxu0 0
      %536 = vmatprep.subr.bf16.mxu0 0
      %537 = vmatpush1.bf16.msra.mxu0 0
      %538 = vmatprep.subr.bf16.mxu0 0
      %539 = vmatpush1.bf16.msra.mxu0 %v519
      %540 = vmatprep.subr.bf16.mxu0 0
      %541 = vmatpush2.bf16.msra.mxu0 0
      %542 = vmatprep.subr.bf16.mxu0 0
      %543 = vmatpush2.bf16.msra.mxu0 0
      %544 = vmatprep.subr.bf16.mxu0 0
      %545 = vmatpush2.bf16.msra.mxu0 0
      %546 = vmatprep.subr.bf16.mxu0 0
      %547 = vmatpush2.bf16.msra.mxu0 0
      %548 = vmatprep.subr.bf16.mxu0 0
      %549 = vmatpush2.bf16.msra.mxu0 0
      %550 = vmatprep.subr.bf16.mxu0 0
      %551 = vmatpush2.bf16.msra.mxu0 0
      %552 = vmatprep.subr.bf16.mxu0 0
      %553 = vmatpush2.bf16.msra.mxu0 0
      %554 = vmatprep.subr.bf16.mxu0 0
      %555 = vmatpush2.bf16.msra.mxu0 0
      %556 = vmatprep.mubr.bf16.mxu0 0
      %557 = vmatmul.mubr.bf16.gmra.mxu0 %v522
      %v558 = vpop.f32.mrf.mxu0
      %v559 = vadd.f32 0.0, %v558
      %v560 = vpop.f32.mrf.mxu0
      %v561 = vpop.f32.mrf.mxu0
      %v562 = vadd.f32 0.0, %v561
      %v563 = vpop.f32.mrf.mxu0
      %564 = vdwg.mxu0
      %565 = vrot.lane.b32.xlu0 %v177, 32
      %v566 = vpop.permute.xlu0 %565
      %567 = vrot.lane.b32.xlu0 %v180, 32
      %v568 = vpop.permute.xlu0 %567
      %v570 = vsel %vm181, %v566, 0
      %v573 = vsel %vm181, %v568, 0
      %575 = vmatprep.subr.bf16.mxu0 0
      %576 = vmatpush1.bf16.xpose.msra.mxu0 0
      %577 = vmatprep.subr.bf16.mxu0 0
      %578 = vmatpush1.bf16.xpose.msra.mxu0 0
      %579 = vmatprep.subr.bf16.mxu0 0
      %580 = vmatpush1.bf16.xpose.msra.mxu0 0
      %581 = vmatprep.subr.bf16.mxu0 0
      %582 = vmatpush1.bf16.xpose.msra.mxu0 0
      %583 = vmatprep.subr.bf16.mxu0 0
      %584 = vmatpush1.bf16.xpose.msra.mxu0 0
      %585 = vmatprep.subr.bf16.mxu0 0
      %586 = vmatpush1.bf16.xpose.msra.mxu0 0
      %587 = vmatprep.subr.bf16.mxu0 0
      %588 = vmatpush1.bf16.xpose.msra.mxu0 0
      %589 = vmatprep.subr.bf16.mxu0 0
      %590 = vmatpush1.bf16.xpose.msra.mxu0 %v573
      %591 = vmatprep.subr.bf16.mxu0 0
      %592 = vmatpush2.bf16.xpose.msra.mxu0 0
      %593 = vmatprep.subr.bf16.mxu0 0
      %594 = vmatpush2.bf16.xpose.msra.mxu0 0
      %595 = vmatprep.subr.bf16.mxu0 0
      %596 = vmatpush2.bf16.xpose.msra.mxu0 0
      %597 = vmatprep.subr.bf16.mxu0 0
      %598 = vmatpush2.bf16.xpose.msra.mxu0 0
      %599 = vmatprep.subr.bf16.mxu0 0
      %600 = vmatpush2.bf16.xpose.msra.mxu0 0
      %601 = vmatprep.subr.bf16.mxu0 0
      %602 = vmatpush2.bf16.xpose.msra.mxu0 0
      %603 = vmatprep.subr.bf16.mxu0 0
      %604 = vmatpush2.bf16.xpose.msra.mxu0 0
      %605 = vmatprep.subr.bf16.mxu0 0
      %606 = vmatpush2.bf16.xpose.msra.mxu0 0
      %607 = vmatprep.mubr.bf16.mxu0 0
      %608 = vmatmul.mubr.bf16.gmra.mxu0 %v570
      %v609 = vpop.f32.mrf.mxu0
      %v610 = vadd.f32 0.0, %v609
      %v611 = vpop.f32.mrf.mxu0
      %v612 = vpop.f32.mrf.mxu0
      %v613 = vadd.f32 0.0, %v612
      %v614 = vpop.f32.mrf.mxu0
      %615 = vdwg.mxu0
      %v616 = vmul.f32 %v610, 0.17677669
      %v617 = vmul.f32 %v613, 0.17677669
      %v618 = vsel %vm237, %v616, -1e+30
      %v619 = vsel %vm238, %v617, -1e+30
      %v620 = vsel %vm241, %v618, -inf
      %621 = vmax.xlane.f32.xlu0 %v620
      %v622 = vpop.xlane.xlu0 %621
      %v623 = vsel %vm241, %v619, -inf
      %624 = vmax.xlane.f32.xlu0 %v623
      %v625 = vpop.xlane.xlu0 %624
      %v626 = vsub.f32 %v618, %v622
      %v627 = vsub.f32 %v619, %v625
      %v628 = vmul.f32 %v626, 1.442695
      %v629 = vpow.pop %v628
      %v630 = vmul.f32 %v627, 1.442695
      %v631 = vpow.pop %v630
      %v632 = vsel %vm241, %v629, 0.0
      %633 = vadd.xlane.f32.xlu0 %v632
      %v634 = vpop.xlane.xlu0 %633
      %v635 = vsel %vm241, %v631, 0.0
      %636 = vadd.xlane.f32.xlu0 %v635
      %v637 = vpop.xlane.xlu0 %636
      %v638 = vrcp.pop %v634
      %v639 = vrcp.pop %v637
      %v640 = vmul.f32 %v629, %v638
      %v641 = vmul.f32 %v631, %v639
      %v642 = vpack.c.bf16 %v641, %v640
      %643 = vrot.lane.b32.xlu0 %v269, 32
      %v644 = vpop.permute.xlu0 %643
      %v647 = vsel %vm241, %v642, 0
      %649 = vmatprep.subr.bf16.mxu0 0
      %650 = vmatpush1.bf16.msra.mxu0 0
      %651 = vmatprep.subr.bf16.mxu0 0
      %652 = vmatpush1.bf16.msra.mxu0 0
      %653 = vmatprep.subr.bf16.mxu0 0
      %654 = vmatpush1.bf16.msra.mxu0 0
      %655 = vmatprep.subr.bf16.mxu0 0
      %656 = vmatpush1.bf16.msra.mxu0 0
      %657 = vmatprep.subr.bf16.mxu0 0
      %658 = vmatpush1.bf16.msra.mxu0 0
      %659 = vmatprep.subr.bf16.mxu0 0
      %660 = vmatpush1.bf16.msra.mxu0 0
      %661 = vmatprep.subr.bf16.mxu0 0
      %662 = vmatpush1.bf16.msra.mxu0 0
      %663 = vmatprep.subr.bf16.mxu0 0
      %664 = vmatpush1.bf16.msra.mxu0 %v644
      %665 = vmatprep.subr.bf16.mxu0 0
      %666 = vmatpush2.bf16.msra.mxu0 0
      %667 = vmatprep.subr.bf16.mxu0 0
      %668 = vmatpush2.bf16.msra.mxu0 0
      %669 = vmatprep.subr.bf16.mxu0 0
      %670 = vmatpush2.bf16.msra.mxu0 0
      %671 = vmatprep.subr.bf16.mxu0 0
      %672 = vmatpush2.bf16.msra.mxu0 0
      %673 = vmatprep.subr.bf16.mxu0 0
      %674 = vmatpush2.bf16.msra.mxu0 0
      %675 = vmatprep.subr.bf16.mxu0 0
      %676 = vmatpush2.bf16.msra.mxu0 0
      %677 = vmatprep.subr.bf16.mxu0 0
      %678 = vmatpush2.bf16.msra.mxu0 0
      %679 = vmatprep.subr.bf16.mxu0 0
      %680 = vmatpush2.bf16.msra.mxu0 0
      %681 = vmatprep.mubr.bf16.mxu0 0
      %682 = vmatmul.mubr.bf16.gmra.mxu0 %v647
      %v683 = vpop.f32.mrf.mxu0
      %v684 = vadd.f32 0.0, %v683
      %v685 = vpop.f32.mrf.mxu0
      %v686 = vpop.f32.mrf.mxu0
      %v687 = vadd.f32 0.0, %v686
      %v688 = vpop.f32.mrf.mxu0
      %689 = vdwg.mxu0
      %692 = vrot.lane.b32.xlu0 %v434, 32
      %v693 = vpop.permute.xlu0 %692
      %694 = vrot.lane.b32.xlu0 %v437, 32
      %v695 = vpop.permute.xlu0 %694
      %700 = vrot.lane.b32.xlu0 %v559, 64
      %v701 = vpop.permute.xlu0 %700
      %702 = vrot.lane.b32.xlu0 %v562, 64
      %v703 = vpop.permute.xlu0 %702
      %708 = vrot.lane.b32.xlu0 %v684, 96
      %v709 = vpop.permute.xlu0 %708
      %710 = vrot.lane.b32.xlu0 %v687, 96
      %v711 = vpop.permute.xlu0 %710
      %v714 = vsel %vm181, %v309, %v693
      %v715 = vsel %vm181, %v312, %v695
      %vm716 = vcmask 523264
      %v717 = vsel %vm716, %v714, %v701
      %v718 = vsel %vm716, %v715, %v703
      %vm719 = vcmask 785408
      %v720 = vsel %vm719, %v717, %v709
      %v721 = vsel %vm719, %v718, %v711
      %v722 = vpack.c.bf16 %v721, %v720
      %v724 = vunpack.c.l.b16 %v722
      %v725 = vunpack.c.h.b16 %v722
      %v726 = vpack.c.b16 %v724, %v724
      %v727 = vpack.c.b16 %v725, %v725
      %730 = vst [vmem:[%s163] sm:$0xf] %v726
      %731 = vst [vmem:[%s163 + $0x4] sm:$0xf] %v727
      %p732 = scmp.lt.s32.totalorder %s13, 1
      %s733 = scalar_select %p732, %s13, 1
      %s734 = smul.addr %s733, 2
      %s735 = smul.addr %s734, 4
      %s736 = scalar_lea.vmem %s2, %s735
      // Predicated region
      $region29: #{supertagger_forward.40} parent=27 // pred_check
        %p737 = pneg %p83
      $region30: #{supertagger_forward.40} parent=27 // pred_check_branch
        %739 = sbr.rel (%p737) target = $region32
      $region31: #{supertagger_forward.40} parent=27 // pred_region
        _
      $region32: #{supertagger_forward.40} parent=27 // pred_fallthru
        _
    $region28: #{supertagger_forward.40} parent=5 // pred_fallthru
      _
    %p740 = scmp.le.s32.totalorder 2, %s8
    // Predicated region
    $region33: #{supertagger_forward.40} parent=5 // pred_check
      %p741 = pneg %p740
    $region34: #{supertagger_forward.40} parent=5 // pred_check_branch
      %743 = sbr.rel (%p741) target = $region36
    $region35: #{supertagger_forward.40} parent=5 // pred_region
      %s744 = ssub.s32 %s8, 2
      // Predicated region
      $region37: #{supertagger_forward.40} parent=35 // pred_check
        %p745 = pneg %p89
      $region38: #{supertagger_forward.40} parent=35 // pred_check_branch
        %747 = sbr.rel (%p745) target = $region40
      $region39: #{supertagger_forward.40} parent=35 // pred_region
        %p748 = scmp.lt.s32.totalorder %s14, 1
        %s749 = scalar_select %p748, %s14, 1
        %s750 = smul.addr %s749, 2
        %s751 = smul.addr %s750, 4
        %s752 = scalar_lea.vmem %s2, %s751
      $region40: #{supertagger_forward.40} parent=35 // pred_fallthru
        _
    $region36: #{supertagger_forward.40} parent=5 // pred_fallthru
      _
  $region6: #{supertagger_forward.40} parent=0 // loop_footer
    %s12 = sadd.s32 1, %s8
  $region7: #{supertagger_forward.40} parent=0 // loop_footer_branch
    %7 = sbr.rel target = $region3
  $region8: #{supertagger_forward.40} parent=0 // loop_exit
    _

// kernel: supertagger_forward.41
$region0: #{supertagger_forward.41}
  #allocation0 [shape = 'u32[]', space=smem, size = 0x4, offset = 0x4, fixed_abs, tag = 'smem constant byte address 0x4 - core index']
  #allocation1 [shape = 'u32[144,128]{1,0:T(1,128)}', space=vmem, size = 0x12000, scoped, tag = 'internal scratch']
  #allocation2 [shape = 'f32[32,128]{1,0:T(8,128)}', space=vmem, size = 0x4000, scoped, tag = 'scratch operand']
  %s0 = inlined_call_operand.vmem [shape: bf16[32,128], index: 0, kind: input, shape index: {}]
  %s1 = inlined_call_operand.vmem [shape: bf16[128,128], index: 1, kind: input, shape index: {}]
  %s2 = inlined_call_operand.vmem [shape: f32[1,128], index: 2, kind: input, shape index: {}]
  %s3 = inlined_call_operand.vmem [shape: bf16[32,128], index: 3, kind: output, shape index: {}]
  %s4 = sld [smem:[#allocation0]]
  $region30: #{supertagger_forward.41} parent=0
    _
  %s6 = ssub.s32 1, %s4
  %s7 = scalar_select 0, %s6, %s4
  // Predicated region
  $region2: #{supertagger_forward.41} parent=0 // pred_check
    _
  $region3: #{supertagger_forward.41} parent=0 // pred_check_branch
    %9 = sbr.rel (0) target = $region5
  $region4: #{supertagger_forward.41} parent=0 // pred_region
    _
  $region5: #{supertagger_forward.41} parent=0 // pred_fallthru
    _
  // Predicated region
  $region6: #{supertagger_forward.41} parent=0 // pred_check
    _
  $region7: #{supertagger_forward.41} parent=0 // pred_check_branch
    %11 = sbr.rel (0) target = $region9
  $region8: #{supertagger_forward.41} parent=0 // pred_region
    _
  $region9: #{supertagger_forward.41} parent=0 // pred_fallthru
    _
  // Predicated region
  $region10: #{supertagger_forward.41} parent=0 // pred_check
    _
  $region11: #{supertagger_forward.41} parent=0 // pred_check_branch
    %13 = sbr.rel (0) target = $region13
  $region12: #{supertagger_forward.41} parent=0 // pred_region
    _
  $region13: #{supertagger_forward.41} parent=0 // pred_fallthru
    _
  %p15 = scmp.eq.s32.totalorder 0, 0
  // Predicated region
  $region14: #{supertagger_forward.41} parent=0 // pred_check
    %p16 = pneg %p15
  $region15: #{supertagger_forward.41} parent=0 // pred_check_branch
    %18 = sbr.rel (%p16) target = $region17
  $region16: #{supertagger_forward.41} parent=0 // pred_region
    %19 = vst [vmem:[#allocation2] sm:$0xff] 0.0
    %20 = vst [vmem:[#allocation2 + $0x8] sm:$0xff] 0.0
    %21 = vst [vmem:[#allocation2 + $0x10] sm:$0xff] 0.0
    %22 = vst [vmem:[#allocation2 + $0x18] sm:$0xff] 0.0
  $region17: #{supertagger_forward.41} parent=0 // pred_fallthru
    _
  %v23 = vld [vmem:[#allocation2] sm:$0xff]
  %v24 = vld [vmem:[#allocation2 + $0x8] sm:$0xff]
  %v25 = vld [vmem:[#allocation2 + $0x10] sm:$0xff]
  %v26 = vld [vmem:[#allocation2 + $0x18] sm:$0xff]
  %v27 = vld [vmem:[%s0] sm:$0xf]
  %v28 = vld [vmem:[%s0 + $0x4] sm:$0xf]
  %v29 = vld [vmem:[%s0 + $0x8] sm:$0xf]
  %v30 = vld [vmem:[%s0 + $0xc] sm:$0xf]
  %v31 = vld [vmem:[%s1] sm:$0xf]
  %v32 = vld [vmem:[%s1 + $0x4] sm:$0xf]
  %v33 = vld [vmem:[%s1 + $0x8] sm:$0xf]
  %v34 = vld [vmem:[%s1 + $0xc] sm:$0xf]
  %v35 = vld [vmem:[%s1 + $0x10] sm:$0xf]
  %v36 = vld [vmem:[%s1 + $0x14] sm:$0xf]
  %v37 = vld [vmem:[%s1 + $0x18] sm:$0xf]
  %v38 = vld [vmem:[%s1 + $0x1c] sm:$0xf]
  %v39 = vld [vmem:[%s1 + $0x20] sm:$0xf]
  %v40 = vld [vmem:[%s1 + $0x24] sm:$0xf]
  %v41 = vld [vmem:[%s1 + $0x28] sm:$0xf]
  %v42 = vld [vmem:[%s1 + $0x2c] sm:$0xf]
  %v43 = vld [vmem:[%s1 + $0x30] sm:$0xf]
  %v44 = vld [vmem:[%s1 + $0x34] sm:$0xf]
  %v45 = vld [vmem:[%s1 + $0x38] sm:$0xf]
  %v46 = vld [vmem:[%s1 + $0x3c] sm:$0xf]
  %v51 = vunpack.c.l.b16 %v27
  %v52 = vunpack.c.l.b16 %v28
  %v53 = vunpack.c.l.b16 %v29
  %v54 = vunpack.c.l.b16 %v30
  %v55 = vpack.c.b16 %v52, %v51
  %v56 = vpack.c.b16 %v54, %v53
  %v75 = vunpack.c.l.b16 %v31
  %v76 = vunpack.c.l.b16 %v32
  %v77 = vunpack.c.l.b16 %v33
  %v78 = vunpack.c.l.b16 %v34
  %v79 = vunpack.c.l.b16 %v35
  %v80 = vunpack.c.l.b16 %v36
  %v81 = vunpack.c.l.b16 %v37
  %v82 = vunpack.c.l.b16 %v38
  %v83 = vunpack.c.l.b16 %v39
  %v84 = vunpack.c.l.b16 %v40
  %v85 = vunpack.c.l.b16 %v41
  %v86 = vunpack.c.l.b16 %v42
  %v87 = vunpack.c.l.b16 %v43
  %v88 = vunpack.c.l.b16 %v44
  %v89 = vunpack.c.l.b16 %v45
  %v90 = vunpack.c.l.b16 %v46
  %v91 = vpack.c.b16 %v76, %v75
  %v92 = vpack.c.b16 %v78, %v77
  %v93 = vpack.c.b16 %v80, %v79
  %v94 = vpack.c.b16 %v82, %v81
  %v95 = vpack.c.b16 %v84, %v83
  %v96 = vpack.c.b16 %v86, %v85
  %v97 = vpack.c.b16 %v88, %v87
  %v98 = vpack.c.b16 %v90, %v89
  %107 = vmatprep.subr.bf16.mxu0 0
  %108 = vmatpush1.bf16.msra.mxu0 %v98
  %109 = vmatprep.subr.bf16.mxu0 0
  %110 = vmatpush1.bf16.msra.mxu0 %v97
  %111 = vmatprep.subr.bf16.mxu0 0
  %112 = vmatpush1.bf16.msra.mxu0 %v96
  %113 = vmatprep.subr.bf16.mxu0 0
  %114 = vmatpush1.bf16.msra.mxu0 %v95
  %115 = vmatprep.subr.bf16.mxu0 0
  %116 = vmatpush1.bf16.msra.mxu0 %v94
  %117 = vmatprep.subr.bf16.mxu0 0
  %118 = vmatpush1.bf16.msra.mxu0 %v93
  %119 = vmatprep.subr.bf16.mxu0 0
  %120 = vmatpush1.bf16.msra.mxu0 %v92
  %121 = vmatprep.subr.bf16.mxu0 0
  %122 = vmatpush1.bf16.msra.mxu0 %v91
  %123 = vmatprep.subr.bf16.mxu0 0
  %124 = vmatpush2.bf16.msra.mxu0 0
  %125 = vmatprep.subr.bf16.mxu0 0
  %126 = vmatpush2.bf16.msra.mxu0 0
  %127 = vmatprep.subr.bf16.mxu0 0
  %128 = vmatpush2.bf16.msra.mxu0 0
  %129 = vmatprep.subr.bf16.mxu0 0
  %130 = vmatpush2.bf16.msra.mxu0 0
  %131 = vmatprep.subr.bf16.mxu0 0
  %132 = vmatpush2.bf16.msra.mxu0 0
  %133 = vmatprep.subr.bf16.mxu0 0
  %134 = vmatpush2.bf16.msra.mxu0 0
  %135 = vmatprep.subr.bf16.mxu0 0
  %136 = vmatpush2.bf16.msra.mxu0 0
  %137 = vmatprep.subr.bf16.mxu0 0
  %138 = vmatpush2.bf16.msra.mxu0 0
  %139 = vmatprep.mubr.bf16.mxu0 0
  %140 = vmatmul.mubr.bf16.gmra.mxu0 %v55
  %v141 = vpop.f32.mrf.mxu0
  %v142 = vadd.f32 0.0, %v141
  %v143 = vpop.f32.mrf.mxu0
  %v144 = vpop.f32.mrf.mxu0
  %v145 = vadd.f32 0.0, %v144
  %v146 = vpop.f32.mrf.mxu0
  %147 = vmatprep.mubr.bf16.mxu0 0
  %148 = vmatmul.mubr.bf16.gmra.mxu0 %v56
  %v149 = vpop.f32.mrf.mxu0
  %v150 = vadd.f32 0.0, %v149
  %v151 = vpop.f32.mrf.mxu0
  %v152 = vpop.f32.mrf.mxu0
  %v153 = vadd.f32 0.0, %v152
  %v154 = vpop.f32.mrf.mxu0
  %155 = vdwg.mxu0
  %v156 = vadd.f32 %v23, %v142
  %v157 = vadd.f32 %v24, %v145
  %v158 = vadd.f32 %v25, %v150
  %v159 = vadd.f32 %v26, %v153
  %160 = vst [vmem:[#allocation2] sm:$0xff] %v156
  %161 = vst [vmem:[#allocation2 + $0x8] sm:$0xff] %v157
  %162 = vst [vmem:[#allocation2 + $0x10] sm:$0xff] %v158
  %163 = vst [vmem:[#allocation2 + $0x18] sm:$0xff] %v159
  // Predicated region
  $region18: #{supertagger_forward.41} parent=0 // pred_check
    %p164 = pneg %p15
  $region19: #{supertagger_forward.41} parent=0 // pred_check_branch
    %166 = sbr.rel (%p164) target = $region21
  $region20: #{supertagger_forward.41} parent=0 // pred_region
    %v167 = vld [vmem:[#allocation2] sm:$0xff]
    %v168 = vld [vmem:[#allocation2 + $0x8] sm:$0xff]
    %v169 = vld [vmem:[#allocation2 + $0x10] sm:$0xff]
    %v170 = vld [vmem:[#allocation2 + $0x18] sm:$0xff]
    %v171 = vld [vmem:[%s2] sm:$0x1]
    %v173 = vlaneseq
    %v174 = vshrl.u32 %v173, 7
    %v175 = vsub.s32 0, %v174
    %v176 = vrot.slane %v171, %v175
    %v178 = vadd.f32 %v167, %v176
    %v179 = vadd.f32 %v168, %v176
    %v180 = vadd.f32 %v169, %v176
    %v181 = vadd.f32 %v170, %v176
    %v182 = vpack.c.bf16 %v179, %v178
    %v183 = vpack.c.bf16 %v181, %v180
    %v186 = vunpack.c.l.b16 %v182
    %v187 = vunpack.c.h.b16 %v182
    %v188 = vunpack.c.l.b16 %v183
    %v189 = vunpack.c.h.b16 %v183
    %v190 = vpack.c.b16 %v186, %v186
    %v191 = vpack.c.b16 %v187, %v187
    %v192 = vpack.c.b16 %v188, %v188
    %v193 = vpack.c.b16 %v189, %v189
    %198 = vst [vmem:[%s3] sm:$0xf] %v190
    %199 = vst [vmem:[%s3 + $0x4] sm:$0xf] %v191
    %200 = vst [vmem:[%s3 + $0x8] sm:$0xf] %v192
    %201 = vst [vmem:[%s3 + $0xc] sm:$0xf] %v193
  $region21: #{supertagger_forward.41} parent=0 // pred_fallthru
    _
  // Predicated region
  $region22: #{supertagger_forward.41} parent=0 // pred_check
    _
  $region23: #{supertagger_forward.41} parent=0 // pred_check_branch
    %203 = sbr.rel (0) target = $region25
  $region24: #{supertagger_forward.41} parent=0 // pred_region
    _
  $region25: #{supertagger_forward.41} parent=0 // pred_fallthru
    _
  // Predicated region
  $region26: #{supertagger_forward.41} parent=0 // pred_check
    _
  $region27: #{supertagger_forward.41} parent=0 // pred_check_branch
    %205 = sbr.rel (0) target = $region29
  $region28: #{supertagger_forward.41} parent=0 // pred_region
    _
  $region29: #{supertagger_forward.41} parent=0 // pred_fallthru
    _

// kernel: supertagger_forward.42
$region0: #{supertagger_forward.42}
  #allocation0 [shape = 'u32[]', space=smem, size = 0x4, offset = 0x4, fixed_abs, tag = 'smem constant byte address 0x4 - core index']
  #allocation1 [shape = 'u32[144,128]{1,0:T(1,128)}', space=vmem, size = 0x12000, scoped, tag = 'internal scratch']
  %s0 = inlined_call_operand.vmem [shape: bf16[32,128], index: 0, kind: input, shape index: {}]
  %s1 = inlined_call_operand.vmem [shape: bf16[32,128], index: 1, kind: input, shape index: {}]
  %s2 = inlined_call_operand.vmem [shape: f32[1,128], index: 2, kind: input, shape index: {}]
  %s3 = inlined_call_operand.vmem [shape: f32[1,128], index: 3, kind: input, shape index: {}]
  %s4 = inlined_call_operand.vmem [shape: bf16[32,128], index: 4, kind: output, shape index: {}]
  %s5 = sld [smem:[#allocation0]]
  $region26: #{supertagger_forward.42} parent=0
    _
  %s7 = ssub.s32 1, %s5
  %s8 = scalar_select 0, %s7, %s5
  // Predicated region
  $region2: #{supertagger_forward.42} parent=0 // pred_check
    _
  $region3: #{supertagger_forward.42} parent=0 // pred_check_branch
    %10 = sbr.rel (0) target = $region5
  $region4: #{supertagger_forward.42} parent=0 // pred_region
    _
  $region5: #{supertagger_forward.42} parent=0 // pred_fallthru
    _
  // Predicated region
  $region6: #{supertagger_forward.42} parent=0 // pred_check
    _
  $region7: #{supertagger_forward.42} parent=0 // pred_check_branch
    %12 = sbr.rel (0) target = $region9
  $region8: #{supertagger_forward.42} parent=0 // pred_region
    _
  $region9: #{supertagger_forward.42} parent=0 // pred_fallthru
    _
  // Predicated region
  $region10: #{supertagger_forward.42} parent=0 // pred_check
    _
  $region11: #{supertagger_forward.42} parent=0 // pred_check_branch
    %14 = sbr.rel (0) target = $region13
  $region12: #{supertagger_forward.42} parent=0 // pred_region
    _
  $region13: #{supertagger_forward.42} parent=0 // pred_fallthru
    _
  // Predicated region
  $region14: #{supertagger_forward.42} parent=0 // pred_check
    _
  $region15: #{supertagger_forward.42} parent=0 // pred_check_branch
    %16 = sbr.rel (0) target = $region17
  $region16: #{supertagger_forward.42} parent=0 // pred_region
    _
  $region17: #{supertagger_forward.42} parent=0 // pred_fallthru
    _
  %v17 = vld [vmem:[%s0] sm:$0xf]
  %v18 = vld [vmem:[%s0 + $0x4] sm:$0xf]
  %v19 = vld [vmem:[%s0 + $0x8] sm:$0xf]
  %v20 = vld [vmem:[%s0 + $0xc] sm:$0xf]
  %v21 = vunpack.c.l.bf16 %v17
  %v22 = vunpack.c.l.bf16 %v18
  %v23 = vunpack.c.l.bf16 %v19
  %v24 = vunpack.c.l.bf16 %v20
  %v25 = vld [vmem:[%s1] sm:$0xf]
  %v26 = vld [vmem:[%s1 + $0x4] sm:$0xf]
  %v27 = vld [vmem:[%s1 + $0x8] sm:$0xf]
  %v28 = vld [vmem:[%s1 + $0xc] sm:$0xf]
  %v29 = vunpack.c.l.bf16 %v25
  %v30 = vunpack.c.l.bf16 %v26
  %v31 = vunpack.c.l.bf16 %v27
  %v32 = vunpack.c.l.bf16 %v28
  %v33 = vadd.f32 %v21, %v29
  %v34 = vadd.f32 %v22, %v30
  %v35 = vadd.f32 %v23, %v31
  %v36 = vadd.f32 %v24, %v32
  %37 = vadd.xlane.f32.xlu0 %v33
  %v38 = vpop.xlane.xlu0 %37
  %39 = vadd.xlane.f32.xlu0 %v34
  %v40 = vpop.xlane.xlu0 %39
  %41 = vadd.xlane.f32.xlu0 %v35
  %v42 = vpop.xlane.xlu0 %41
  %43 = vadd.xlane.f32.xlu0 %v36
  %v44 = vpop.xlane.xlu0 %43
  %v45 = vrcp.pop 128.0
  %v46 = vmul.f32 %v38, %v45
  %v47 = vmul.f32 %v40, %v45
  %v48 = vmul.f32 %v42, %v45
  %v49 = vmul.f32 %v44, %v45
  %v50 = vsub.f32 %v33, %v46
  %v51 = vsub.f32 %v34, %v47
  %v52 = vsub.f32 %v35, %v48
  %v53 = vsub.f32 %v36, %v49
  %v54 = vmul.f32 %v50, %v50
  %v55 = vmul.f32 %v51, %v51
  %v56 = vmul.f32 %v52, %v52
  %v57 = vmul.f32 %v53, %v53
  %58 = vadd.xlane.f32.xlu0 %v54
  %v59 = vpop.xlane.xlu0 %58
  %60 = vadd.xlane.f32.xlu0 %v55
  %v61 = vpop.xlane.xlu0 %60
  %62 = vadd.xlane.f32.xlu0 %v56
  %v63 = vpop.xlane.xlu0 %62
  %64 = vadd.xlane.f32.xlu0 %v57
  %v65 = vpop.xlane.xlu0 %64
  %v66 = vmul.f32 %v59, %v45
  %v67 = vmul.f32 %v61, %v45
  %v68 = vmul.f32 %v63, %v45
  %v69 = vmul.f32 %v65, %v45
  %v70 = vadd.f32 %v66, 1e-05
  %v71 = vadd.f32 %v67, 1e-05
  %v72 = vadd.f32 %v68, 1e-05
  %v73 = vadd.f32 %v69, 1e-05
  %v74 = vrsqrt.pop %v70
  %v75 = vrsqrt.pop %v71
  %v76 = vrsqrt.pop %v72
  %v77 = vrsqrt.pop %v73
  %v78 = vmul.f32 %v50, %v74
  %v79 = vmul.f32 %v51, %v75
  %v80 = vmul.f32 %v52, %v76
  %v81 = vmul.f32 %v53, %v77
  %v82 = vld [vmem:[%s2] sm:$0x1]
  %v84 = vlaneseq
  %v85 = vshrl.u32 %v84, 7
  %v86 = vsub.s32 0, %v85
  %v87 = vrot.slane %v82, %v86
  %v89 = vmul.f32 %v78, %v87
  %v90 = vmul.f32 %v79, %v87
  %v91 = vmul.f32 %v80, %v87
  %v92 = vmul.f32 %v81, %v87
  %v93 = vld [vmem:[%s3] sm:$0x1]
  %v95 = vlaneseq
  %v96 = vshrl.u32 %v95, 7
  %v97 = vsub.s32 0, %v96
  %v98 = vrot.slane %v93, %v97
  %v100 = vadd.f32 %v89, %v98
  %v101 = vadd.f32 %v90, %v98
  %v102 = vadd.f32 %v91, %v98
  %v103 = vadd.f32 %v92, %v98
  %v104 = vpack.c.bf16 %v101, %v100
  %v105 = vpack.c.bf16 %v103, %v102
  %v108 = vunpack.c.l.b16 %v104
  %v109 = vunpack.c.h.b16 %v104
  %v110 = vunpack.c.l.b16 %v105
  %v111 = vunpack.c.h.b16 %v105
  %v112 = vpack.c.b16 %v108, %v108
  %v113 = vpack.c.b16 %v109, %v109
  %v114 = vpack.c.b16 %v110, %v110
  %v115 = vpack.c.b16 %v111, %v111
  %120 = vst [vmem:[%s4] sm:$0xf] %v112
  %121 = vst [vmem:[%s4 + $0x4] sm:$0xf] %v113
  %122 = vst [vmem:[%s4 + $0x8] sm:$0xf] %v114
  %123 = vst [vmem:[%s4 + $0xc] sm:$0xf] %v115
  // Predicated region
  $region18: #{supertagger_forward.42} parent=0 // pred_check
    _
  $region19: #{supertagger_forward.42} parent=0 // pred_check_branch
    %125 = sbr.rel (0) target = $region21
  $region20: #{supertagger_forward.42} parent=0 // pred_region
    _
  $region21: #{supertagger_forward.42} parent=0 // pred_fallthru
    _
  // Predicated region
  $region22: #{supertagger_forward.42} parent=0 // pred_check
    _
  $region23: #{supertagger_forward.42} parent=0 // pred_check_branch
    %127 = sbr.rel (0) target = $region25
  $region24: #{supertagger_forward.42} parent=0 // pred_region
    _
  $region25: #{supertagger_forward.42} parent=0 // pred_fallthru
    _

// kernel: supertagger_forward.43
$region0: #{supertagger_forward.43}
  #allocation0 [shape = 'u32[]', space=smem, size = 0x4, offset = 0x4, fixed_abs, tag = 'smem constant byte address 0x4 - core index']
  #allocation1 [shape = 'u32[144,128]{1,0:T(1,128)}', space=vmem, size = 0x12000, scoped, tag = 'internal scratch']
  #allocation2 [shape = 'f32[32,256]{1,0:T(8,128)}', space=vmem, size = 0x8000, scoped, tag = 'scratch operand']
  %s0 = inlined_call_operand.vmem [shape: bf16[32,128], index: 0, kind: input, shape index: {}]
  %s1 = inlined_call_operand.vmem [shape: bf16[128,256], index: 1, kind: input, shape index: {}]
  %s2 = inlined_call_operand.vmem [shape: f32[1,256], index: 2, kind: input, shape index: {}]
  %s3 = inlined_call_operand.vmem [shape: bf16[32,256], index: 3, kind: output, shape index: {}]
  %s4 = sld [smem:[#allocation0]]
  $region30: #{supertagger_forward.43} parent=0
    _
  %s6 = ssub.s32 1, %s4
  %s7 = scalar_select 0, %s6, %s4
  // Predicated region
  $region2: #{supertagger_forward.43} parent=0 // pred_check
    _
  $region3: #{supertagger_forward.43} parent=0 // pred_check_branch
    %9 = sbr.rel (0) target = $region5
  $region4: #{supertagger_forward.43} parent=0 // pred_region
    _
  $region5: #{supertagger_forward.43} parent=0 // pred_fallthru
    _
  // Predicated region
  $region6: #{supertagger_forward.43} parent=0 // pred_check
    _
  $region7: #{supertagger_forward.43} parent=0 // pred_check_branch
    %11 = sbr.rel (0) target = $region9
  $region8: #{supertagger_forward.43} parent=0 // pred_region
    _
  $region9: #{supertagger_forward.43} parent=0 // pred_fallthru
    _
  // Predicated region
  $region10: #{supertagger_forward.43} parent=0 // pred_check
    _
  $region11: #{supertagger_forward.43} parent=0 // pred_check_branch
    %13 = sbr.rel (0) target = $region13
  $region12: #{supertagger_forward.43} parent=0 // pred_region
    _
  $region13: #{supertagger_forward.43} parent=0 // pred_fallthru
    _
  %p15 = scmp.eq.s32.totalorder 0, 0
  // Predicated region
  $region14: #{supertagger_forward.43} parent=0 // pred_check
    %p16 = pneg %p15
  $region15: #{supertagger_forward.43} parent=0 // pred_check_branch
    %18 = sbr.rel (%p16) target = $region17
  $region16: #{supertagger_forward.43} parent=0 // pred_region
    %19 = vst [vmem:[#allocation2] sm:$0xff] 0.0
    %20 = vst [vmem:[#allocation2 + $0x8] sm:$0xff] 0.0
    %21 = vst [vmem:[#allocation2 + $0x10] sm:$0xff] 0.0
    %22 = vst [vmem:[#allocation2 + $0x18] sm:$0xff] 0.0
    %23 = vst [vmem:[#allocation2 + $0x20] sm:$0xff] 0.0
    %24 = vst [vmem:[#allocation2 + $0x28] sm:$0xff] 0.0
    %25 = vst [vmem:[#allocation2 + $0x30] sm:$0xff] 0.0
    %26 = vst [vmem:[#allocation2 + $0x38] sm:$0xff] 0.0
  $region17: #{supertagger_forward.43} parent=0 // pred_fallthru
    _
  %v27 = vld [vmem:[#allocation2] sm:$0xff]
  %v28 = vld [vmem:[#allocation2 + $0x8] sm:$0xff]
  %v29 = vld [vmem:[#allocation2 + $0x10] sm:$0xff]
  %v30 = vld [vmem:[#allocation2 + $0x18] sm:$0xff]
  %v31 = vld [vmem:[#allocation2 + $0x20] sm:$0xff]
  %v32 = vld [vmem:[#allocation2 + $0x28] sm:$0xff]
  %v33 = vld [vmem:[#allocation2 + $0x30] sm:$0xff]
  %v34 = vld [vmem:[#allocation2 + $0x38] sm:$0xff]
  %v35 = vld [vmem:[%s0] sm:$0xf]
  %v36 = vld [vmem:[%s0 + $0x4] sm:$0xf]
  %v37 = vld [vmem:[%s0 + $0x8] sm:$0xf]
  %v38 = vld [vmem:[%s0 + $0xc] sm:$0xf]
  %v39 = vld [vmem:[%s1] sm:$0xff]
  %v40 = vld [vmem:[%s1 + $0x8] sm:$0xff]
  %v41 = vld [vmem:[%s1 + $0x10] sm:$0xff]
  %v42 = vld [vmem:[%s1 + $0x18] sm:$0xff]
  %v43 = vld [vmem:[%s1 + $0x20] sm:$0xff]
  %v44 = vld [vmem:[%s1 + $0x28] sm:$0xff]
  %v45 = vld [vmem:[%s1 + $0x30] sm:$0xff]
  %v46 = vld [vmem:[%s1 + $0x38] sm:$0xff]
  %v47 = vld [vmem:[%s1 + $0x40] sm:$0xff]
  %v48 = vld [vmem:[%s1 + $0x48] sm:$0xff]
  %v49 = vld [vmem:[%s1 + $0x50] sm:$0xff]
  %v50 = vld [vmem:[%s1 + $0x58] sm:$0xff]
  %v51 = vld [vmem:[%s1 + $0x60] sm:$0xff]
  %v52 = vld [vmem:[%s1 + $0x68] sm:$0xff]
  %v53 = vld [vmem:[%s1 + $0x70] sm:$0xff]
  %v54 = vld [vmem:[%s1 + $0x78] sm:$0xff]
  %v59 = vunpack.c.l.b16 %v35
  %v60 = vunpack.c.l.b16 %v36
  %v61 = vunpack.c.l.b16 %v37
  %v62 = vunpack.c.l.b16 %v38
  %v63 = vpack.c.b16 %v60, %v59
  %v64 = vpack.c.b16 %v62, %v61
  %v83 = vunpack.c.l.b16 %v39
  %v84 = vunpack.c.h.b16 %v39
  %v85 = vunpack.c.l.b16 %v40
  %v86 = vunpack.c.h.b16 %v40
  %v87 = vunpack.c.l.b16 %v41
  %v88 = vunpack.c.h.b16 %v41
  %v89 = vunpack.c.l.b16 %v42
  %v90 = vunpack.c.h.b16 %v42
  %v91 = vunpack.c.l.b16 %v43
  %v92 = vunpack.c.h.b16 %v43
  %v93 = vunpack.c.l.b16 %v44
  %v94 = vunpack.c.h.b16 %v44
  %v95 = vunpack.c.l.b16 %v45
  %v96 = vunpack.c.h.b16 %v45
  %v97 = vunpack.c.l.b16 %v46
  %v98 = vunpack.c.h.b16 %v46
  %v99 = vunpack.c.l.b16 %v47
  %v100 = vunpack.c.h.b16 %v47
  %v101 = vunpack.c.l.b16 %v48
  %v102 = vunpack.c.h.b16 %v48
  %v103 = vunpack.c.l.b16 %v49
  %v104 = vunpack.c.h.b16 %v49
  %v105 = vunpack.c.l.b16 %v50
  %v106 = vunpack.c.h.b16 %v50
  %v107 = vunpack.c.l.b16 %v51
  %v108 = vunpack.c.h.b16 %v51
  %v109 = vunpack.c.l.b16 %v52
  %v110 = vunpack.c.h.b16 %v52
  %v111 = vunpack.c.l.b16 %v53
  %v112 = vunpack.c.h.b16 %v53
  %v113 = vunpack.c.l.b16 %v54
  %v114 = vunpack.c.h.b16 %v54
  %v115 = vpack.c.b16 %v85, %v83
  %v116 = vpack.c.b16 %v86, %v84
  %v117 = vpack.c.b16 %v89, %v87
  %v118 = vpack.c.b16 %v90, %v88
  %v119 = vpack.c.b16 %v93, %v91
  %v120 = vpack.c.b16 %v94, %v92
  %v121 = vpack.c.b16 %v97, %v95
  %v122 = vpack.c.b16 %v98, %v96
  %v123 = vpack.c.b16 %v101, %v99
  %v124 = vpack.c.b16 %v102, %v100
  %v125 = vpack.c.b16 %v105, %v103
  %v126 = vpack.c.b16 %v106, %v104
  %v127 = vpack.c.b16 %v109, %v107
  %v128 = vpack.c.b16 %v110, %v108
  %v129 = vpack.c.b16 %v113, %v111
  %v130 = vpack.c.b16 %v114, %v112
  %147 = vmatprep.subr.bf16.mxu0 %v130
  %148 = vmatpush1.bf16.msra.mxu0 %v129
  %149 = vmatprep.subr.bf16.mxu0 %v128
  %150 = vmatpush1.bf16.msra.mxu0 %v127
  %151 = vmatprep.subr.bf16.mxu0 %v126
  %152 = vmatpush1.bf16.msra.mxu0 %v125
  %153 = vmatprep.subr.bf16.mxu0 %v124
  %154 = vmatpush1.bf16.msra.mxu0 %v123
  %155 = vmatprep.subr.bf16.mxu0 %v122
  %156 = vmatpush1.bf16.msra.mxu0 %v121
  %157 = vmatprep.subr.bf16.mxu0 %v120
  %158 = vmatpush1.bf16.msra.mxu0 %v119
  %159 = vmatprep.subr.bf16.mxu0 %v118
  %160 = vmatpush1.bf16.msra.mxu0 %v117
  %161 = vmatprep.subr.bf16.mxu0 %v116
  %162 = vmatpush1.bf16.msra.mxu0 %v115
  %163 = vmatprep.subr.bf16.mxu0 0
  %164 = vmatpush2.bf16.msra.mxu0 0
  %165 = vmatprep.subr.bf16.mxu0 0
  %166 = vmatpush2.bf16.msra.mxu0 0
  %167 = vmatprep.subr.bf16.mxu0 0
  %168 = vmatpush2.bf16.msra.mxu0 0
  %169 = vmatprep.subr.bf16.mxu0 0
  %170 = vmatpush2.bf16.msra.mxu0 0
  %171 = vmatprep.subr.bf16.mxu0 0
  %172 = vmatpush2.bf16.msra.mxu0 0
  %173 = vmatprep.subr.bf16.mxu0 0
  %174 = vmatpush2.bf16.msra.mxu0 0
  %175 = vmatprep.subr.bf16.mxu0 0
  %176 = vmatpush2.bf16.msra.mxu0 0
  %177 = vmatprep.subr.bf16.mxu0 0
  %178 = vmatpush2.bf16.msra.mxu0 0
  %179 = vmatprep.mubr.bf16.mxu0 0
  %180 = vmatmul.mubr.bf16.gmra.mxu0 %v63
  %v181 = vpop.f32.mrf.mxu0
  %v182 = vadd.f32 0.0, %v181
  %v183 = vpop.f32.mrf.mxu0
  %v184 = vadd.f32 0.0, %v183
  %v185 = vpop.f32.mrf.mxu0
  %v186 = vadd.f32 0.0, %v185
  %v187 = vpop.f32.mrf.mxu0
  %v188 = vadd.f32 0.0, %v187
  %189 = vmatprep.mubr.bf16.mxu0 0
  %190 = vmatmul.mubr.bf16.gmra.mxu0 %v64
  %v191 = vpop.f32.mrf.mxu0
  %v192 = vadd.f32 0.0, %v191
  %v193 = vpop.f32.mrf.mxu0
  %v194 = vadd.f32 0.0, %v193
  %v195 = vpop.f32.mrf.mxu0
  %v196 = vadd.f32 0.0, %v195
  %v197 = vpop.f32.mrf.mxu0
  %v198 = vadd.f32 0.0, %v197
  %199 = vdwg.mxu0
  %v200 = vadd.f32 %v27, %v182
  %v201 = vadd.f32 %v28, %v184
  %v202 = vadd.f32 %v29, %v186
  %v203 = vadd.f32 %v30, %v188
  %v204 = vadd.f32 %v31, %v192
  %v205 = vadd.f32 %v32, %v194
  %v206 = vadd.f32 %v33, %v196
  %v207 = vadd.f32 %v34, %v198
  %208 = vst [vmem:[#allocation2] sm:$0xff] %v200
  %209 = vst [vmem:[#allocation2 + $0x8] sm:$0xff] %v201
  %210 = vst [vmem:[#allocation2 + $0x10] sm:$0xff] %v202
  %211 = vst [vmem:[#allocation2 + $0x18] sm:$0xff] %v203
  %212 = vst [vmem:[#allocation2 + $0x20] sm:$0xff] %v204
  %213 = vst [vmem:[#allocation2 + $0x28] sm:$0xff] %v205
  %214 = vst [vmem:[#allocation2 + $0x30] sm:$0xff] %v206
  %215 = vst [vmem:[#allocation2 + $0x38] sm:$0xff] %v207
  // Predicated region
  $region18: #{supertagger_forward.43} parent=0 // pred_check
    %p216 = pneg %p15
  $region19: #{supertagger_forward.43} parent=0 // pred_check_branch
    %218 = sbr.rel (%p216) target = $region21
  $region20: #{supertagger_forward.43} parent=0 // pred_region
    %v219 = vld [vmem:[#allocation2] sm:$0xff]
    %v220 = vld [vmem:[#allocation2 + $0x8] sm:$0xff]
    %v221 = vld [vmem:[#allocation2 + $0x10] sm:$0xff]
    %v222 = vld [vmem:[#allocation2 + $0x18] sm:$0xff]
    %v223 = vld [vmem:[#allocation2 + $0x20] sm:$0xff]
    %v224 = vld [vmem:[#allocation2 + $0x28] sm:$0xff]
    %v225 = vld [vmem:[#allocation2 + $0x30] sm:$0xff]
    %v226 = vld [vmem:[#allocation2 + $0x38] sm:$0xff]
    %v227 = vld [vmem:[%s2] sm:$0x3]
    %v229 = vlaneseq
    %v230 = vshrl.u32 %v229, 7
    %v231 = vsub.s32 0, %v230
    %v232 = vrot.slane %v227, %v231
    %v233 = vlaneseq
    %v234 = vshrl.u32 %v233, 7
    %v235 = vsub.s32 1, %v234
    %v236 = vrot.slane %v227, %v235
    %v239 = vadd.f32 %v219, %v232
    %v240 = vadd.f32 %v220, %v236
    %v241 = vadd.f32 %v221, %v232
    %v242 = vadd.f32 %v222, %v236
    %v243 = vadd.f32 %v223, %v232
    %v244 = vadd.f32 %v224, %v236
    %v245 = vadd.f32 %v225, %v232
    %v246 = vadd.f32 %v226, %v236
    %v247 = vmax.f32 %v239, 0.0
    %v248 = vmax.f32 %v240, 0.0
    %v249 = vmax.f32 %v241, 0.0
    %v250 = vmax.f32 %v242, 0.0
    %v251 = vmax.f32 %v243, 0.0
    %v252 = vmax.f32 %v244, 0.0
    %v253 = vmax.f32 %v245, 0.0
    %v254 = vmax.f32 %v246, 0.0
    %v255 = vpack.c.bf16 %v249, %v247
    %v256 = vpack.c.bf16 %v250, %v248
    %v257 = vpack.c.bf16 %v253, %v251
    %v258 = vpack.c.bf16 %v254, %v252
    %v263 = vunpack.c.l.b16 %v255
    %v264 = vunpack.c.l.b16 %v256
    %v265 = vunpack.c.h.b16 %v255
    %v266 = vunpack.c.h.b16 %v256
    %v267 = vunpack.c.l.b16 %v257
    %v268 = vunpack.c.l.b16 %v258
    %v269 = vunpack.c.h.b16 %v257
    %v270 = vunpack.c.h.b16 %v258
    %v271 = vpack.c.b16 %v264, %v263
    %v272 = vpack.c.b16 %v266, %v265
    %v273 = vpack.c.b16 %v268, %v267
    %v274 = vpack.c.b16 %v270, %v269
    %279 = vst [vmem:[%s3] sm:$0xff] %v271
    %280 = vst [vmem:[%s3 + $0x8] sm:$0xff] %v272
    %281 = vst [vmem:[%s3 + $0x10] sm:$0xff] %v273
    %282 = vst [vmem:[%s3 + $0x18] sm:$0xff] %v274
  $region21: #{supertagger_forward.43} parent=0 // pred_fallthru
    _
  // Predicated region
  $region22: #{supertagger_forward.43} parent=0 // pred_check
    _
  $region23: #{supertagger_forward.43} parent=0 // pred_check_branch
    %284 = sbr.rel (0) target = $region25
  $region24: #{supertagger_forward.43} parent=0 // pred_region
    _
  $region25: #{supertagger_forward.43} parent=0 // pred_fallthru
    _
  // Predicated region
  $region26: #{supertagger_forward.43} parent=0 // pred_check
    _
  $region27: #{supertagger_forward.43} parent=0 // pred_check_branch
    %286 = sbr.rel (0) target = $region29
  $region28: #{supertagger_forward.43} parent=0 // pred_region
    _
  $region29: #{supertagger_forward.43} parent=0 // pred_fallthru
    _

// kernel: supertagger_forward.44
$region0: #{supertagger_forward.44}
  #allocation0 [shape = 'u32[]', space=smem, size = 0x4, offset = 0x4, fixed_abs, tag = 'smem constant byte address 0x4 - core index']
  #allocation1 [shape = 'u32[144,128]{1,0:T(1,128)}', space=vmem, size = 0x12000, scoped, tag = 'internal scratch']
  #allocation2 [shape = 'f32[32,128]{1,0:T(8,128)}', space=vmem, size = 0x4000, scoped, tag = 'scratch operand']
  %s0 = inlined_call_operand.vmem [shape: bf16[32,256], index: 0, kind: input, shape index: {}]
  %s1 = inlined_call_operand.vmem [shape: bf16[256,128], index: 1, kind: input, shape index: {}]
  %s2 = inlined_call_operand.vmem [shape: f32[1,128], index: 2, kind: input, shape index: {}]
  %s3 = inlined_call_operand.vmem [shape: bf16[32,128], index: 3, kind: output, shape index: {}]
  %s4 = sld [smem:[#allocation0]]
  $region30: #{supertagger_forward.44} parent=0
    _
  %s6 = ssub.s32 1, %s4
  %s7 = scalar_select 0, %s6, %s4
  // Predicated region
  $region2: #{supertagger_forward.44} parent=0 // pred_check
    _
  $region3: #{supertagger_forward.44} parent=0 // pred_check_branch
    %9 = sbr.rel (0) target = $region5
  $region4: #{supertagger_forward.44} parent=0 // pred_region
    _
  $region5: #{supertagger_forward.44} parent=0 // pred_fallthru
    _
  // Predicated region
  $region6: #{supertagger_forward.44} parent=0 // pred_check
    _
  $region7: #{supertagger_forward.44} parent=0 // pred_check_branch
    %11 = sbr.rel (0) target = $region9
  $region8: #{supertagger_forward.44} parent=0 // pred_region
    _
  $region9: #{supertagger_forward.44} parent=0 // pred_fallthru
    _
  // Predicated region
  $region10: #{supertagger_forward.44} parent=0 // pred_check
    _
  $region11: #{supertagger_forward.44} parent=0 // pred_check_branch
    %13 = sbr.rel (0) target = $region13
  $region12: #{supertagger_forward.44} parent=0 // pred_region
    _
  $region13: #{supertagger_forward.44} parent=0 // pred_fallthru
    _
  %p15 = scmp.eq.s32.totalorder 0, 0
  // Predicated region
  $region14: #{supertagger_forward.44} parent=0 // pred_check
    %p16 = pneg %p15
  $region15: #{supertagger_forward.44} parent=0 // pred_check_branch
    %18 = sbr.rel (%p16) target = $region17
  $region16: #{supertagger_forward.44} parent=0 // pred_region
    %19 = vst [vmem:[#allocation2] sm:$0xff] 0.0
    %20 = vst [vmem:[#allocation2 + $0x8] sm:$0xff] 0.0
    %21 = vst [vmem:[#allocation2 + $0x10] sm:$0xff] 0.0
    %22 = vst [vmem:[#allocation2 + $0x18] sm:$0xff] 0.0
  $region17: #{supertagger_forward.44} parent=0 // pred_fallthru
    _
  %v23 = vld [vmem:[#allocation2] sm:$0xff]
  %v24 = vld [vmem:[#allocation2 + $0x8] sm:$0xff]
  %v25 = vld [vmem:[#allocation2 + $0x10] sm:$0xff]
  %v26 = vld [vmem:[#allocation2 + $0x18] sm:$0xff]
  %v27 = vld [vmem:[%s0] sm:$0xff]
  %v28 = vld [vmem:[%s0 + $0x8] sm:$0xff]
  %v29 = vld [vmem:[%s0 + $0x10] sm:$0xff]
  %v30 = vld [vmem:[%s0 + $0x18] sm:$0xff]
  %v31 = vld [vmem:[%s1] sm:$0xf]
  %v32 = vld [vmem:[%s1 + $0x4] sm:$0xf]
  %v33 = vld [vmem:[%s1 + $0x8] sm:$0xf]
  %v34 = vld [vmem:[%s1 + $0xc] sm:$0xf]
  %v35 = vld [vmem:[%s1 + $0x10] sm:$0xf]
  %v36 = vld [vmem:[%s1 + $0x14] sm:$0xf]
  %v37 = vld [vmem:[%s1 + $0x18] sm:$0xf]
  %v38 = vld [vmem:[%s1 + $0x1c] sm:$0xf]
  %v39 = vld [vmem:[%s1 + $0x20] sm:$0xf]
  %v40 = vld [vmem:[%s1 + $0x24] sm:$0xf]
  %v41 = vld [vmem:[%s1 + $0x28] sm:$0xf]
  %v42 = vld [vmem:[%s1 + $0x2c] sm:$0xf]
  %v43 = vld [vmem:[%s1 + $0x30] sm:$0xf]
  %v44 = vld [vmem:[%s1 + $0x34] sm:$0xf]
  %v45 = vld [vmem:[%s1 + $0x38] sm:$0xf]
  %v46 = vld [vmem:[%s1 + $0x3c] sm:$0xf]
  %v47 = vld [vmem:[%s1 + $0x40] sm:$0xf]
  %v48 = vld [vmem:[%s1 + $0x44] sm:$0xf]
  %v49 = vld [vmem:[%s1 + $0x48] sm:$0xf]
  %v50 = vld [vmem:[%s1 + $0x4c] sm:$0xf]
  %v51 = vld [vmem:[%s1 + $0x50] sm:$0xf]
  %v52 = vld [vmem:[%s1 + $0x54] sm:$0xf]
  %v53 = vld [vmem:[%s1 + $0x58] sm:$0xf]
  %v54 = vld [vmem:[%s1 + $0x5c] sm:$0xf]
  %v55 = vld [vmem:[%s1 + $0x60] sm:$0xf]
  %v56 = vld [vmem:[%s1 + $0x64] sm:$0xf]
  %v57 = vld [vmem:[%s1 + $0x68] sm:$0xf]
  %v58 = vld [vmem:[%s1 + $0x6c] sm:$0xf]
  %v59 = vld [vmem:[%s1 + $0x70] sm:$0xf]
  %v60 = vld [vmem:[%s1 + $0x74] sm:$0xf]
  %v61 = vld [vmem:[%s1 + $0x78] sm:$0xf]
  %v62 = vld [vmem:[%s1 + $0x7c] sm:$0xf]
  %v67 = vunpack.c.l.b16 %v27
  %v68 = vunpack.c.h.b16 %v27
  %v69 = vunpack.c.l.b16 %v28
  %v70 = vunpack.c.h.b16 %v28
  %v71 = vunpack.c.l.b16 %v29
  %v72 = vunpack.c.h.b16 %v29
  %v73 = vunpack.c.l.b16 %v30
  %v74 = vunpack.c.h.b16 %v30
  %v75 = vpack.c.b16 %v69, %v67
  %v76 = vpack.c.b16 %v70, %v68
  %v77 = vpack.c.b16 %v73, %v71
  %v78 = vpack.c.b16 %v74, %v72
  %v115 = vunpack.c.l.b16 %v31
  %v116 = vunpack.c.l.b16 %v32
  %v117 = vunpack.c.l.b16 %v33
  %v118 = vunpack.c.l.b16 %v34
  %v119 = vunpack.c.l.b16 %v35
  %v120 = vunpack.c.l.b16 %v36
  %v121 = vunpack.c.l.b16 %v37
  %v122 = vunpack.c.l.b16 %v38
  %v123 = vunpack.c.l.b16 %v39
  %v124 = vunpack.c.l.b16 %v40
  %v125 = vunpack.c.l.b16 %v41
  %v126 = vunpack.c.l.b16 %v42
  %v127 = vunpack.c.l.b16 %v43
  %v128 = vunpack.c.l.b16 %v44
  %v129 = vunpack.c.l.b16 %v45
  %v130 = vunpack.c.l.b16 %v46
  %v131 = vunpack.c.l.b16 %v47
  %v132 = vunpack.c.l.b16 %v48
  %v133 = vunpack.c.l.b16 %v49
  %v134 = vunpack.c.l.b16 %v50
  %v135 = vunpack.c.l.b16 %v51
  %v136 = vunpack.c.l.b16 %v52
  %v137 = vunpack.c.l.b16 %v53
  %v138 = vunpack.c.l.b16 %v54
  %v139 = vunpack.c.l.b16 %v55
  %v140 = vunpack.c.l.b16 %v56
  %v141 = vunpack.c.l.b16 %v57
  %v142 = vunpack.c.l.b16 %v58
  %v143 = vunpack.c.l.b16 %v59
  %v144 = vunpack.c.l.b16 %v60
  %v145 = vunpack.c.l.b16 %v61
  %v146 = vunpack.c.l.b16 %v62
  %v147 = vpack.c.b16 %v116, %v115
  %v148 = vpack.c.b16 %v118, %v117
  %v149 = vpack.c.b16 %v120, %v119
  %v150 = vpack.c.b16 %v122, %v121
  %v151 = vpack.c.b16 %v124, %v123
  %v152 = vpack.c.b16 %v126, %v125
  %v153 = vpack.c.b16 %v128, %v127
  %v154 = vpack.c.b16 %v130, %v129
  %v155 = vpack.c.b16 %v132, %v131
  %v156 = vpack.c.b16 %v134, %v133
  %v157 = vpack.c.b16 %v136, %v135
  %v158 = vpack.c.b16 %v138, %v137
  %v159 = vpack.c.b16 %v140, %v139
  %v160 = vpack.c.b16 %v142, %v141
  %v161 = vpack.c.b16 %v144, %v143
  %v162 = vpack.c.b16 %v146, %v145
  %179 = vmatprep.subr.bf16.mxu0 0
  %180 = vmatpush1.bf16.msra.mxu0 %v154
  %181 = vmatprep.subr.bf16.mxu0 0
  %182 = vmatpush1.bf16.msra.mxu0 %v153
  %183 = vmatprep.subr.bf16.mxu0 0
  %184 = vmatpush1.bf16.msra.mxu0 %v152
  %185 = vmatprep.subr.bf16.mxu0 0
  %186 = vmatpush1.bf16.msra.mxu0 %v151
  %187 = vmatprep.subr.bf16.mxu0 0
  %188 = vmatpush1.bf16.msra.mxu0 %v150
  %189 = vmatprep.subr.bf16.mxu0 0
  %190 = vmatpush1.bf16.msra.mxu0 %v149
  %191 = vmatprep.subr.bf16.mxu0 0
  %192 = vmatpush1.bf16.msra.mxu0 %v148
  %193 = vmatprep.subr.bf16.mxu0 0
  %194 = vmatpush1.bf16.msra.mxu0 %v147
  %195 = vmatprep.subr.bf16.mxu0 0
  %196 = vmatpush2.bf16.msra.mxu0 %v162
  %197 = vmatprep.subr.bf16.mxu0 0
  %198 = vmatpush2.bf16.msra.mxu0 %v161
  %199 = vmatprep.subr.bf16.mxu0 0
  %200 = vmatpush2.bf16.msra.mxu0 %v160
  %201 = vmatprep.subr.bf16.mxu0 0
  %202 = vmatpush2.bf16.msra.mxu0 %v159
  %203 = vmatprep.subr.bf16.mxu0 0
  %204 = vmatpush2.bf16.msra.mxu0 %v158
  %205 = vmatprep.subr.bf16.mxu0 0
  %206 = vmatpush2.bf16.msra.mxu0 %v157
  %207 = vmatprep.subr.bf16.mxu0 0
  %208 = vmatpush2.bf16.msra.mxu0 %v156
  %209 = vmatprep.subr.bf16.mxu0 0
  %210 = vmatpush2.bf16.msra.mxu0 %v155
  %211 = vmatprep.mubr.bf16.mxu0 %v76
  %212 = vmatmul.mubr.bf16.gmra.mxu0 %v75
  %v213 = vpop.f32.mrf.mxu0
  %v214 = vadd.f32 0.0, %v213
  %v215 = vpop.f32.mrf.mxu0
  %v216 = vpop.f32.mrf.mxu0
  %v217 = vadd.f32 0.0, %v216
  %v218 = vpop.f32.mrf.mxu0
  %219 = vmatprep.mubr.bf16.mxu0 %v78
  %220 = vmatmul.mubr.bf16.gmra.mxu0 %v77
  %v221 = vpop.f32.mrf.mxu0
  %v222 = vadd.f32 0.0, %v221
  %v223 = vpop.f32.mrf.mxu0
  %v224 = vpop.f32.mrf.mxu0
  %v225 = vadd.f32 0.0, %v224
  %v226 = vpop.f32.mrf.mxu0
  %227 = vdwg.mxu0
  %v228 = vadd.f32 %v23, %v214
  %v229 = vadd.f32 %v24, %v217
  %v230 = vadd.f32 %v25, %v222
  %v231 = vadd.f32 %v26, %v225
  %232 = vst [vmem:[#allocation2] sm:$0xff] %v228
  %233 = vst [vmem:[#allocation2 + $0x8] sm:$0xff] %v229
  %234 = vst [vmem:[#allocation2 + $0x10] sm:$0xff] %v230
  %235 = vst [vmem:[#allocation2 + $0x18] sm:$0xff] %v231
  // Predicated region
  $region18: #{supertagger_forward.44} parent=0 // pred_check
    %p236 = pneg %p15
  $region19: #{supertagger_forward.44} parent=0 // pred_check_branch
    %238 = sbr.rel (%p236) target = $region21
  $region20: #{supertagger_forward.44} parent=0 // pred_region
    %v239 = vld [vmem:[#allocation2] sm:$0xff]
    %v240 = vld [vmem:[#allocation2 + $0x8] sm:$0xff]
    %v241 = vld [vmem:[#allocation2 + $0x10] sm:$0xff]
    %v242 = vld [vmem:[#allocation2 + $0x18] sm:$0xff]
    %v243 = vld [vmem:[%s2] sm:$0x1]
    %v245 = vlaneseq
    %v246 = vshrl.u32 %v245, 7
    %v247 = vsub.s32 0, %v246
    %v248 = vrot.slane %v243, %v247
    %v250 = vadd.f32 %v239, %v248
    %v251 = vadd.f32 %v240, %v248
    %v252 = vadd.f32 %v241, %v248
    %v253 = vadd.f32 %v242, %v248
    %v254 = vpack.c.bf16 %v251, %v250
    %v255 = vpack.c.bf16 %v253, %v252
    %v258 = vunpack.c.l.b16 %v254
    %v259 = vunpack.c.h.b16 %v254
    %v260 = vunpack.c.l.b16 %v255
    %v261 = vunpack.c.h.b16 %v255
    %v262 = vpack.c.b16 %v258, %v258
    %v263 = vpack.c.b16 %v259, %v259
    %v264 = vpack.c.b16 %v260, %v260
    %v265 = vpack.c.b16 %v261, %v261
    %270 = vst [vmem:[%s3] sm:$0xf] %v262
    %271 = vst [vmem:[%s3 + $0x4] sm:$0xf] %v263
    %272 = vst [vmem:[%s3 + $0x8] sm:$0xf] %v264
    %273 = vst [vmem:[%s3 + $0xc] sm:$0xf] %v265
  $region21: #{supertagger_forward.44} parent=0 // pred_fallthru
    _
  // Predicated region
  $region22: #{supertagger_forward.44} parent=0 // pred_check
    _
  $region23: #{supertagger_forward.44} parent=0 // pred_check_branch
    %275 = sbr.rel (0) target = $region25
  $region24: #{supertagger_forward.44} parent=0 // pred_region
    _
  $region25: #{supertagger_forward.44} parent=0 // pred_fallthru
    _
  // Predicated region
  $region26: #{supertagger_forward.44} parent=0 // pred_check
    _
  $region27: #{supertagger_forward.44} parent=0 // pred_check_branch
    %277 = sbr.rel (0) target = $region29
  $region28: #{supertagger_forward.44} parent=0 // pred_region
    _
  $region29: #{supertagger_forward.44} parent=0 // pred_fallthru
    _

// kernel: supertagger_forward.58
$region0: #{supertagger_forward.58}
  #allocation0 [shape = 'u32[]', space=smem, size = 0x4, offset = 0x4, fixed_abs, tag = 'smem constant byte address 0x4 - core index']
  #allocation1 [shape = 'u32[144,128]{1,0:T(1,128)}', space=vmem, size = 0x12000, scoped, tag = 'internal scratch']
  #allocation2 [shape = 'f32[32,256]{1,0:T(8,128)}', space=vmem, size = 0x8000, scoped, tag = 'scratch operand']
  %s0 = inlined_call_operand.vmem [shape: bf16[32,128], index: 0, kind: input, shape index: {}]
  %s1 = inlined_call_operand.vmem [shape: bf16[128,256], index: 1, kind: input, shape index: {}]
  %s2 = inlined_call_operand.vmem [shape: f32[1,256], index: 2, kind: input, shape index: {}]
  %s3 = inlined_call_operand.vmem [shape: bf16[32,256], index: 3, kind: output, shape index: {}]
  %s4 = sld [smem:[#allocation0]]
  $region30: #{supertagger_forward.58} parent=0
    _
  %s6 = ssub.s32 1, %s4
  %s7 = scalar_select 0, %s6, %s4
  // Predicated region
  $region2: #{supertagger_forward.58} parent=0 // pred_check
    _
  $region3: #{supertagger_forward.58} parent=0 // pred_check_branch
    %9 = sbr.rel (0) target = $region5
  $region4: #{supertagger_forward.58} parent=0 // pred_region
    _
  $region5: #{supertagger_forward.58} parent=0 // pred_fallthru
    _
  // Predicated region
  $region6: #{supertagger_forward.58} parent=0 // pred_check
    _
  $region7: #{supertagger_forward.58} parent=0 // pred_check_branch
    %11 = sbr.rel (0) target = $region9
  $region8: #{supertagger_forward.58} parent=0 // pred_region
    _
  $region9: #{supertagger_forward.58} parent=0 // pred_fallthru
    _
  // Predicated region
  $region10: #{supertagger_forward.58} parent=0 // pred_check
    _
  $region11: #{supertagger_forward.58} parent=0 // pred_check_branch
    %13 = sbr.rel (0) target = $region13
  $region12: #{supertagger_forward.58} parent=0 // pred_region
    _
  $region13: #{supertagger_forward.58} parent=0 // pred_fallthru
    _
  %p15 = scmp.eq.s32.totalorder 0, 0
  // Predicated region
  $region14: #{supertagger_forward.58} parent=0 // pred_check
    %p16 = pneg %p15
  $region15: #{supertagger_forward.58} parent=0 // pred_check_branch
    %18 = sbr.rel (%p16) target = $region17
  $region16: #{supertagger_forward.58} parent=0 // pred_region
    %19 = vst [vmem:[#allocation2] sm:$0xff] 0.0
    %20 = vst [vmem:[#allocation2 + $0x8] sm:$0xff] 0.0
    %21 = vst [vmem:[#allocation2 + $0x10] sm:$0xff] 0.0
    %22 = vst [vmem:[#allocation2 + $0x18] sm:$0xff] 0.0
    %23 = vst [vmem:[#allocation2 + $0x20] sm:$0xff] 0.0
    %24 = vst [vmem:[#allocation2 + $0x28] sm:$0xff] 0.0
    %25 = vst [vmem:[#allocation2 + $0x30] sm:$0xff] 0.0
    %26 = vst [vmem:[#allocation2 + $0x38] sm:$0xff] 0.0
  $region17: #{supertagger_forward.58} parent=0 // pred_fallthru
    _
  %v27 = vld [vmem:[#allocation2] sm:$0xff]
  %v28 = vld [vmem:[#allocation2 + $0x8] sm:$0xff]
  %v29 = vld [vmem:[#allocation2 + $0x10] sm:$0xff]
  %v30 = vld [vmem:[#allocation2 + $0x18] sm:$0xff]
  %v31 = vld [vmem:[#allocation2 + $0x20] sm:$0xff]
  %v32 = vld [vmem:[#allocation2 + $0x28] sm:$0xff]
  %v33 = vld [vmem:[#allocation2 + $0x30] sm:$0xff]
  %v34 = vld [vmem:[#allocation2 + $0x38] sm:$0xff]
  %v35 = vld [vmem:[%s0] sm:$0xf]
  %v36 = vld [vmem:[%s0 + $0x4] sm:$0xf]
  %v37 = vld [vmem:[%s0 + $0x8] sm:$0xf]
  %v38 = vld [vmem:[%s0 + $0xc] sm:$0xf]
  %v39 = vld [vmem:[%s1] sm:$0xff]
  %v40 = vld [vmem:[%s1 + $0x8] sm:$0xff]
  %v41 = vld [vmem:[%s1 + $0x10] sm:$0xff]
  %v42 = vld [vmem:[%s1 + $0x18] sm:$0xff]
  %v43 = vld [vmem:[%s1 + $0x20] sm:$0xff]
  %v44 = vld [vmem:[%s1 + $0x28] sm:$0xff]
  %v45 = vld [vmem:[%s1 + $0x30] sm:$0xff]
  %v46 = vld [vmem:[%s1 + $0x38] sm:$0xff]
  %v47 = vld [vmem:[%s1 + $0x40] sm:$0xff]
  %v48 = vld [vmem:[%s1 + $0x48] sm:$0xff]
  %v49 = vld [vmem:[%s1 + $0x50] sm:$0xff]
  %v50 = vld [vmem:[%s1 + $0x58] sm:$0xff]
  %v51 = vld [vmem:[%s1 + $0x60] sm:$0xff]
  %v52 = vld [vmem:[%s1 + $0x68] sm:$0xff]
  %v53 = vld [vmem:[%s1 + $0x70] sm:$0xff]
  %v54 = vld [vmem:[%s1 + $0x78] sm:$0xff]
  %v59 = vunpack.c.l.b16 %v35
  %v60 = vunpack.c.l.b16 %v36
  %v61 = vunpack.c.l.b16 %v37
  %v62 = vunpack.c.l.b16 %v38
  %v63 = vpack.c.b16 %v60, %v59
  %v64 = vpack.c.b16 %v62, %v61
  %v83 = vunpack.c.l.b16 %v39
  %v84 = vunpack.c.h.b16 %v39
  %v85 = vunpack.c.l.b16 %v40
  %v86 = vunpack.c.h.b16 %v40
  %v87 = vunpack.c.l.b16 %v41
  %v88 = vunpack.c.h.b16 %v41
  %v89 = vunpack.c.l.b16 %v42
  %v90 = vunpack.c.h.b16 %v42
  %v91 = vunpack.c.l.b16 %v43
  %v92 = vunpack.c.h.b16 %v43
  %v93 = vunpack.c.l.b16 %v44
  %v94 = vunpack.c.h.b16 %v44
  %v95 = vunpack.c.l.b16 %v45
  %v96 = vunpack.c.h.b16 %v45
  %v97 = vunpack.c.l.b16 %v46
  %v98 = vunpack.c.h.b16 %v46
  %v99 = vunpack.c.l.b16 %v47
  %v100 = vunpack.c.h.b16 %v47
  %v101 = vunpack.c.l.b16 %v48
  %v102 = vunpack.c.h.b16 %v48
  %v103 = vunpack.c.l.b16 %v49
  %v104 = vunpack.c.h.b16 %v49
  %v105 = vunpack.c.l.b16 %v50
  %v106 = vunpack.c.h.b16 %v50
  %v107 = vunpack.c.l.b16 %v51
  %v108 = vunpack.c.h.b16 %v51
  %v109 = vunpack.c.l.b16 %v52
  %v110 = vunpack.c.h.b16 %v52
  %v111 = vunpack.c.l.b16 %v53
  %v112 = vunpack.c.h.b16 %v53
  %v113 = vunpack.c.l.b16 %v54
  %v114 = vunpack.c.h.b16 %v54
  %v115 = vpack.c.b16 %v85, %v83
  %v116 = vpack.c.b16 %v86, %v84
  %v117 = vpack.c.b16 %v89, %v87
  %v118 = vpack.c.b16 %v90, %v88
  %v119 = vpack.c.b16 %v93, %v91
  %v120 = vpack.c.b16 %v94, %v92
  %v121 = vpack.c.b16 %v97, %v95
  %v122 = vpack.c.b16 %v98, %v96
  %v123 = vpack.c.b16 %v101, %v99
  %v124 = vpack.c.b16 %v102, %v100
  %v125 = vpack.c.b16 %v105, %v103
  %v126 = vpack.c.b16 %v106, %v104
  %v127 = vpack.c.b16 %v109, %v107
  %v128 = vpack.c.b16 %v110, %v108
  %v129 = vpack.c.b16 %v113, %v111
  %v130 = vpack.c.b16 %v114, %v112
  %147 = vmatprep.subr.bf16.mxu0 %v130
  %148 = vmatpush1.bf16.msra.mxu0 %v129
  %149 = vmatprep.subr.bf16.mxu0 %v128
  %150 = vmatpush1.bf16.msra.mxu0 %v127
  %151 = vmatprep.subr.bf16.mxu0 %v126
  %152 = vmatpush1.bf16.msra.mxu0 %v125
  %153 = vmatprep.subr.bf16.mxu0 %v124
  %154 = vmatpush1.bf16.msra.mxu0 %v123
  %155 = vmatprep.subr.bf16.mxu0 %v122
  %156 = vmatpush1.bf16.msra.mxu0 %v121
  %157 = vmatprep.subr.bf16.mxu0 %v120
  %158 = vmatpush1.bf16.msra.mxu0 %v119
  %159 = vmatprep.subr.bf16.mxu0 %v118
  %160 = vmatpush1.bf16.msra.mxu0 %v117
  %161 = vmatprep.subr.bf16.mxu0 %v116
  %162 = vmatpush1.bf16.msra.mxu0 %v115
  %163 = vmatprep.subr.bf16.mxu0 0
  %164 = vmatpush2.bf16.msra.mxu0 0
  %165 = vmatprep.subr.bf16.mxu0 0
  %166 = vmatpush2.bf16.msra.mxu0 0
  %167 = vmatprep.subr.bf16.mxu0 0
  %168 = vmatpush2.bf16.msra.mxu0 0
  %169 = vmatprep.subr.bf16.mxu0 0
  %170 = vmatpush2.bf16.msra.mxu0 0
  %171 = vmatprep.subr.bf16.mxu0 0
  %172 = vmatpush2.bf16.msra.mxu0 0
  %173 = vmatprep.subr.bf16.mxu0 0
  %174 = vmatpush2.bf16.msra.mxu0 0
  %175 = vmatprep.subr.bf16.mxu0 0
  %176 = vmatpush2.bf16.msra.mxu0 0
  %177 = vmatprep.subr.bf16.mxu0 0
  %178 = vmatpush2.bf16.msra.mxu0 0
  %179 = vmatprep.mubr.bf16.mxu0 0
  %180 = vmatmul.mubr.bf16.gmra.mxu0 %v63
  %v181 = vpop.f32.mrf.mxu0
  %v182 = vadd.f32 0.0, %v181
  %v183 = vpop.f32.mrf.mxu0
  %v184 = vadd.f32 0.0, %v183
  %v185 = vpop.f32.mrf.mxu0
  %v186 = vadd.f32 0.0, %v185
  %v187 = vpop.f32.mrf.mxu0
  %v188 = vadd.f32 0.0, %v187
  %189 = vmatprep.mubr.bf16.mxu0 0
  %190 = vmatmul.mubr.bf16.gmra.mxu0 %v64
  %v191 = vpop.f32.mrf.mxu0
  %v192 = vadd.f32 0.0, %v191
  %v193 = vpop.f32.mrf.mxu0
  %v194 = vadd.f32 0.0, %v193
  %v195 = vpop.f32.mrf.mxu0
  %v196 = vadd.f32 0.0, %v195
  %v197 = vpop.f32.mrf.mxu0
  %v198 = vadd.f32 0.0, %v197
  %199 = vdwg.mxu0
  %v200 = vadd.f32 %v27, %v182
  %v201 = vadd.f32 %v28, %v184
  %v202 = vadd.f32 %v29, %v186
  %v203 = vadd.f32 %v30, %v188
  %v204 = vadd.f32 %v31, %v192
  %v205 = vadd.f32 %v32, %v194
  %v206 = vadd.f32 %v33, %v196
  %v207 = vadd.f32 %v34, %v198
  %208 = vst [vmem:[#allocation2] sm:$0xff] %v200
  %209 = vst [vmem:[#allocation2 + $0x8] sm:$0xff] %v201
  %210 = vst [vmem:[#allocation2 + $0x10] sm:$0xff] %v202
  %211 = vst [vmem:[#allocation2 + $0x18] sm:$0xff] %v203
  %212 = vst [vmem:[#allocation2 + $0x20] sm:$0xff] %v204
  %213 = vst [vmem:[#allocation2 + $0x28] sm:$0xff] %v205
  %214 = vst [vmem:[#allocation2 + $0x30] sm:$0xff] %v206
  %215 = vst [vmem:[#allocation2 + $0x38] sm:$0xff] %v207
  // Predicated region
  $region18: #{supertagger_forward.58} parent=0 // pred_check
    %p216 = pneg %p15
  $region19: #{supertagger_forward.58} parent=0 // pred_check_branch
    %218 = sbr.rel (%p216) target = $region21
  $region20: #{supertagger_forward.58} parent=0 // pred_region
    %v219 = vld [vmem:[#allocation2] sm:$0xff]
    %v220 = vld [vmem:[#allocation2 + $0x8] sm:$0xff]
    %v221 = vld [vmem:[#allocation2 + $0x10] sm:$0xff]
    %v222 = vld [vmem:[#allocation2 + $0x18] sm:$0xff]
    %v223 = vld [vmem:[#allocation2 + $0x20] sm:$0xff]
    %v224 = vld [vmem:[#allocation2 + $0x28] sm:$0xff]
    %v225 = vld [vmem:[#allocation2 + $0x30] sm:$0xff]
    %v226 = vld [vmem:[#allocation2 + $0x38] sm:$0xff]
    %v227 = vld [vmem:[%s2] sm:$0x3]
    %v229 = vlaneseq
    %v230 = vshrl.u32 %v229, 7
    %v231 = vsub.s32 0, %v230
    %v232 = vrot.slane %v227, %v231
    %v233 = vlaneseq
    %v234 = vshrl.u32 %v233, 7
    %v235 = vsub.s32 1, %v234
    %v236 = vrot.slane %v227, %v235
    %v239 = vadd.f32 %v219, %v232
    %v240 = vadd.f32 %v220, %v236
    %v241 = vadd.f32 %v221, %v232
    %v242 = vadd.f32 %v222, %v236
    %v243 = vadd.f32 %v223, %v232
    %v244 = vadd.f32 %v224, %v236
    %v245 = vadd.f32 %v225, %v232
    %v246 = vadd.f32 %v226, %v236
    %v247 = vpack.c.bf16 %v241, %v239
    %v248 = vpack.c.bf16 %v242, %v240
    %v249 = vpack.c.bf16 %v245, %v243
    %v250 = vpack.c.bf16 %v246, %v244
    %v255 = vunpack.c.l.b16 %v247
    %v256 = vunpack.c.l.b16 %v248
    %v257 = vunpack.c.h.b16 %v247
    %v258 = vunpack.c.h.b16 %v248
    %v259 = vunpack.c.l.b16 %v249
    %v260 = vunpack.c.l.b16 %v250
    %v261 = vunpack.c.h.b16 %v249
    %v262 = vunpack.c.h.b16 %v250
    %v263 = vpack.c.b16 %v256, %v255
    %v264 = vpack.c.b16 %v258, %v257
    %v265 = vpack.c.b16 %v260, %v259
    %v266 = vpack.c.b16 %v262, %v261
    %271 = vst [vmem:[%s3] sm:$0xff] %v263
    %272 = vst [vmem:[%s3 + $0x8] sm:$0xff] %v264
    %273 = vst [vmem:[%s3 + $0x10] sm:$0xff] %v265
    %274 = vst [vmem:[%s3 + $0x18] sm:$0xff] %v266
  $region21: #{supertagger_forward.58} parent=0 // pred_fallthru
    _
  // Predicated region
  $region22: #{supertagger_forward.58} parent=0 // pred_check
    _
  $region23: #{supertagger_forward.58} parent=0 // pred_check_branch
    %276 = sbr.rel (0) target = $region25
  $region24: #{supertagger_forward.58} parent=0 // pred_region
    _
  $region25: #{supertagger_forward.58} parent=0 // pred_fallthru
    _
  // Predicated region
  $region26: #{supertagger_forward.58} parent=0 // pred_check
    _
  $region27: #{supertagger_forward.58} parent=0 // pred_check_branch
    %278 = sbr.rel (0) target = $region29
  $region28: #{supertagger_forward.58} parent=0 // pred_region
    _
  $region29: #{supertagger_forward.58} parent=0 // pred_fallthru
    _

// kernel: supertagger_forward.77
$region0: #{supertagger_forward.77}
  #allocation0 [shape = 'u32[]', space=smem, size = 0x4, offset = 0x4, fixed_abs, tag = 'smem constant byte address 0x4 - core index']
  #allocation1 [shape = 'u32[144,128]{1,0:T(1,128)}', space=vmem, size = 0x12000, scoped, tag = 'internal scratch']
  #allocation2 [shape = 'f32[32,128]{1,0:T(8,128)}', space=vmem, size = 0x4000, scoped, tag = 'scratch operand']
  %s0 = inlined_call_operand.vmem [shape: bf16[32,128], index: 0, kind: input, shape index: {}]
  %s1 = inlined_call_operand.vmem [shape: bf16[128,128], index: 1, kind: input, shape index: {}]
  %s2 = inlined_call_operand.vmem [shape: f32[1,128], index: 2, kind: input, shape index: {}]
  %s3 = inlined_call_operand.hbm [shape: f32[32,128], index: 3, kind: output, shape index: {}]
  %s4 = sld [smem:[#allocation0]]
  $region30: #{supertagger_forward.77} parent=0
    _
  %s6 = ssub.s32 1, %s4
  %s7 = scalar_select 0, %s6, %s4
  $region1: #{supertagger_forward.77} parent=0
    #allocation3 [shape = 'u8[16384]{0}', space=vmem, size = 0x4000, scoped, tag = 'output window, operand 0, single buffered']
    #allocation4 [shape = 's32[1]{0}', space=sflag, size = 0x4, scoped, tag = 'scoped memory for supertagger_forward.77']
    %8 = vsyncpa [#allocation4], 0
    // Predicated region
    $region2: #{supertagger_forward.77} parent=1 // pred_check
      _
    $region3: #{supertagger_forward.77} parent=1 // pred_check_branch
      %10 = sbr.rel (0) target = $region5
    $region4: #{supertagger_forward.77} parent=1 // pred_region
      _
    $region5: #{supertagger_forward.77} parent=1 // pred_fallthru
      _
    // Predicated region
    $region6: #{supertagger_forward.77} parent=1 // pred_check
      _
    $region7: #{supertagger_forward.77} parent=1 // pred_check_branch
      %12 = sbr.rel (0) target = $region9
    $region8: #{supertagger_forward.77} parent=1 // pred_region
      _
    $region9: #{supertagger_forward.77} parent=1 // pred_fallthru
      _
    // Predicated region
    $region10: #{supertagger_forward.77} parent=1 // pred_check
      _
    $region11: #{supertagger_forward.77} parent=1 // pred_check_branch
      %14 = sbr.rel (0) target = $region13
    $region12: #{supertagger_forward.77} parent=1 // pred_region
      _
    $region13: #{supertagger_forward.77} parent=1 // pred_fallthru
      _
    %p16 = scmp.eq.s32.totalorder 0, 0
    // Predicated region
    $region14: #{supertagger_forward.77} parent=1 // pred_check
      %p17 = pneg %p16
    $region15: #{supertagger_forward.77} parent=1 // pred_check_branch
      %19 = sbr.rel (%p17) target = $region17
    $region16: #{supertagger_forward.77} parent=1 // pred_region
      %20 = vst [vmem:[#allocation2] sm:$0xff] 0.0
      %21 = vst [vmem:[#allocation2 + $0x8] sm:$0xff] 0.0
      %22 = vst [vmem:[#allocation2 + $0x10] sm:$0xff] 0.0
      %23 = vst [vmem:[#allocation2 + $0x18] sm:$0xff] 0.0
    $region17: #{supertagger_forward.77} parent=1 // pred_fallthru
      _
    %v24 = vld [vmem:[#allocation2] sm:$0xff]
    %v25 = vld [vmem:[#allocation2 + $0x8] sm:$0xff]
    %v26 = vld [vmem:[#allocation2 + $0x10] sm:$0xff]
    %v27 = vld [vmem:[#allocation2 + $0x18] sm:$0xff]
    %v28 = vld [vmem:[%s0] sm:$0xf]
    %v29 = vld [vmem:[%s0 + $0x4] sm:$0xf]
    %v30 = vld [vmem:[%s0 + $0x8] sm:$0xf]
    %v31 = vld [vmem:[%s0 + $0xc] sm:$0xf]
    %v32 = vld [vmem:[%s1] sm:$0xf]
    %v33 = vld [vmem:[%s1 + $0x4] sm:$0xf]
    %v34 = vld [vmem:[%s1 + $0x8] sm:$0xf]
    %v35 = vld [vmem:[%s1 + $0xc] sm:$0xf]
    %v36 = vld [vmem:[%s1 + $0x10] sm:$0xf]
    %v37 = vld [vmem:[%s1 + $0x14] sm:$0xf]
    %v38 = vld [vmem:[%s1 + $0x18] sm:$0xf]
    %v39 = vld [vmem:[%s1 + $0x1c] sm:$0xf]
    %v40 = vld [vmem:[%s1 + $0x20] sm:$0xf]
    %v41 = vld [vmem:[%s1 + $0x24] sm:$0xf]
    %v42 = vld [vmem:[%s1 + $0x28] sm:$0xf]
    %v43 = vld [vmem:[%s1 + $0x2c] sm:$0xf]
    %v44 = vld [vmem:[%s1 + $0x30] sm:$0xf]
    %v45 = vld [vmem:[%s1 + $0x34] sm:$0xf]
    %v46 = vld [vmem:[%s1 + $0x38] sm:$0xf]
    %v47 = vld [vmem:[%s1 + $0x3c] sm:$0xf]
    %v52 = vunpack.c.l.b16 %v28
    %v53 = vunpack.c.l.b16 %v29
    %v54 = vunpack.c.l.b16 %v30
    %v55 = vunpack.c.l.b16 %v31
    %v56 = vpack.c.b16 %v53, %v52
    %v57 = vpack.c.b16 %v55, %v54
    %v76 = vunpack.c.l.b16 %v32
    %v77 = vunpack.c.l.b16 %v33
    %v78 = vunpack.c.l.b16 %v34
    %v79 = vunpack.c.l.b16 %v35
    %v80 = vunpack.c.l.b16 %v36
    %v81 = vunpack.c.l.b16 %v37
    %v82 = vunpack.c.l.b16 %v38
    %v83 = vunpack.c.l.b16 %v39
    %v84 = vunpack.c.l.b16 %v40
    %v85 = vunpack.c.l.b16 %v41
    %v86 = vunpack.c.l.b16 %v42
    %v87 = vunpack.c.l.b16 %v43
    %v88 = vunpack.c.l.b16 %v44
    %v89 = vunpack.c.l.b16 %v45
    %v90 = vunpack.c.l.b16 %v46
    %v91 = vunpack.c.l.b16 %v47
    %v92 = vpack.c.b16 %v77, %v76
    %v93 = vpack.c.b16 %v79, %v78
    %v94 = vpack.c.b16 %v81, %v80
    %v95 = vpack.c.b16 %v83, %v82
    %v96 = vpack.c.b16 %v85, %v84
    %v97 = vpack.c.b16 %v87, %v86
    %v98 = vpack.c.b16 %v89, %v88
    %v99 = vpack.c.b16 %v91, %v90
    %108 = vmatprep.subr.bf16.mxu0 0
    %109 = vmatpush1.bf16.msra.mxu0 %v99
    %110 = vmatprep.subr.bf16.mxu0 0
    %111 = vmatpush1.bf16.msra.mxu0 %v98
    %112 = vmatprep.subr.bf16.mxu0 0
    %113 = vmatpush1.bf16.msra.mxu0 %v97
    %114 = vmatprep.subr.bf16.mxu0 0
    %115 = vmatpush1.bf16.msra.mxu0 %v96
    %116 = vmatprep.subr.bf16.mxu0 0
    %117 = vmatpush1.bf16.msra.mxu0 %v95
    %118 = vmatprep.subr.bf16.mxu0 0
    %119 = vmatpush1.bf16.msra.mxu0 %v94
    %120 = vmatprep.subr.bf16.mxu0 0
    %121 = vmatpush1.bf16.msra.mxu0 %v93
    %122 = vmatprep.subr.bf16.mxu0 0
    %123 = vmatpush1.bf16.msra.mxu0 %v92
    %124 = vmatprep.subr.bf16.mxu0 0
    %125 = vmatpush2.bf16.msra.mxu0 0
    %126 = vmatprep.subr.bf16.mxu0 0
    %127 = vmatpush2.bf16.msra.mxu0 0
    %128 = vmatprep.subr.bf16.mxu0 0
    %129 = vmatpush2.bf16.msra.mxu0 0
    %130 = vmatprep.subr.bf16.mxu0 0
    %131 = vmatpush2.bf16.msra.mxu0 0
    %132 = vmatprep.subr.bf16.mxu0 0
    %133 = vmatpush2.bf16.msra.mxu0 0
    %134 = vmatprep.subr.bf16.mxu0 0
    %135 = vmatpush2.bf16.msra.mxu0 0
    %136 = vmatprep.subr.bf16.mxu0 0
    %137 = vmatpush2.bf16.msra.mxu0 0
    %138 = vmatprep.subr.bf16.mxu0 0
    %139 = vmatpush2.bf16.msra.mxu0 0
    %140 = vmatprep.mubr.bf16.mxu0 0
    %141 = vmatmul.mubr.bf16.gmra.mxu0 %v56
    %v142 = vpop.f32.mrf.mxu0
    %v143 = vadd.f32 0.0, %v142
    %v144 = vpop.f32.mrf.mxu0
    %v145 = vpop.f32.mrf.mxu0
    %v146 = vadd.f32 0.0, %v145
    %v147 = vpop.f32.mrf.mxu0
    %148 = vmatprep.mubr.bf16.mxu0 0
    %149 = vmatmul.mubr.bf16.gmra.mxu0 %v57
    %v150 = vpop.f32.mrf.mxu0
    %v151 = vadd.f32 0.0, %v150
    %v152 = vpop.f32.mrf.mxu0
    %v153 = vpop.f32.mrf.mxu0
    %v154 = vadd.f32 0.0, %v153
    %v155 = vpop.f32.mrf.mxu0
    %156 = vdwg.mxu0
    %v157 = vadd.f32 %v24, %v143
    %v158 = vadd.f32 %v25, %v146
    %v159 = vadd.f32 %v26, %v151
    %v160 = vadd.f32 %v27, %v154
    %161 = vst [vmem:[#allocation2] sm:$0xff] %v157
    %162 = vst [vmem:[#allocation2 + $0x8] sm:$0xff] %v158
    %163 = vst [vmem:[#allocation2 + $0x10] sm:$0xff] %v159
    %164 = vst [vmem:[#allocation2 + $0x18] sm:$0xff] %v160
    // Predicated region
    $region18: #{supertagger_forward.77} parent=1 // pred_check
      %p165 = pneg %p16
    $region19: #{supertagger_forward.77} parent=1 // pred_check_branch
      %167 = sbr.rel (%p165) target = $region21
    $region20: #{supertagger_forward.77} parent=1 // pred_region
      %v168 = vld [vmem:[#allocation2] sm:$0xff]
      %v169 = vld [vmem:[#allocation2 + $0x8] sm:$0xff]
      %v170 = vld [vmem:[#allocation2 + $0x10] sm:$0xff]
      %v171 = vld [vmem:[#allocation2 + $0x18] sm:$0xff]
      %v172 = vld [vmem:[%s2] sm:$0x1]
      %v174 = vlaneseq
      %v175 = vshrl.u32 %v174, 7
      %v176 = vsub.s32 0, %v175
      %v177 = vrot.slane %v172, %v176
      %v179 = vadd.f32 %v168, %v177
      %v180 = vadd.f32 %v169, %v177
      %v181 = vadd.f32 %v170, %v177
      %v182 = vadd.f32 %v171, %v177
      %183 = vmax.xlane.f32.xlu0 %v179
      %v184 = vpop.xlane.xlu0 %183
      %185 = vmax.xlane.f32.xlu0 %v180
      %v186 = vpop.xlane.xlu0 %185
      %187 = vmax.xlane.f32.xlu0 %v181
      %v188 = vpop.xlane.xlu0 %187
      %189 = vmax.xlane.f32.xlu0 %v182
      %v190 = vpop.xlane.xlu0 %189
      %v191 = vsub.f32 %v179, %v184
      %v192 = vsub.f32 %v180, %v186
      %v193 = vsub.f32 %v181, %v188
      %v194 = vsub.f32 %v182, %v190
      %v195 = vmul.f32 %v191, 1.442695
      %v196 = vpow.pop %v195
      %v197 = vmul.f32 %v192, 1.442695
      %v198 = vpow.pop %v197
      %v199 = vmul.f32 %v193, 1.442695
      %v200 = vpow.pop %v199
      %v201 = vmul.f32 %v194, 1.442695
      %v202 = vpow.pop %v201
      %203 = vadd.xlane.f32.xlu0 %v196
      %v204 = vpop.xlane.xlu0 %203
      %205 = vadd.xlane.f32.xlu0 %v198
      %v206 = vpop.xlane.xlu0 %205
      %207 = vadd.xlane.f32.xlu0 %v200
      %v208 = vpop.xlane.xlu0 %207
      %209 = vadd.xlane.f32.xlu0 %v202
      %v210 = vpop.xlane.xlu0 %209
      %v211 = vlog2.pop %v204
      %v212 = vmul.f32 %v211, 0.6931472
      %v213 = vlog2.pop %v206
      %v214 = vmul.f32 %v213, 0.6931472
      %v215 = vlog2.pop %v208
      %v216 = vmul.f32 %v215, 0.6931472
      %v217 = vlog2.pop %v210
      %v218 = vmul.f32 %v217, 0.6931472
      %v219 = vsub.f32 %v191, %v212
      %v220 = vsub.f32 %v192, %v214
      %v221 = vsub.f32 %v193, %v216
      %v222 = vsub.f32 %v194, %v218
      %223 = vst [vmem:[#allocation3] sm:$0xff] %v219
      %224 = vst [vmem:[#allocation3 + $0x8] sm:$0xff] %v220
      %225 = vst [vmem:[#allocation3 + $0x10] sm:$0xff] %v221
      %226 = vst [vmem:[#allocation3 + $0x18] sm:$0xff] %v222
    $region21: #{supertagger_forward.77} parent=1 // pred_fallthru
      _
    // Predicated region
    $region22: #{supertagger_forward.77} parent=1 // pred_check
      _
    $region23: #{supertagger_forward.77} parent=1 // pred_check_branch
      %228 = sbr.rel (0) target = $region25
    $region24: #{supertagger_forward.77} parent=1 // pred_region
      %s230 = ssub.s32 512, 512
      %231 = vsyncadd [#allocation4], %s230
      %s232 = sshll.u32 [#allocation3], 4
      %s233 = int_to_ptr.vmem [resolvable:$true] %s232
      %238 = dma.vmem_to_hbm [thread:$0]  %s233, 512, %s3, [#allocation4], 128, 128, 8
    $region25: #{supertagger_forward.77} parent=1 // pred_fallthru
      _
    // Predicated region
    $region26: #{supertagger_forward.77} parent=1 // pred_check
      _
    $region27: #{supertagger_forward.77} parent=1 // pred_check_branch
      %240 = sbr.rel (0) target = $region29
    $region28: #{supertagger_forward.77} parent=1 // pred_region
      %241 = dma.done [#allocation4], 512
    $region29: #{supertagger_forward.77} parent=1 // pred_fallthru
      _
    %242 = vsyncpa [#allocation4], 1

// kernel: supertagger_forward.59
$region0: #{supertagger_forward.59}
  #allocation0 [shape = 'u32[]', space=smem, size = 0x4, offset = 0x4, fixed_abs, tag = 'smem constant byte address 0x4 - core index']
  #allocation1 [shape = 'u32[144,128]{1,0:T(1,128)}', space=vmem, size = 0x12000, scoped, tag = 'internal scratch']
  %s0 = inlined_call_operand.vmem [shape: bf16[2,16,128], index: 0, kind: input, shape index: {}]
  %s1 = inlined_call_operand.vmem [shape: bf16[2,16,256], index: 1, kind: input, shape index: {}]
  %s2 = inlined_call_operand.vmem [shape: bf16[2,16,16], index: 2, kind: input, shape index: {}]
  %s3 = inlined_call_operand.vmem [shape: bf16[2,16,128], index: 3, kind: output, shape index: {}]
  %s4 = sld [smem:[#allocation0]]
  $region45: #{supertagger_forward.59} parent=0
    _
  %s6 = ssub.s32 1, %s4
  %s7 = scalar_select 0, %s6, %s4
  loop: start=0, step=1, limit=4
  $region2: #{supertagger_forward.59} parent=0 // loop_pre_header
    _
  $region3: #{supertagger_forward.59} parent=0 // loop_header
    %s9 = sphi 0, %s13
    %p10 = scmp.ge.s32.totalorder %s9, 4
    %s19 = sphi 0, %s21
    %s22 = sphi 0, %s19
    %s23 = sphi 0, %s22
    %s39 = sphi 0, %s23
    %s45 = sphi 0, %s47
    %s48 = sphi 0, %s45
    %s49 = sphi 0, %s48
    %s65 = sphi 0, %s49
    %s71 = sphi 0, %s73
    %s74 = sphi 0, %s71
    %s75 = sphi 0, %s74
    %s91 = sphi 0, %s75
    %s97 = sphi 0, %s99
    %s100 = sphi 0, %s97
    %s101 = sphi 0, %s100
    %s117 = sphi 0, %s101
  $region4: #{supertagger_forward.59} parent=0 // loop_header_branch
    %12 = sbr.rel (%p10) target = $region8
  $region5: #{supertagger_forward.59} parent=0 // loop_body
    %s14 = ssub.s32 %s9, 1
    %s15 = ssub.s32 %s9, 2
    %s16 = sadd.s32 %s9, 1
    %s17 = ssub.s32 %s9, %s16
    %p18 = scmp.eq.s32.totalorder %s17, 0
    %s20 = sadd.s32 %s19, 1
    %s21 = scalar_select %p18, %s19, %s20
    %p24 = pneg %p18
    %p25 = scmp.eq.s32.totalorder %s9, 1
    %p26 = por %p24, %p25
    %p27 = scmp.ne.s32.totalorder %s19, %s22
    %p28 = scmp.eq.s32.totalorder %s9, 0
    %p29 = por %p27, %p28
    %p30 = scmp.ne.s32.totalorder %s19, %s22
    %p31 = scmp.eq.s32.totalorder %s14, 1
    %p32 = por %p30, %p31
    %p33 = scmp.ne.s32.totalorder %s22, %s23
    %p34 = scmp.eq.s32.totalorder %s14, 0
    %p35 = por %p33, %p34
    %p36 = scmp.ne.s32.totalorder %s22, %s23
    %p37 = scmp.eq.s32.totalorder %s15, 1
    %p38 = por %p36, %p37
    %p40 = scmp.ne.s32.totalorder %s23, %s39
    %p41 = scmp.eq.s32.totalorder %s15, 0
    %p42 = por %p40, %p41
    %s43 = ssub.s32 %s9, %s16
    %p44 = scmp.eq.s32.totalorder %s43, 0
    %s46 = sadd.s32 %s45, 1
    %s47 = scalar_select %p44, %s45, %s46
    %p50 = pneg %p44
    %p51 = scmp.eq.s32.totalorder %s9, 1
    %p52 = por %p50, %p51
    %p53 = scmp.ne.s32.totalorder %s45, %s48
    %p54 = scmp.eq.s32.totalorder %s9, 0
    %p55 = por %p53, %p54
    %p56 = scmp.ne.s32.totalorder %s45, %s48
    %p57 = scmp.eq.s32.totalorder %s14, 1
    %p58 = por %p56, %p57
    %p59 = scmp.ne.s32.totalorder %s48, %s49
    %p60 = scmp.eq.s32.totalorder %s14, 0
    %p61 = por %p59, %p60
    %p62 = scmp.ne.s32.totalorder %s48, %s49
    %p63 = scmp.eq.s32.totalorder %s15, 1
    %p64 = por %p62, %p63
    %p66 = scmp.ne.s32.totalorder %s49, %s65
    %p67 = scmp.eq.s32.totalorder %s15, 0
    %p68 = por %p66, %p67
    %s69 = ssub.s32 %s9, %s16
    %p70 = scmp.eq.s32.totalorder %s69, 0
    %s72 = sadd.s32 %s71, 1
    %s73 = scalar_select %p70, %s71, %s72
    %p76 = pneg %p70
    %p77 = scmp.eq.s32.totalorder %s9, 1
    %p78 = por %p76, %p77
    %p79 = scmp.ne.s32.totalorder %s71, %s74
    %p80 = scmp.eq.s32.totalorder %s9, 0
    %p81 = por %p79, %p80
    %p82 = scmp.ne.s32.totalorder %s71, %s74
    %p83 = scmp.eq.s32.totalorder %s14, 1
    %p84 = por %p82, %p83
    %p85 = scmp.ne.s32.totalorder %s74, %s75
    %p86 = scmp.eq.s32.totalorder %s14, 0
    %p87 = por %p85, %p86
    %p88 = scmp.ne.s32.totalorder %s74, %s75
    %p89 = scmp.eq.s32.totalorder %s15, 1
    %p90 = por %p88, %p89
    %p92 = scmp.ne.s32.totalorder %s75, %s91
    %p93 = scmp.eq.s32.totalorder %s15, 0
    %p94 = por %p92, %p93
    %s95 = ssub.s32 %s9, %s16
    %p96 = scmp.eq.s32.totalorder %s95, 0
    %s98 = sadd.s32 %s97, 1
    %s99 = scalar_select %p96, %s97, %s98
    %p102 = pneg %p96
    %p103 = scmp.eq.s32.totalorder %s9, 1
    %p104 = por %p102, %p103
    %p105 = scmp.ne.s32.totalorder %s97, %s100
    %p106 = scmp.eq.s32.totalorder %s9, 0
    %p107 = por %p105, %p106
    %p108 = scmp.ne.s32.totalorder %s97, %s100
    %p109 = scmp.eq.s32.totalorder %s14, 1
    %p110 = por %p108, %p109
    %p111 = scmp.ne.s32.totalorder %s100, %s101
    %p112 = scmp.eq.s32.totalorder %s14, 0
    %p113 = por %p111, %p112
    %p114 = scmp.ne.s32.totalorder %s100, %s101
    %p115 = scmp.eq.s32.totalorder %s15, 1
    %p116 = por %p114, %p115
    %p118 = scmp.ne.s32.totalorder %s101, %s117
    %p119 = scmp.eq.s32.totalorder %s15, 0
    %p120 = por %p118, %p119
    %p121 = scmp.le.s32.totalorder 1, %s9
    %p122 = scmp.lt.s32.totalorder %s9, 3
    %p123 = pnand %p121, %p122
    %p124 = pneg %p123
    // Predicated region
    $region9: #{supertagger_forward.59} parent=5 // pred_check
      _
    $region10: #{supertagger_forward.59} parent=5 // pred_check_branch
      %126 = sbr.rel (%p123) target = $region12
    $region11: #{supertagger_forward.59} parent=5 // pred_region
      %s127 = ssub.s32 %s9, 1
    $region12: #{supertagger_forward.59} parent=5 // pred_fallthru
      _
    %p128 = scmp.lt.s32.totalorder %s9, 2
    // Predicated region
    $region13: #{supertagger_forward.59} parent=5 // pred_check
      %p129 = pneg %p128
    $region14: #{supertagger_forward.59} parent=5 // pred_check_branch
      %131 = sbr.rel (%p129) target = $region16
    $region15: #{supertagger_forward.59} parent=5 // pred_region
      // Predicated region
      $region17: #{supertagger_forward.59} parent=15 // pred_check
        %p132 = pneg %p29
      $region18: #{supertagger_forward.59} parent=15 // pred_check_branch
        %134 = sbr.rel (%p132) target = $region20
      $region19: #{supertagger_forward.59} parent=15 // pred_region
        %p135 = scmp.lt.s32.totalorder %s9, 1
        %s136 = scalar_select %p135, %s9, 1
        %s137 = smul.addr %s136, 2
        %s138 = smul.addr %s137, 4
        %s139 = scalar_lea.vmem %s0, %s138
      $region20: #{supertagger_forward.59} parent=15 // pred_fallthru
        _
      // Predicated region
      $region21: #{supertagger_forward.59} parent=15 // pred_check
        %p140 = pneg %p55
      $region22: #{supertagger_forward.59} parent=15 // pred_check_branch
        %142 = sbr.rel (%p140) target = $region24
      $region23: #{supertagger_forward.59} parent=15 // pred_region
        %p143 = scmp.lt.s32.totalorder %s9, 1
        %s144 = scalar_select %p143, %s9, 1
        %s145 = smul.addr %s144, 4
        %s146 = smul.addr %s145, 4
        %s147 = scalar_lea.vmem %s1, %s146
      $region24: #{supertagger_forward.59} parent=15 // pred_fallthru
        _
      // Predicated region
      $region25: #{supertagger_forward.59} parent=15 // pred_check
        %p148 = pneg %p81
      $region26: #{supertagger_forward.59} parent=15 // pred_check_branch
        %150 = sbr.rel (%p148) target = $region28
      $region27: #{supertagger_forward.59} parent=15 // pred_region
        %p151 = scmp.lt.s32.totalorder %s9, 1
        %s152 = scalar_select %p151, %s9, 1
        %s153 = smul.addr %s152, 2
        %s154 = smul.addr %s153, 4
        %s155 = scalar_lea.vmem %s2, %s154
      $region28: #{supertagger_forward.59} parent=15 // pred_fallthru
        _
    $region16: #{supertagger_forward.59} parent=5 // pred_fallthru
      _
    %p156 = scmp.le.s32.totalorder 1, %s9
    %p157 = scmp.lt.s32.totalorder %s9, 3
    %p158 = pnand %p156, %p157
    %p159 = pneg %p158
    // Predicated region
    $region29: #{supertagger_forward.59} parent=5 // pred_check
      _
    $region30: #{supertagger_forward.59} parent=5 // pred_check_branch
      %161 = sbr.rel (%p158) target = $region32
    $region31: #{supertagger_forward.59} parent=5 // pred_region
      %s162 = ssub.s32 %s9, 1
      %p163 = scmp.lt.s32.totalorder %s14, 1
      %s164 = scalar_select %p163, %s14, 1
      %s165 = smul.addr %s164, 2
      %s166 = smul.addr %s165, 4
      %s167 = scalar_lea.vmem %s0, %s166
      %p168 = pneg %p35
      %p169 = pneg %p32
      %p170 = scmp.lt.s32.totalorder %s14, 1
      %s171 = scalar_select %p170, %s14, 1
      %s172 = smul.addr %s171, 4
      %s173 = smul.addr %s172, 4
      %s174 = scalar_lea.vmem %s1, %s173
      %p175 = pneg %p61
      %p176 = pneg %p58
      %p177 = scmp.lt.s32.totalorder %s14, 1
      %s178 = scalar_select %p177, %s14, 1
      %s179 = smul.addr %s178, 2
      %s180 = smul.addr %s179, 4
      %s181 = scalar_lea.vmem %s2, %s180
      %p182 = pneg %p87
      %p183 = pneg %p84
      %p184 = pneg %p113
      %p185 = pneg %p110
      %p186 = scmp.lt.s32.totalorder %s14, 1
      %s187 = scalar_select %p186, %s14, 1
      %s188 = smul.addr %s187, 2
      %s189 = smul.addr %s188, 4
      %s190 = scalar_lea.vmem %s3, %s189
      %p191 = scmp.lt.s32.totalorder %s14, 1
      %s192 = scalar_select %p191, %s14, 1
      %s193 = smul.addr %s192, 2
      %s194 = smul.addr %s193, 4
      %s195 = scalar_lea.vmem %s0, %s194
      %p196 = scmp.lt.s32.totalorder %s14, 1
      %s197 = scalar_select %p196, %s14, 1
      %s198 = smul.addr %s197, 4
      %s199 = smul.addr %s198, 4
      %s200 = scalar_lea.vmem %s1, %s199
      %p201 = scmp.lt.s32.totalorder %s14, 1
      %s202 = scalar_select %p201, %s14, 1
      %s203 = smul.addr %s202, 2
      %s204 = smul.addr %s203, 4
      %s205 = scalar_lea.vmem %s2, %s204
      %p206 = scmp.lt.s32.totalorder %s14, 1
      %s207 = scalar_select %p206, %s14, 1
      %s208 = smul.addr %s207, 2
      %s209 = smul.addr %s208, 4
      %s210 = scalar_lea.vmem %s3, %s209
      %v214 = vld [vmem:[%s195] sm:$0xf]
      %v215 = vld [vmem:[%s195 + $0x4] sm:$0xf]
      %v216 = vld [vmem:[%s200] sm:$0xff]
      %v217 = vld [vmem:[%s200 + $0x8] sm:$0xff]
      %v218 = vld [vmem:[%s205] sm:$0xf]
      %v219 = vld [vmem:[%s205 + $0x4] sm:$0xf]
      %v222 = vunpack.c.l.b16 %v214
      %v223 = vunpack.c.l.b16 %v215
      %v224 = vpack.c.b16 %v223, %v222
      %v227 = vunpack.c.l.b16 %v216
      %v228 = vunpack.c.l.b16 %v217
      %v229 = vpack.c.b16 %v228, %v227
      %vm230 = vcmask 261120
      %v232 = vsel %vm230, %v224, 0
      %v235 = vsel %vm230, %v229, 0
      %237 = vmatprep.subr.bf16.mxu0 0
      %238 = vmatpush1.bf16.xpose.msra.mxu0 0
      %239 = vmatprep.subr.bf16.mxu0 0
      %240 = vmatpush1.bf16.xpose.msra.mxu0 0
      %241 = vmatprep.subr.bf16.mxu0 0
      %242 = vmatpush1.bf16.xpose.msra.mxu0 0
      %243 = vmatprep.subr.bf16.mxu0 0
      %244 = vmatpush1.bf16.xpose.msra.mxu0 0
      %245 = vmatprep.subr.bf16.mxu0 0
      %246 = vmatpush1.bf16.xpose.msra.mxu0 0
      %247 = vmatprep.subr.bf16.mxu0 0
      %248 = vmatpush1.bf16.xpose.msra.mxu0 0
      %249 = vmatprep.subr.bf16.mxu0 0
      %250 = vmatpush1.bf16.xpose.msra.mxu0 0
      %251 = vmatprep.subr.bf16.mxu0 0
      %252 = vmatpush1.bf16.xpose.msra.mxu0 %v235
      %253 = vmatprep.subr.bf16.mxu0 0
      %254 = vmatpush2.bf16.xpose.msra.mxu0 0
      %255 = vmatprep.subr.bf16.mxu0 0
      %256 = vmatpush2.bf16.xpose.msra.mxu0 0
      %257 = vmatprep.subr.bf16.mxu0 0
      %258 = vmatpush2.bf16.xpose.msra.mxu0 0
      %259 = vmatprep.subr.bf16.mxu0 0
      %260 = vmatpush2.bf16.xpose.msra.mxu0 0
      %261 = vmatprep.subr.bf16.mxu0 0
      %262 = vmatpush2.bf16.xpose.msra.mxu0 0
      %263 = vmatprep.subr.bf16.mxu0 0
      %264 = vmatpush2.bf16.xpose.msra.mxu0 0
      %265 = vmatprep.subr.bf16.mxu0 0
      %266 = vmatpush2.bf16.xpose.msra.mxu0 0
      %267 = vmatprep.subr.bf16.mxu0 0
      %268 = vmatpush2.bf16.xpose.msra.mxu0 0
      %269 = vmatprep.mubr.bf16.mxu0 0
      %270 = vmatmul.mubr.bf16.gmra.mxu0 %v232
      %v271 = vpop.f32.mrf.mxu0
      %v272 = vadd.f32 0.0, %v271
      %v273 = vpop.f32.mrf.mxu0
      %v274 = vpop.f32.mrf.mxu0
      %v275 = vadd.f32 0.0, %v274
      %v276 = vpop.f32.mrf.mxu0
      %277 = vdwg.mxu0
      %v278 = vmul.f32 %v272, 0.17677669
      %v279 = vmul.f32 %v275, 0.17677669
      %vm280 = vcmp.gt.bf16.partialorder %v218, 0
      %vm281 = vcmp.gt.bf16.partialorder %v219, 0
      %v282 = vsel %vm280, 65537, 0
      %v283 = vsel %vm281, 65537, 0
      %v284 = vunpack.c.l.b16 %v282
      %v285 = vunpack.c.l.b16 %v283
      %vm286 = vcmp.ne.s32.totalorder %v284, 0
      %vm287 = vcmp.ne.s32.totalorder %v285, 0
      %v288 = vsel %vm286, %v278, -1e+30
      %v289 = vsel %vm287, %v279, -1e+30
      %vm290 = vcmask 130048
      %v291 = vsel %vm290, %v288, -inf
      %292 = vmax.xlane.f32.xlu0 %v291
      %v293 = vpop.xlane.xlu0 %292
      %v294 = vsel %vm290, %v289, -inf
      %295 = vmax.xlane.f32.xlu0 %v294
      %v296 = vpop.xlane.xlu0 %295
      %v297 = vsub.f32 %v288, %v293
      %v298 = vsub.f32 %v289, %v296
      %v299 = vmul.f32 %v297, 1.442695
      %v300 = vpow.pop %v299
      %v301 = vmul.f32 %v298, 1.442695
      %v302 = vpow.pop %v301
      %v303 = vsel %vm290, %v300, 0.0
      %304 = vadd.xlane.f32.xlu0 %v303
      %v305 = vpop.xlane.xlu0 %304
      %v306 = vsel %vm290, %v302, 0.0
      %307 = vadd.xlane.f32.xlu0 %v306
      %v308 = vpop.xlane.xlu0 %307
      %v309 = vrcp.pop %v305
      %v310 = vrcp.pop %v308
      %v311 = vmul.f32 %v300, %v309
      %v312 = vmul.f32 %v302, %v310
      %v313 = vpack.c.bf16 %v312, %v311
      %v314 = vunpack.c.h.b16 %v216
      %v315 = vunpack.c.h.b16 %v217
      %v316 = vpack.c.b16 %v315, %v314
      %v319 = vsel %vm290, %v313, 0
      %321 = vmatprep.subr.bf16.mxu0 0
      %322 = vmatpush1.bf16.msra.mxu0 0
      %323 = vmatprep.subr.bf16.mxu0 0
      %324 = vmatpush1.bf16.msra.mxu0 0
      %325 = vmatprep.subr.bf16.mxu0 0
      %326 = vmatpush1.bf16.msra.mxu0 0
      %327 = vmatprep.subr.bf16.mxu0 0
      %328 = vmatpush1.bf16.msra.mxu0 0
      %329 = vmatprep.subr.bf16.mxu0 0
      %330 = vmatpush1.bf16.msra.mxu0 0
      %331 = vmatprep.subr.bf16.mxu0 0
      %332 = vmatpush1.bf16.msra.mxu0 0
      %333 = vmatprep.subr.bf16.mxu0 0
      %334 = vmatpush1.bf16.msra.mxu0 0
      %335 = vmatprep.subr.bf16.mxu0 0
      %336 = vmatpush1.bf16.msra.mxu0 %v316
      %337 = vmatprep.subr.bf16.mxu0 0
      %338 = vmatpush2.bf16.msra.mxu0 0
      %339 = vmatprep.subr.bf16.mxu0 0
      %340 = vmatpush2.bf16.msra.mxu0 0
      %341 = vmatprep.subr.bf16.mxu0 0
      %342 = vmatpush2.bf16.msra.mxu0 0
      %343 = vmatprep.subr.bf16.mxu0 0
      %344 = vmatpush2.bf16.msra.mxu0 0
      %345 = vmatprep.subr.bf16.mxu0 0
      %346 = vmatpush2.bf16.msra.mxu0 0
      %347 = vmatprep.subr.bf16.mxu0 0
      %348 = vmatpush2.bf16.msra.mxu0 0
      %349 = vmatprep.subr.bf16.mxu0 0
      %350 = vmatpush2.bf16.msra.mxu0 0
      %351 = vmatprep.subr.bf16.mxu0 0
      %352 = vmatpush2.bf16.msra.mxu0 0
      %353 = vmatprep.mubr.bf16.mxu0 0
      %354 = vmatmul.mubr.bf16.gmra.mxu0 %v319
      %v355 = vpop.f32.mrf.mxu0
      %v356 = vadd.f32 0.0, %v355
      %v357 = vpop.f32.mrf.mxu0
      %v358 = vpop.f32.mrf.mxu0
      %v359 = vadd.f32 0.0, %v358
      %v360 = vpop.f32.mrf.mxu0
      %361 = vdwg.mxu0
      %362 = vrot.lane.b32.xlu0 %v224, 96
      %v363 = vpop.permute.xlu0 %362
      %364 = vrot.lane.b32.xlu0 %v229, 96
      %v365 = vpop.permute.xlu0 %364
      %v367 = vsel %vm230, %v363, 0
      %v370 = vsel %vm230, %v365, 0
      %372 = vmatprep.subr.bf16.mxu0 0
      %373 = vmatpush1.bf16.xpose.msra.mxu0 0
      %374 = vmatprep.subr.bf16.mxu0 0
      %375 = vmatpush1.bf16.xpose.msra.mxu0 0
      %376 = vmatprep.subr.bf16.mxu0 0
      %377 = vmatpush1.bf16.xpose.msra.mxu0 0
      %378 = vmatprep.subr.bf16.mxu0 0
      %379 = vmatpush1.bf16.xpose.msra.mxu0 0
      %380 = vmatprep.subr.bf16.mxu0 0
      %381 = vmatpush1.bf16.xpose.msra.mxu0 0
      %382 = vmatprep.subr.bf16.mxu0 0
      %383 = vmatpush1.bf16.xpose.msra.mxu0 0
      %384 = vmatprep.subr.bf16.mxu0 0
      %385 = vmatpush1.bf16.xpose.msra.mxu0 0
      %386 = vmatprep.subr.bf16.mxu0 0
      %387 = vmatpush1.bf16.xpose.msra.mxu0 %v370
      %388 = vmatprep.subr.bf16.mxu0 0
      %389 = vmatpush2.bf16.xpose.msra.mxu0 0
      %390 = vmatprep.subr.bf16.mxu0 0
      %391 = vmatpush2.bf16.xpose.msra.mxu0 0
      %392 = vmatprep.subr.bf16.mxu0 0
      %393 = vmatpush2.bf16.xpose.msra.mxu0 0
      %394 = vmatprep.subr.bf16.mxu0 0
      %395 = vmatpush2.bf16.xpose.msra.mxu0 0
      %396 = vmatprep.subr.bf16.mxu0 0
      %397 = vmatpush2.bf16.xpose.msra.mxu0 0
      %398 = vmatprep.subr.bf16.mxu0 0
      %399 = vmatpush2.bf16.xpose.msra.mxu0 0
      %400 = vmatprep.subr.bf16.mxu0 0
      %401 = vmatpush2.bf16.xpose.msra.mxu0 0
      %402 = vmatprep.subr.bf16.mxu0 0
      %403 = vmatpush2.bf16.xpose.msra.mxu0 0
      %404 = vmatprep.mubr.bf16.mxu0 0
      %405 = vmatmul.mubr.bf16.gmra.mxu0 %v367
      %v406 = vpop.f32.mrf.mxu0
      %v407 = vadd.f32 0.0, %v406
      %v408 = vpop.f32.mrf.mxu0
      %v409 = vpop.f32.mrf.mxu0
      %v410 = vadd.f32 0.0, %v409
      %v411 = vpop.f32.mrf.mxu0
      %412 = vdwg.mxu0
      %v413 = vmul.f32 %v407, 0.17677669
      %v414 = vmul.f32 %v410, 0.17677669
      %v415 = vsel %vm286, %v413, -1e+30
      %v416 = vsel %vm287, %v414, -1e+30
      %v417 = vsel %vm290, %v415, -inf
      %418 = vmax.xlane.f32.xlu0 %v417
      %v419 = vpop.xlane.xlu0 %418
      %v420 = vsel %vm290, %v416, -inf
      %421 = vmax.xlane.f32.xlu0 %v420
      %v422 = vpop.xlane.xlu0 %421
      %v423 = vsub.f32 %v415, %v419
      %v424 = vsub.f32 %v416, %v422
      %v425 = vmul.f32 %v423, 1.442695
      %v426 = vpow.pop %v425
      %v427 = vmul.f32 %v424, 1.442695
      %v428 = vpow.pop %v427
      %v429 = vsel %vm290, %v426, 0.0
      %430 = vadd.xlane.f32.xlu0 %v429
      %v431 = vpop.xlane.xlu0 %430
      %v432 = vsel %vm290, %v428, 0.0
      %433 = vadd.xlane.f32.xlu0 %v432
      %v434 = vpop.xlane.xlu0 %433
      %v435 = vrcp.pop %v431
      %v436 = vrcp.pop %v434
      %v437 = vmul.f32 %v426, %v435
      %v438 = vmul.f32 %v428, %v436
      %v439 = vpack.c.bf16 %v438, %v437
      %440 = vrot.lane.b32.xlu0 %v316, 96
      %v441 = vpop.permute.xlu0 %440
      %v444 = vsel %vm290, %v439, 0
      %446 = vmatprep.subr.bf16.mxu0 0
      %447 = vmatpush1.bf16.msra.mxu0 0
      %448 = vmatprep.subr.bf16.mxu0 0
      %449 = vmatpush1.bf16.msra.mxu0 0
      %450 = vmatprep.subr.bf16.mxu0 0
      %451 = vmatpush1.bf16.msra.mxu0 0
      %452 = vmatprep.subr.bf16.mxu0 0
      %453 = vmatpush1.bf16.msra.mxu0 0
      %454 = vmatprep.subr.bf16.mxu0 0
      %455 = vmatpush1.bf16.msra.mxu0 0
      %456 = vmatprep.subr.bf16.mxu0 0
      %457 = vmatpush1.bf16.msra.mxu0 0
      %458 = vmatprep.subr.bf16.mxu0 0
      %459 = vmatpush1.bf16.msra.mxu0 0
      %460 = vmatprep.subr.bf16.mxu0 0
      %461 = vmatpush1.bf16.msra.mxu0 %v441
      %462 = vmatprep.subr.bf16.mxu0 0
      %463 = vmatpush2.bf16.msra.mxu0 0
      %464 = vmatprep.subr.bf16.mxu0 0
      %465 = vmatpush2.bf16.msra.mxu0 0
      %466 = vmatprep.subr.bf16.mxu0 0
      %467 = vmatpush2.bf16.msra.mxu0 0
      %468 = vmatprep.subr.bf16.mxu0 0
      %469 = vmatpush2.bf16.msra.mxu0 0
      %470 = vmatprep.subr.bf16.mxu0 0
      %471 = vmatpush2.bf16.msra.mxu0 0
      %472 = vmatprep.subr.bf16.mxu0 0
      %473 = vmatpush2.bf16.msra.mxu0 0
      %474 = vmatprep.subr.bf16.mxu0 0
      %475 = vmatpush2.bf16.msra.mxu0 0
      %476 = vmatprep.subr.bf16.mxu0 0
      %477 = vmatpush2.bf16.msra.mxu0 0
      %478 = vmatprep.mubr.bf16.mxu0 0
      %479 = vmatmul.mubr.bf16.gmra.mxu0 %v444
      %v480 = vpop.f32.mrf.mxu0
      %v481 = vadd.f32 0.0, %v480
      %v482 = vpop.f32.mrf.mxu0
      %v483 = vpop.f32.mrf.mxu0
      %v484 = vadd.f32 0.0, %v483
      %v485 = vpop.f32.mrf.mxu0
      %486 = vdwg.mxu0
      %487 = vrot.lane.b32.xlu0 %v224, 64
      %v488 = vpop.permute.xlu0 %487
      %489 = vrot.lane.b32.xlu0 %v229, 64
      %v490 = vpop.permute.xlu0 %489
      %v492 = vsel %vm230, %v488, 0
      %v495 = vsel %vm230, %v490, 0
      %497 = vmatprep.subr.bf16.mxu0 0
      %498 = vmatpush1.bf16.xpose.msra.mxu0 0
      %499 = vmatprep.subr.bf16.mxu0 0
      %500 = vmatpush1.bf16.xpose.msra.mxu0 0
      %501 = vmatprep.subr.bf16.mxu0 0
      %502 = vmatpush1.bf16.xpose.msra.mxu0 0
      %503 = vmatprep.subr.bf16.mxu0 0
      %504 = vmatpush1.bf16.xpose.msra.mxu0 0
      %505 = vmatprep.subr.bf16.mxu0 0
      %506 = vmatpush1.bf16.xpose.msra.mxu0 0
      %507 = vmatprep.subr.bf16.mxu0 0
      %508 = vmatpush1.bf16.xpose.msra.mxu0 0
      %509 = vmatprep.subr.bf16.mxu0 0
      %510 = vmatpush1.bf16.xpose.msra.mxu0 0
      %511 = vmatprep.subr.bf16.mxu0 0
      %512 = vmatpush1.bf16.xpose.msra.mxu0 %v495
      %513 = vmatprep.subr.bf16.mxu0 0
      %514 = vmatpush2.bf16.xpose.msra.mxu0 0
      %515 = vmatprep.subr.bf16.mxu0 0
      %516 = vmatpush2.bf16.xpose.msra.mxu0 0
      %517 = vmatprep.subr.bf16.mxu0 0
      %518 = vmatpush2.bf16.xpose.msra.mxu0 0
      %519 = vmatprep.subr.bf16.mxu0 0
      %520 = vmatpush2.bf16.xpose.msra.mxu0 0
      %521 = vmatprep.subr.bf16.mxu0 0
      %522 = vmatpush2.bf16.xpose.msra.mxu0 0
      %523 = vmatprep.subr.bf16.mxu0 0
      %524 = vmatpush2.bf16.xpose.msra.mxu0 0
      %525 = vmatprep.subr.bf16.mxu0 0
      %526 = vmatpush2.bf16.xpose.msra.mxu0 0
      %527 = vmatprep.subr.bf16.mxu0 0
      %528 = vmatpush2.bf16.xpose.msra.mxu0 0
      %529 = vmatprep.mubr.bf16.mxu0 0
      %530 = vmatmul.mubr.bf16.gmra.mxu0 %v492
      %v531 = vpop.f32.mrf.mxu0
      %v532 = vadd.f32 0.0, %v531
      %v533 = vpop.f32.mrf.mxu0
      %v534 = vpop.f32.mrf.mxu0
      %v535 = vadd.f32 0.0, %v534
      %v536 = vpop.f32.mrf.mxu0
      %537 = vdwg.mxu0
      %v538 = vmul.f32 %v532, 0.17677669
      %v539 = vmul.f32 %v535, 0.17677669
      %v540 = vsel %vm286, %v538, -1e+30
      %v541 = vsel %vm287, %v539, -1e+30
      %v542 = vsel %vm290, %v540, -inf
      %543 = vmax.xlane.f32.xlu0 %v542
      %v544 = vpop.xlane.xlu0 %543
      %v545 = vsel %vm290, %v541, -inf
      %546 = vmax.xlane.f32.xlu0 %v545
      %v547 = vpop.xlane.xlu0 %546
      %v548 = vsub.f32 %v540, %v544
      %v549 = vsub.f32 %v541, %v547
      %v550 = vmul.f32 %v548, 1.442695
      %v551 = vpow.pop %v550
      %v552 = vmul.f32 %v549, 1.442695
      %v553 = vpow.pop %v552
      %v554 = vsel %vm290, %v551, 0.0
      %555 = vadd.xlane.f32.xlu0 %v554
      %v556 = vpop.xlane.xlu0 %555
      %v557 = vsel %vm290, %v553, 0.0
      %558 = vadd.xlane.f32.xlu0 %v557
      %v559 = vpop.xlane.xlu0 %558
      %v560 = vrcp.pop %v556
      %v561 = vrcp.pop %v559
      %v562 = vmul.f32 %v551, %v560
      %v563 = vmul.f32 %v553, %v561
      %v564 = vpack.c.bf16 %v563, %v562
      %565 = vrot.lane.b32.xlu0 %v316, 64
      %v566 = vpop.permute.xlu0 %565
      %v569 = vsel %vm290, %v564, 0
      %571 = vmatprep.subr.bf16.mxu0 0
      %572 = vmatpush1.bf16.msra.mxu0 0
      %573 = vmatprep.subr.bf16.mxu0 0
      %574 = vmatpush1.bf16.msra.mxu0 0
      %575 = vmatprep.subr.bf16.mxu0 0
      %576 = vmatpush1.bf16.msra.mxu0 0
      %577 = vmatprep.subr.bf16.mxu0 0
      %578 = vmatpush1.bf16.msra.mxu0 0
      %579 = vmatprep.subr.bf16.mxu0 0
      %580 = vmatpush1.bf16.msra.mxu0 0
      %581 = vmatprep.subr.bf16.mxu0 0
      %582 = vmatpush1.bf16.msra.mxu0 0
      %583 = vmatprep.subr.bf16.mxu0 0
      %584 = vmatpush1.bf16.msra.mxu0 0
      %585 = vmatprep.subr.bf16.mxu0 0
      %586 = vmatpush1.bf16.msra.mxu0 %v566
      %587 = vmatprep.subr.bf16.mxu0 0
      %588 = vmatpush2.bf16.msra.mxu0 0
      %589 = vmatprep.subr.bf16.mxu0 0
      %590 = vmatpush2.bf16.msra.mxu0 0
      %591 = vmatprep.subr.bf16.mxu0 0
      %592 = vmatpush2.bf16.msra.mxu0 0
      %593 = vmatprep.subr.bf16.mxu0 0
      %594 = vmatpush2.bf16.msra.mxu0 0
      %595 = vmatprep.subr.bf16.mxu0 0
      %596 = vmatpush2.bf16.msra.mxu0 0
      %597 = vmatprep.subr.bf16.mxu0 0
      %598 = vmatpush2.bf16.msra.mxu0 0
      %599 = vmatprep.subr.bf16.mxu0 0
      %600 = vmatpush2.bf16.msra.mxu0 0
      %601 = vmatprep.subr.bf16.mxu0 0
      %602 = vmatpush2.bf16.msra.mxu0 0
      %603 = vmatprep.mubr.bf16.mxu0 0
      %604 = vmatmul.mubr.bf16.gmra.mxu0 %v569
      %v605 = vpop.f32.mrf.mxu0
      %v606 = vadd.f32 0.0, %v605
      %v607 = vpop.f32.mrf.mxu0
      %v608 = vpop.f32.mrf.mxu0
      %v609 = vadd.f32 0.0, %v608
      %v610 = vpop.f32.mrf.mxu0
      %611 = vdwg.mxu0
      %612 = vrot.lane.b32.xlu0 %v224, 32
      %v613 = vpop.permute.xlu0 %612
      %614 = vrot.lane.b32.xlu0 %v229, 32
      %v615 = vpop.permute.xlu0 %614
      %v617 = vsel %vm230, %v613, 0
      %v620 = vsel %vm230, %v615, 0
      %622 = vmatprep.subr.bf16.mxu0 0
      %623 = vmatpush1.bf16.xpose.msra.mxu0 0
      %624 = vmatprep.subr.bf16.mxu0 0
      %625 = vmatpush1.bf16.xpose.msra.mxu0 0
      %626 = vmatprep.subr.bf16.mxu0 0
      %627 = vmatpush1.bf16.xpose.msra.mxu0 0
      %628 = vmatprep.subr.bf16.mxu0 0
      %629 = vmatpush1.bf16.xpose.msra.mxu0 0
      %630 = vmatprep.subr.bf16.mxu0 0
      %631 = vmatpush1.bf16.xpose.msra.mxu0 0
      %632 = vmatprep.subr.bf16.mxu0 0
      %633 = vmatpush1.bf16.xpose.msra.mxu0 0
      %634 = vmatprep.subr.bf16.mxu0 0
      %635 = vmatpush1.bf16.xpose.msra.mxu0 0
      %636 = vmatprep.subr.bf16.mxu0 0
      %637 = vmatpush1.bf16.xpose.msra.mxu0 %v620
      %638 = vmatprep.subr.bf16.mxu0 0
      %639 = vmatpush2.bf16.xpose.msra.mxu0 0
      %640 = vmatprep.subr.bf16.mxu0 0
      %641 = vmatpush2.bf16.xpose.msra.mxu0 0
      %642 = vmatprep.subr.bf16.mxu0 0
      %643 = vmatpush2.bf16.xpose.msra.mxu0 0
      %644 = vmatprep.subr.bf16.mxu0 0
      %645 = vmatpush2.bf16.xpose.msra.mxu0 0
      %646 = vmatprep.subr.bf16.mxu0 0
      %647 = vmatpush2.bf16.xpose.msra.mxu0 0
      %648 = vmatprep.subr.bf16.mxu0 0
      %649 = vmatpush2.bf16.xpose.msra.mxu0 0
      %650 = vmatprep.subr.bf16.mxu0 0
      %651 = vmatpush2.bf16.xpose.msra.mxu0 0
      %652 = vmatprep.subr.bf16.mxu0 0
      %653 = vmatpush2.bf16.xpose.msra.mxu0 0
      %654 = vmatprep.mubr.bf16.mxu0 0
      %655 = vmatmul.mubr.bf16.gmra.mxu0 %v617
      %v656 = vpop.f32.mrf.mxu0
      %v657 = vadd.f32 0.0, %v656
      %v658 = vpop.f32.mrf.mxu0
      %v659 = vpop.f32.mrf.mxu0
      %v660 = vadd.f32 0.0, %v659
      %v661 = vpop.f32.mrf.mxu0
      %662 = vdwg.mxu0
      %v663 = vmul.f32 %v657, 0.17677669
      %v664 = vmul.f32 %v660, 0.17677669
      %v665 = vsel %vm286, %v663, -1e+30
      %v666 = vsel %vm287, %v664, -1e+30
      %v667 = vsel %vm290, %v665, -inf
      %668 = vmax.xlane.f32.xlu0 %v667
      %v669 = vpop.xlane.xlu0 %668
      %v670 = vsel %vm290, %v666, -inf
      %671 = vmax.xlane.f32.xlu0 %v670
      %v672 = vpop.xlane.xlu0 %671
      %v673 = vsub.f32 %v665, %v669
      %v674 = vsub.f32 %v666, %v672
      %v675 = vmul.f32 %v673, 1.442695
      %v676 = vpow.pop %v675
      %v677 = vmul.f32 %v674, 1.442695
      %v678 = vpow.pop %v677
      %v679 = vsel %vm290, %v676, 0.0
      %680 = vadd.xlane.f32.xlu0 %v679
      %v681 = vpop.xlane.xlu0 %680
      %v682 = vsel %vm290, %v678, 0.0
      %683 = vadd.xlane.f32.xlu0 %v682
      %v684 = vpop.xlane.xlu0 %683
      %v685 = vrcp.pop %v681
      %v686 = vrcp.pop %v684
      %v687 = vmul.f32 %v676, %v685
      %v688 = vmul.f32 %v678, %v686
      %v689 = vpack.c.bf16 %v688, %v687
      %690 = vrot.lane.b32.xlu0 %v316, 32
      %v691 = vpop.permute.xlu0 %690
      %v694 = vsel %vm290, %v689, 0
      %696 = vmatprep.subr.bf16.mxu0 0
      %697 = vmatpush1.bf16.msra.mxu0 0
      %698 = vmatprep.subr.bf16.mxu0 0
      %699 = vmatpush1.bf16.msra.mxu0 0
      %700 = vmatprep.subr.bf16.mxu0 0
      %701 = vmatpush1.bf16.msra.mxu0 0
      %702 = vmatprep.subr.bf16.mxu0 0
      %703 = vmatpush1.bf16.msra.mxu0 0
      %704 = vmatprep.subr.bf16.mxu0 0
      %705 = vmatpush1.bf16.msra.mxu0 0
      %706 = vmatprep.subr.bf16.mxu0 0
      %707 = vmatpush1.bf16.msra.mxu0 0
      %708 = vmatprep.subr.bf16.mxu0 0
      %709 = vmatpush1.bf16.msra.mxu0 0
      %710 = vmatprep.subr.bf16.mxu0 0
      %711 = vmatpush1.bf16.msra.mxu0 %v691
      %712 = vmatprep.subr.bf16.mxu0 0
      %713 = vmatpush2.bf16.msra.mxu0 0
      %714 = vmatprep.subr.bf16.mxu0 0
      %715 = vmatpush2.bf16.msra.mxu0 0
      %716 = vmatprep.subr.bf16.mxu0 0
      %717 = vmatpush2.bf16.msra.mxu0 0
      %718 = vmatprep.subr.bf16.mxu0 0
      %719 = vmatpush2.bf16.msra.mxu0 0
      %720 = vmatprep.subr.bf16.mxu0 0
      %721 = vmatpush2.bf16.msra.mxu0 0
      %722 = vmatprep.subr.bf16.mxu0 0
      %723 = vmatpush2.bf16.msra.mxu0 0
      %724 = vmatprep.subr.bf16.mxu0 0
      %725 = vmatpush2.bf16.msra.mxu0 0
      %726 = vmatprep.subr.bf16.mxu0 0
      %727 = vmatpush2.bf16.msra.mxu0 0
      %728 = vmatprep.mubr.bf16.mxu0 0
      %729 = vmatmul.mubr.bf16.gmra.mxu0 %v694
      %v730 = vpop.f32.mrf.mxu0
      %v731 = vadd.f32 0.0, %v730
      %v732 = vpop.f32.mrf.mxu0
      %v733 = vpop.f32.mrf.mxu0
      %v734 = vadd.f32 0.0, %v733
      %v735 = vpop.f32.mrf.mxu0
      %736 = vdwg.mxu0
      %739 = vrot.lane.b32.xlu0 %v481, 32
      %v740 = vpop.permute.xlu0 %739
      %741 = vrot.lane.b32.xlu0 %v484, 32
      %v742 = vpop.permute.xlu0 %741
      %747 = vrot.lane.b32.xlu0 %v606, 64
      %v748 = vpop.permute.xlu0 %747
      %749 = vrot.lane.b32.xlu0 %v609, 64
      %v750 = vpop.permute.xlu0 %749
      %755 = vrot.lane.b32.xlu0 %v731, 96
      %v756 = vpop.permute.xlu0 %755
      %757 = vrot.lane.b32.xlu0 %v734, 96
      %v758 = vpop.permute.xlu0 %757
      %v761 = vsel %vm230, %v356, %v740
      %v762 = vsel %vm230, %v359, %v742
      %vm763 = vcmask 523264
      %v764 = vsel %vm763, %v761, %v748
      %v765 = vsel %vm763, %v762, %v750
      %vm766 = vcmask 785408
      %v767 = vsel %vm766, %v764, %v756
      %v768 = vsel %vm766, %v765, %v758
      %v769 = vpack.c.bf16 %v768, %v767
      %v771 = vunpack.c.l.b16 %v769
      %v772 = vunpack.c.h.b16 %v769
      %v773 = vpack.c.b16 %v771, %v771
      %v774 = vpack.c.b16 %v772, %v772
      %777 = vst [vmem:[%s210] sm:$0xf] %v773
      %778 = vst [vmem:[%s210 + $0x4] sm:$0xf] %v774
      %p779 = scmp.lt.s32.totalorder %s14, 1
      %s780 = scalar_select %p779, %s14, 1
      %s781 = smul.addr %s780, 2
      %s782 = smul.addr %s781, 4
      %s783 = scalar_lea.vmem %s3, %s782
      // Predicated region
      $region33: #{supertagger_forward.59} parent=31 // pred_check
        %p784 = pneg %p110
      $region34: #{supertagger_forward.59} parent=31 // pred_check_branch
        %786 = sbr.rel (%p784) target = $region36
      $region35: #{supertagger_forward.59} parent=31 // pred_region
        _
      $region36: #{supertagger_forward.59} parent=31 // pred_fallthru
        _
    $region32: #{supertagger_forward.59} parent=5 // pred_fallthru
      _
    %p787 = scmp.le.s32.totalorder 2, %s9
    // Predicated region
    $region37: #{supertagger_forward.59} parent=5 // pred_check
      %p788 = pneg %p787
    $region38: #{supertagger_forward.59} parent=5 // pred_check_branch
      %790 = sbr.rel (%p788) target = $region40
    $region39: #{supertagger_forward.59} parent=5 // pred_region
      %s791 = ssub.s32 %s9, 2
      // Predicated region
      $region41: #{supertagger_forward.59} parent=39 // pred_check
        %p792 = pneg %p116
      $region42: #{supertagger_forward.59} parent=39 // pred_check_branch
        %794 = sbr.rel (%p792) target = $region44
      $region43: #{supertagger_forward.59} parent=39 // pred_region
        %p795 = scmp.lt.s32.totalorder %s15, 1
        %s796 = scalar_select %p795, %s15, 1
        %s797 = smul.addr %s796, 2
        %s798 = smul.addr %s797, 4
        %s799 = scalar_lea.vmem %s3, %s798
      $region44: #{supertagger_forward.59} parent=39 // pred_fallthru
        _
    $region40: #{supertagger_forward.59} parent=5 // pred_fallthru
      _
  $region6: #{supertagger_forward.59} parent=0 // loop_footer
    %s13 = sadd.s32 1, %s9
  $region7: #{supertagger_forward.59} parent=0 // loop_footer_branch
    %8 = sbr.rel target = $region3
  $region8: #{supertagger_forward.59} parent=0 // loop_exit
    _

</llo_original>
